<compile_context>
chip_gen: v6e
topology: v6e:2x2x1
jax: 0.10.0
libtpu: 0.0.40
codegen_flags: <defaults>
</compile_context>

<pallas_src>
import functools
import math

import jax
import jax.numpy as jnp
from jax import lax
from jax.experimental import pallas as pl
from jax.experimental.pallas import tpu as pltpu


# ----------------------------- in-kernel math helpers -----------------------------

def _round_up(x, m):
    return ((x + m - 1) // m) * m


def _layernorm(x, w, b, eps=1e-5):
    mu = jnp.mean(x, axis=-1, keepdims=True)
    xc = x - mu
    var = jnp.mean(xc * xc, axis=-1, keepdims=True)
    return xc * lax.rsqrt(var + eps) * w + b


def _gelu_tanh(x):
    # tanh-approximate GELU (transcendental on the EUP slot, frees the VALU).
    c = math.sqrt(2.0 / math.pi)
    return 0.5 * x * (1.0 + jnp.tanh(c * (x + 0.044715 * (x * x * x))))


# ----------------------------------- kernel ---------------------------------------

def nat_layer_kernel(x_ref,
                     ln1_w_ref, ln1_b_ref,
                     wq_ref, bq_ref, wkv_ref, bkv_ref,
                     wproj_ref, bproj_ref,
                     ln2_w_ref, ln2_b_ref,
                     w1_ref, b1_ref, w2_ref, b2_ref,
                     o_ref,
                     attn_acc,
                     *, num_heads, kernel_size, tile_l, slab, halo):
    L = x_ref.shape[1]
    D = x_ref.shape[2]
    hd = D // num_heads
    scale = hd ** -0.5
    f32 = jnp.float32
    bf16 = jnp.bfloat16

    t = pl.program_id(1)
    qs = pl.multiple_of(t * tile_l, 8)                              # query tile start
    ws = pl.multiple_of(jnp.clip(qs - halo, 0, L - slab), 8)        # K/V slab start

    # ---------------- norm1 + Q projection (query tile only) ----------------
    xq = x_ref[0, pl.ds(qs, tile_l), :]                             # (tile_l, D) f32
    xq_n = _layernorm(xq, ln1_w_ref[0], ln1_b_ref[0])
    q = jnp.dot(xq_n.astype(bf16), wq_ref[...],
                preferred_element_type=f32) + bq_ref[0]             # (tile_l, D) f32
    qb = (q * scale).astype(bf16)

    # ---------------- norm1 + K/V projection (banded slab) ----------------
    xs = x_ref[0, pl.ds(ws, slab), :]                               # (slab, D) f32
    xs_n = _layernorm(xs, ln1_w_ref[0], ln1_b_ref[0])
    kv = jnp.dot(xs_n.astype(bf16), wkv_ref[...],
                 preferred_element_type=f32) + bkv_ref[0]           # (slab, 2D) f32
    k = kv[:, :D].astype(bf16)
    v = kv[:, D:].astype(bf16)

    # Neighborhood mask (dilation=1): query i attends keys in
    # [start_i, start_i + kernel_size), start_i = clip(i - k//2, 0, L - k).
    k_half = kernel_size // 2
    qi = lax.broadcasted_iota(jnp.int32, (tile_l, 1), 0) + qs       # global query index
    kj = lax.broadcasted_iota(jnp.int32, (1, slab), 1) + ws         # global key index
    start = jnp.clip(qi - k_half, 0, L - kernel_size)
    nmask = (kj >= start) & (kj < start + kernel_size)              # (tile_l, slab)
    neg = jnp.float32(-1e30)

    # ---------------- attention: static loop over heads ----------------
    for h in range(num_heads):
        sl = slice(h * hd, (h + 1) * hd)
        s = lax.dot_general(qb[:, sl], k[:, sl],
                            dimension_numbers=(((1,), (1,)), ((), ())),
                            preferred_element_type=f32)             # (tile_l, slab)
        s = jnp.where(nmask, s, neg)
        m = jnp.max(s, axis=-1, keepdims=True)
        p = jnp.exp(s - m)
        denom = jnp.sum(p, axis=-1, keepdims=True)
        p = p * pl.reciprocal(denom, approx=True)
        # write head result into the scratch accumulator at static column offsets
        attn_acc[:, sl] = jnp.dot(p.astype(bf16), v[:, sl],
                                  preferred_element_type=f32)

    attn = jnp.dot(attn_acc[...].astype(bf16), wproj_ref[...],
                   preferred_element_type=f32) + bproj_ref[0]       # (tile_l, D) f32

    x1 = xq + attn                                                  # residual (drop_path=Identity)

    # ---------------- norm2 + MLP ----------------
    xn2 = _layernorm(x1, ln2_w_ref[0], ln2_b_ref[0])
    h1 = jnp.dot(xn2.astype(bf16), w1_ref[...],
                 preferred_element_type=f32) + b1_ref[0]
    h1 = _gelu_tanh(h1)
    mlp = jnp.dot(h1.astype(bf16), w2_ref[...],
                  preferred_element_type=f32) + b2_ref[0]

    o_ref[0] = (x1 + mlp).astype(o_ref.dtype)


# ---------------------------------- wrapper ----------------------------------------

def nat_layer(x, params, *, num_heads, kernel_size, tile_l=128,
              single_buffer_weights=True):
    B, L, D = x.shape
    assert D % num_heads == 0
    assert kernel_size % 2 == 1, "NATTEN window semantics implemented for odd kernel_size"
    assert L >= kernel_size, "NeighborhoodAttention1D requires seq_len >= kernel_size"
    hidden = params["w1"].shape[1]
    bf16 = jnp.bfloat16

    # --- sequence tiling: query tiles of tile_l rows, K/V from a banded slab ---
    if tile_l > L or L % tile_l != 0 or tile_l % 8 != 0:
        tile_l = L                                   # single whole-sequence tile
    halo = _round_up(max(kernel_size - 1, 1), 8)     # covers edge-shifted windows
    slab = min(L, tile_l + 2 * halo)
    n_t = L // tile_l

    kern = functools.partial(nat_layer_kernel, num_heads=num_heads,
                             kernel_size=kernel_size, tile_l=tile_l,
                             slab=slab, halo=halo)

    # Split fused qkv into Q and KV halves; cast matmul weights to bf16 (halves VMEM,
    # feeds the bf16-native MXU). Biases / LayerNorm params stay f32.
    wq = params["wqkv"][:, :D].astype(bf16)
    wkv = params["wqkv"][:, D:].astype(bf16)
    bq = params["bqkv"][:, :D]
    bkv = params["bqkv"][:, D:]
    wproj = params["wproj"].astype(bf16)
    w1 = params["w1"].astype(bf16)
    w2 = params["w2"].astype(bf16)

    def const2d(shape):
        # weight/bias blocks: index never changes across the grid -> single-buffer
        kw = {"pipeline_mode": pl.Buffered(1)} if single_buffer_weights else {}
        return pl.BlockSpec(shape, lambda b, t: (0, 0), **kw)

    in_specs = [
        pl.BlockSpec((1, L, D), lambda b, t: (b, 0, 0)),      # x (full sequence per batch)
        const2d((1, D)), const2d((1, D)),                     # ln1 w, b
        const2d((D, D)), const2d((1, D)),                     # wq, bq
        const2d((D, 2 * D)), const2d((1, 2 * D)),             # wkv, bkv
        const2d((D, D)), const2d((1, D)),                     # proj W^T, b
        const2d((1, D)), const2d((1, D)),                     # ln2 w, b
        const2d((D, hidden)), const2d((1, hidden)),           # fc1 W^T, b
        const2d((hidden, D)), const2d((1, D)),                # fc2 W^T, b
    ]

    # advisory cost estimate for XLA scheduling around the custom call
    flops = 2 * B * (
        L * D * D                        # Q projection
        + n_t * slab * 2 * D * D         # KV projection (slab rows per tile)
        + 2 * L * slab * D               # QK^T + PV
        + L * D * D                      # output projection
        + 2 * L * D * hidden             # fc1 + fc2
    )
    transcendentals = B * (num_heads * L * slab + L * hidden)
    bytes_accessed = (2 * B * L * D * 4
                      + 2 * (4 * D * D + 2 * D * hidden)      # bf16 weights
                      + 4 * (6 * D + hidden))                 # f32 biases / LN params
    cost = pl.CostEstimate(flops=flops, transcendentals=transcendentals,
                           bytes_accessed=bytes_accessed)

    return pl.pallas_call(
        kern,
        out_shape=jax.ShapeDtypeStruct((B, L, D), x.dtype),
        grid=(B, n_t),
        in_specs=in_specs,
        out_specs=pl.BlockSpec((1, tile_l, D), lambda b, t: (b, t, 0)),
        scratch_shapes=[pltpu.VMEM((tile_l, D), jnp.float32)],   # per-head attn accumulator
        compiler_params=pltpu.CompilerParams(
            dimension_semantics=("parallel", "parallel"),
            vmem_limit_bytes=64 * 1024 * 1024),
        cost_estimate=cost,
    )(x,
      params["ln1_w"], params["ln1_b"],
      wq, bq, wkv, bkv,
      wproj, params["bproj"],
      params["ln2_w"], params["ln2_b"],
      w1, params["b1"],
      w2, params["b2"])


def init_params(key, dim, num_heads, mlp_ratio=4.0):
    hidden = int(dim * mlp_ratio)
    ks = jax.random.split(key, 6)
    f32 = jnp.float32
    return {
        # LayerNorm default init (ones / zeros)
        "ln1_w": jnp.ones((1, dim), f32), "ln1_b": jnp.zeros((1, dim), f32),
        "ln2_w": jnp.ones((1, dim), f32), "ln2_b": jnp.zeros((1, dim), f32),
        # Linear weights stored as (in, out) = PyTorch weight^T
        "wqkv": 0.02 * jax.random.normal(ks[0], (dim, 3 * dim), f32),
        "bqkv": 0.02 * jax.random.normal(ks[1], (1, 3 * dim), f32),
        "wproj": 0.02 * jax.random.normal(ks[2], (dim, dim), f32),
        "bproj": jnp.zeros((1, dim), f32),
        "w1": 0.02 * jax.random.normal(ks[3], (dim, hidden), f32),
        "b1": 0.02 * jax.random.normal(ks[4], (1, hidden), f32),
        "w2": 0.02 * jax.random.normal(ks[5], (hidden, dim), f32),
        "b2": jnp.zeros((1, dim), f32),
    }


if __name__ == "__main__":
    B, L, D = 2, 16, 32
    num_heads, kernel_size = 4, 7

    key = jax.random.PRNGKey(0)
    kx, kp = jax.random.split(key)
    x = jax.random.normal(kx, (B, L, D), jnp.float32)
    params = init_params(kp, D, num_heads)

    try:
        out = jax.block_until_ready(
            nat_layer(x, params, num_heads=num_heads, kernel_size=kernel_size,
                      single_buffer_weights=True))
    except Exception:
        # If this Pallas build rejects pipeline_mode=pl.Buffered(1), fall back to the
        # default double-buffered weight specs (functionally identical).
        out = jax.block_until_ready(
            nat_layer(x, params, num_heads=num_heads, kernel_size=kernel_size,
                      single_buffer_weights=False))

    assert out.shape == (B, L, D) and bool(jnp.all(jnp.isfinite(out)))
    print("KERNEL_OK")
</pallas_src>

<mosaic_0001>
module attributes {stable_mosaic.version = 11 : i64} {
  func.func @nat_layer_kernel(%arg0: i32, %arg1: i32, %arg2: memref<1x16x32xf32, #tpu.memory_space<vmem>>, %arg3: memref<1x32xf32, #tpu.memory_space<vmem>>, %arg4: memref<1x32xf32, #tpu.memory_space<vmem>>, %arg5: memref<32x32xbf16, #tpu.memory_space<vmem>>, %arg6: memref<1x32xf32, #tpu.memory_space<vmem>>, %arg7: memref<32x64xbf16, #tpu.memory_space<vmem>>, %arg8: memref<1x64xf32, #tpu.memory_space<vmem>>, %arg9: memref<32x32xbf16, #tpu.memory_space<vmem>>, %arg10: memref<1x32xf32, #tpu.memory_space<vmem>>, %arg11: memref<1x32xf32, #tpu.memory_space<vmem>>, %arg12: memref<1x32xf32, #tpu.memory_space<vmem>>, %arg13: memref<32x128xbf16, #tpu.memory_space<vmem>>, %arg14: memref<1x128xf32, #tpu.memory_space<vmem>>, %arg15: memref<128x32xbf16, #tpu.memory_space<vmem>>, %arg16: memref<1x32xf32, #tpu.memory_space<vmem>>, %arg17: memref<1x16x32xf32, #tpu.memory_space<vmem>>, %arg18: memref<16x32xf32, #tpu.memory_space<vmem>>) attributes {dimension_semantics = [#tpu.dimension_semantics<parallel>, #tpu.dimension_semantics<parallel>], iteration_bounds = array<i64: 2, 1>, scalar_prefetch = 0 : i64, scratch_operands = 1 : i64, tpu.core_type = #tpu.core_type<tc>, window_params = [{transform_indices = @transform_0, window_bounds = array<i64: 1, 16, 32>}, {pipeline_mode = #tpu.pipeline_mode<synchronous>, transform_indices = @transform_1, window_bounds = array<i64: 1, 32>}, {pipeline_mode = #tpu.pipeline_mode<synchronous>, transform_indices = @transform_2, window_bounds = array<i64: 1, 32>}, {pipeline_mode = #tpu.pipeline_mode<synchronous>, transform_indices = @transform_3, window_bounds = array<i64: 32, 32>}, {pipeline_mode = #tpu.pipeline_mode<synchronous>, transform_indices = @transform_4, window_bounds = array<i64: 1, 32>}, {pipeline_mode = #tpu.pipeline_mode<synchronous>, transform_indices = @transform_5, window_bounds = array<i64: 32, 64>}, {pipeline_mode = #tpu.pipeline_mode<synchronous>, transform_indices = @transform_6, window_bounds = array<i64: 1, 64>}, {pipeline_mode = #tpu.pipeline_mode<synchronous>, transform_indices = @transform_7, window_bounds = array<i64: 32, 32>}, {pipeline_mode = #tpu.pipeline_mode<synchronous>, transform_indices = @transform_8, window_bounds = array<i64: 1, 32>}, {pipeline_mode = #tpu.pipeline_mode<synchronous>, transform_indices = @transform_9, window_bounds = array<i64: 1, 32>}, {pipeline_mode = #tpu.pipeline_mode<synchronous>, transform_indices = @transform_10, window_bounds = array<i64: 1, 32>}, {pipeline_mode = #tpu.pipeline_mode<synchronous>, transform_indices = @transform_11, window_bounds = array<i64: 32, 128>}, {pipeline_mode = #tpu.pipeline_mode<synchronous>, transform_indices = @transform_12, window_bounds = array<i64: 1, 128>}, {pipeline_mode = #tpu.pipeline_mode<synchronous>, transform_indices = @transform_13, window_bounds = array<i64: 128, 32>}, {pipeline_mode = #tpu.pipeline_mode<synchronous>, transform_indices = @transform_14, window_bounds = array<i64: 1, 32>}, {transform_indices = @transform_15, window_bounds = array<i64: 1, 16, 32>}]} {
    %c16_i32 = arith.constant 16 : i32
    %0 = arith.muli %arg1, %c16_i32 : i32
    %1 = tpu.assume_multiple %0, 8 : i32
    %c8_i32 = arith.constant 8 : i32
    %2 = arith.subi %1, %c8_i32 : i32
    %c0_i32 = arith.constant 0 : i32
    %c0_i32_0 = arith.constant 0 : i32
    %3 = arith.maxsi %c0_i32, %2 : i32
    %4 = arith.minsi %c0_i32_0, %3 : i32
    %5 = tpu.assume_multiple %4, 8 : i32
    %c0 = arith.constant 0 : index
    %6 = arith.index_cast %1 : i32 to index
    %c0_1 = arith.constant 0 : index
    %7 = vector.load %arg2[%c0, %6, %c0_1] : memref<1x16x32xf32, #tpu.memory_space<vmem>>, vector<1x16x32xf32>
    %8 = vector.shape_cast %7 : vector<1x16x32xf32> to vector<16x32xf32>
    %c0_2 = arith.constant 0 : index
    %c0_3 = arith.constant 0 : index
    %9 = vector.load %arg3[%c0_2, %c0_3] : memref<1x32xf32, #tpu.memory_space<vmem>>, vector<1x32xf32>
    %10 = vector.shape_cast %9 : vector<1x32xf32> to vector<32xf32>
    %c0_4 = arith.constant 0 : index
    %c0_5 = arith.constant 0 : index
    %11 = vector.load %arg4[%c0_4, %c0_5] : memref<1x32xf32, #tpu.memory_space<vmem>>, vector<1x32xf32>
    %12 = vector.shape_cast %11 : vector<1x32xf32> to vector<32xf32>
    %cst = arith.constant dense<0.000000e+00> : vector<16xf32>
    %13 = vector.multi_reduction <add>, %8, %cst [1] : vector<16x32xf32> to vector<16xf32>
    %14 = vector.shape_cast %13 : vector<16xf32> to vector<16x1xf32>
    %cst_6 = arith.constant 3.200000e+01 : f32
    %15 = vector.broadcast %cst_6 : f32 to vector<16x1xf32>
    %16 = arith.divf %14, %15 : vector<16x1xf32>
    %17 = vector.broadcast %16 : vector<16x1xf32> to vector<16x32xf32>
    %18 = arith.subf %8, %17 : vector<16x32xf32>
    %19 = arith.mulf %18, %18 : vector<16x32xf32>
    %cst_7 = arith.constant dense<0.000000e+00> : vector<16xf32>
    %20 = vector.multi_reduction <add>, %19, %cst_7 [1] : vector<16x32xf32> to vector<16xf32>
    %21 = vector.shape_cast %20 : vector<16xf32> to vector<16x1xf32>
    %cst_8 = arith.constant 3.200000e+01 : f32
    %22 = vector.broadcast %cst_8 : f32 to vector<16x1xf32>
    %23 = arith.divf %21, %22 : vector<16x1xf32>
    %cst_9 = arith.constant 9.99999974E-6 : f32
    %24 = vector.broadcast %cst_9 : f32 to vector<16x1xf32>
    %25 = arith.addf %23, %24 : vector<16x1xf32>
    %26 = math.rsqrt %25 : vector<16x1xf32>
    %27 = vector.broadcast %26 : vector<16x1xf32> to vector<16x32xf32>
    %28 = arith.mulf %18, %27 : vector<16x32xf32>
    %29 = vector.shape_cast %10 : vector<32xf32> to vector<1x32xf32>
    %30 = vector.broadcast %29 : vector<1x32xf32> to vector<16x32xf32>
    %31 = arith.mulf %28, %30 : vector<16x32xf32>
    %32 = vector.shape_cast %12 : vector<32xf32> to vector<1x32xf32>
    %33 = vector.broadcast %32 : vector<1x32xf32> to vector<16x32xf32>
    %34 = arith.addf %31, %33 : vector<16x32xf32>
    %35 = arith.truncf %34 : vector<16x32xf32> to vector<16x32xbf16>
    %c0_10 = arith.constant 0 : index
    %c0_11 = arith.constant 0 : index
    %36 = vector.load %arg5[%c0_10, %c0_11] : memref<32x32xbf16, #tpu.memory_space<vmem>>, vector<32x32xbf16>
    %cst_12 = arith.constant dense<0.000000e+00> : vector<16x32xf32>
    %37 = tpu.matmul %35, %36, %cst_12 {dimension_numbers = #tpu.dot_dimension_numbers<[1], [0], [0], [1], [0, 0, 1, 1], [], []>} : vector<16x32xbf16>, vector<32x32xbf16>, vector<16x32xf32> -> vector<16x32xf32>
    %c0_13 = arith.constant 0 : index
    %c0_14 = arith.constant 0 : index
    %38 = vector.load %arg6[%c0_13, %c0_14] : memref<1x32xf32, #tpu.memory_space<vmem>>, vector<1x32xf32>
    %39 = vector.shape_cast %38 : vector<1x32xf32> to vector<32xf32>
    %40 = vector.shape_cast %39 : vector<32xf32> to vector<1x32xf32>
    %41 = vector.broadcast %40 : vector<1x32xf32> to vector<16x32xf32>
    %42 = arith.addf %37, %41 : vector<16x32xf32>
    %cst_15 = arith.constant 0.353553385 : f32
    %43 = vector.broadcast %cst_15 : f32 to vector<16x32xf32>
    %44 = arith.mulf %42, %43 : vector<16x32xf32>
    %45 = arith.truncf %44 : vector<16x32xf32> to vector<16x32xbf16>
    %c0_16 = arith.constant 0 : index
    %46 = arith.index_cast %5 : i32 to index
    %c0_17 = arith.constant 0 : index
    %47 = vector.load %arg2[%c0_16, %46, %c0_17] : memref<1x16x32xf32, #tpu.memory_space<vmem>>, vector<1x16x32xf32>
    %48 = vector.shape_cast %47 : vector<1x16x32xf32> to vector<16x32xf32>
    %c0_18 = arith.constant 0 : index
    %c0_19 = arith.constant 0 : index
    %49 = vector.load %arg3[%c0_18, %c0_19] : memref<1x32xf32, #tpu.memory_space<vmem>>, vector<1x32xf32>
    %50 = vector.shape_cast %49 : vector<1x32xf32> to vector<32xf32>
    %c0_20 = arith.constant 0 : index
    %c0_21 = arith.constant 0 : index
    %51 = vector.load %arg4[%c0_20, %c0_21] : memref<1x32xf32, #tpu.memory_space<vmem>>, vector<1x32xf32>
    %52 = vector.shape_cast %51 : vector<1x32xf32> to vector<32xf32>
    %cst_22 = arith.constant dense<0.000000e+00> : vector<16xf32>
    %53 = vector.multi_reduction <add>, %48, %cst_22 [1] : vector<16x32xf32> to vector<16xf32>
    %54 = vector.shape_cast %53 : vector<16xf32> to vector<16x1xf32>
    %cst_23 = arith.constant 3.200000e+01 : f32
    %55 = vector.broadcast %cst_23 : f32 to vector<16x1xf32>
    %56 = arith.divf %54, %55 : vector<16x1xf32>
    %57 = vector.broadcast %56 : vector<16x1xf32> to vector<16x32xf32>
    %58 = arith.subf %48, %57 : vector<16x32xf32>
    %59 = arith.mulf %58, %58 : vector<16x32xf32>
    %cst_24 = arith.constant dense<0.000000e+00> : vector<16xf32>
    %60 = vector.multi_reduction <add>, %59, %cst_24 [1] : vector<16x32xf32> to vector<16xf32>
    %61 = vector.shape_cast %60 : vector<16xf32> to vector<16x1xf32>
    %cst_25 = arith.constant 3.200000e+01 : f32
    %62 = vector.broadcast %cst_25 : f32 to vector<16x1xf32>
    %63 = arith.divf %61, %62 : vector<16x1xf32>
    %cst_26 = arith.constant 9.99999974E-6 : f32
    %64 = vector.broadcast %cst_26 : f32 to vector<16x1xf32>
    %65 = arith.addf %63, %64 : vector<16x1xf32>
    %66 = math.rsqrt %65 : vector<16x1xf32>
    %67 = vector.broadcast %66 : vector<16x1xf32> to vector<16x32xf32>
    %68 = arith.mulf %58, %67 : vector<16x32xf32>
    %69 = vector.shape_cast %50 : vector<32xf32> to vector<1x32xf32>
    %70 = vector.broadcast %69 : vector<1x32xf32> to vector<16x32xf32>
    %71 = arith.mulf %68, %70 : vector<16x32xf32>
    %72 = vector.shape_cast %52 : vector<32xf32> to vector<1x32xf32>
    %73 = vector.broadcast %72 : vector<1x32xf32> to vector<16x32xf32>
    %74 = arith.addf %71, %73 : vector<16x32xf32>
    %75 = arith.truncf %74 : vector<16x32xf32> to vector<16x32xbf16>
    %c0_27 = arith.constant 0 : index
    %c0_28 = arith.constant 0 : index
    %76 = vector.load %arg7[%c0_27, %c0_28] : memref<32x64xbf16, #tpu.memory_space<vmem>>, vector<32x64xbf16>
    %cst_29 = arith.constant dense<0.000000e+00> : vector<16x64xf32>
    %77 = tpu.matmul %75, %76, %cst_29 {dimension_numbers = #tpu.dot_dimension_numbers<[1], [0], [0], [1], [0, 0, 1, 1], [], []>} : vector<16x32xbf16>, vector<32x64xbf16>, vector<16x64xf32> -> vector<16x64xf32>
    %c0_30 = arith.constant 0 : index
    %c0_31 = arith.constant 0 : index
    %78 = vector.load %arg8[%c0_30, %c0_31] : memref<1x64xf32, #tpu.memory_space<vmem>>, vector<1x64xf32>
    %79 = vector.shape_cast %78 : vector<1x64xf32> to vector<64xf32>
    %80 = vector.shape_cast %79 : vector<64xf32> to vector<1x64xf32>
    %81 = vector.broadcast %80 : vector<1x64xf32> to vector<16x64xf32>
    %82 = arith.addf %77, %81 : vector<16x64xf32>
    %83 = vector.extract_strided_slice %82 {offsets = [0, 0], sizes = [16, 32], strides = [1, 1]} : vector<16x64xf32> to vector<16x32xf32>
    %84 = arith.truncf %83 : vector<16x32xf32> to vector<16x32xbf16>
    %85 = vector.extract_strided_slice %82 {offsets = [0, 32], sizes = [16, 32], strides = [1, 1]} : vector<16x64xf32> to vector<16x32xf32>
    %86 = arith.truncf %85 : vector<16x32xf32> to vector<16x32xbf16>
    %87 = tpu.iota {dimensions = array<i32: 0>} : vector<16x1xi32>
    %88 = vector.broadcast %1 : i32 to vector<16x1xi32>
    %89 = arith.addi %87, %88 : vector<16x1xi32>
    %90 = tpu.iota {dimensions = array<i32: 1>} : vector<1x16xi32>
    %91 = vector.broadcast %5 : i32 to vector<1x16xi32>
    %92 = arith.addi %90, %91 : vector<1x16xi32>
    %c3_i32 = arith.constant 3 : i32
    %93 = vector.broadcast %c3_i32 : i32 to vector<16x1xi32>
    %94 = arith.subi %89, %93 : vector<16x1xi32>
    %c0_i32_32 = arith.constant 0 : i32
    %c9_i32 = arith.constant 9 : i32
    %95 = vector.broadcast %c0_i32_32 : i32 to vector<16x1xi32>
    %96 = arith.maxsi %95, %94 : vector<16x1xi32>
    %97 = vector.broadcast %c9_i32 : i32 to vector<16x1xi32>
    %98 = arith.minsi %97, %96 : vector<16x1xi32>
    %99 = vector.broadcast %92 : vector<1x16xi32> to vector<16x16xi32>
    %100 = vector.broadcast %98 : vector<16x1xi32> to vector<16x16xi32>
    %101 = arith.cmpi sge, %99, %100 : vector<16x16xi32>
    %c7_i32 = arith.constant 7 : i32
    %102 = vector.broadcast %c7_i32 : i32 to vector<16x1xi32>
    %103 = arith.addi %98, %102 : vector<16x1xi32>
    %104 = vector.broadcast %92 : vector<1x16xi32> to vector<16x16xi32>
    %105 = vector.broadcast %103 : vector<16x1xi32> to vector<16x16xi32>
    %106 = arith.cmpi slt, %104, %105 : vector<16x16xi32>
    %107 = arith.andi %101, %106 : vector<16x16xi1>
    %108 = vector.extract_strided_slice %45 {offsets = [0, 0], sizes = [16, 8], strides = [1, 1]} : vector<16x32xbf16> to vector<16x8xbf16>
    %109 = vector.extract_strided_slice %84 {offsets = [0, 0], sizes = [16, 8], strides = [1, 1]} : vector<16x32xbf16> to vector<16x8xbf16>
    %cst_33 = arith.constant dense<0.000000e+00> : vector<16x16xf32>
    %110 = tpu.matmul %108, %109, %cst_33 {dimension_numbers = #tpu.dot_dimension_numbers<[1], [1], [0], [0], [0, 0, 1, 0], [], []>} : vector<16x8xbf16>, vector<16x8xbf16>, vector<16x16xf32> -> vector<16x16xf32>
    %cst_34 = arith.constant -1.000000e+30 : f32
    %111 = vector.broadcast %cst_34 : f32 to vector<16x16xf32>
    %112 = arith.select %107, %110, %111 : vector<16x16xi1>, vector<16x16xf32>
    %cst_35 = arith.constant dense<0xFF800000> : vector<16xf32>
    %113 = vector.multi_reduction <maximumf>, %112, %cst_35 [1] : vector<16x16xf32> to vector<16xf32>
    %114 = vector.shape_cast %113 : vector<16xf32> to vector<16x1xf32>
    %115 = vector.broadcast %114 : vector<16x1xf32> to vector<16x16xf32>
    %116 = arith.subf %112, %115 : vector<16x16xf32>
    %117 = math.exp %116 : vector<16x16xf32>
    %cst_36 = arith.constant dense<0.000000e+00> : vector<16xf32>
    %118 = vector.multi_reduction <add>, %117, %cst_36 [1] : vector<16x16xf32> to vector<16xf32>
    %119 = vector.shape_cast %118 : vector<16xf32> to vector<16x1xf32>
    %120 = tpu.reciprocal %119 {approx = true} : vector<16x1xf32> -> vector<16x1xf32>
    %121 = vector.broadcast %120 : vector<16x1xf32> to vector<16x16xf32>
    %122 = arith.mulf %117, %121 : vector<16x16xf32>
    %123 = arith.truncf %122 : vector<16x16xf32> to vector<16x16xbf16>
    %124 = vector.extract_strided_slice %86 {offsets = [0, 0], sizes = [16, 8], strides = [1, 1]} : vector<16x32xbf16> to vector<16x8xbf16>
    %cst_37 = arith.constant dense<0.000000e+00> : vector<16x8xf32>
    %125 = tpu.matmul %123, %124, %cst_37 {dimension_numbers = #tpu.dot_dimension_numbers<[1], [0], [0], [1], [0, 0, 1, 1], [], []>} : vector<16x16xbf16>, vector<16x8xbf16>, vector<16x8xf32> -> vector<16x8xf32>
    %c0_38 = arith.constant 0 : index
    %c0_39 = arith.constant 0 : index
    %126 = vector.load %arg18[%c0_38, %c0_39] : memref<16x32xf32, #tpu.memory_space<vmem>>, vector<16x8xf32>
    tpu.vector_store %arg18[%c0_38, %c0_39], %125 {strides = array<i32>} : memref<16x32xf32, #tpu.memory_space<vmem>>, vector<16x8xf32>,
    %127 = vector.extract_strided_slice %45 {offsets = [0, 8], sizes = [16, 8], strides = [1, 1]} : vector<16x32xbf16> to vector<16x8xbf16>
    %128 = vector.extract_strided_slice %84 {offsets = [0, 8], sizes = [16, 8], strides = [1, 1]} : vector<16x32xbf16> to vector<16x8xbf16>
    %cst_40 = arith.constant dense<0.000000e+00> : vector<16x16xf32>
    %129 = tpu.matmul %127, %128, %cst_40 {dimension_numbers = #tpu.dot_dimension_numbers<[1], [1], [0], [0], [0, 0, 1, 0], [], []>} : vector<16x8xbf16>, vector<16x8xbf16>, vector<16x16xf32> -> vector<16x16xf32>
    %cst_41 = arith.constant -1.000000e+30 : f32
    %130 = vector.broadcast %cst_41 : f32 to vector<16x16xf32>
    %131 = arith.select %107, %129, %130 : vector<16x16xi1>, vector<16x16xf32>
    %cst_42 = arith.constant dense<0xFF800000> : vector<16xf32>
    %132 = vector.multi_reduction <maximumf>, %131, %cst_42 [1] : vector<16x16xf32> to vector<16xf32>
    %133 = vector.shape_cast %132 : vector<16xf32> to vector<16x1xf32>
    %134 = vector.broadcast %133 : vector<16x1xf32> to vector<16x16xf32>
    %135 = arith.subf %131, %134 : vector<16x16xf32>
    %136 = math.exp %135 : vector<16x16xf32>
    %cst_43 = arith.constant dense<0.000000e+00> : vector<16xf32>
    %137 = vector.multi_reduction <add>, %136, %cst_43 [1] : vector<16x16xf32> to vector<16xf32>
    %138 = vector.shape_cast %137 : vector<16xf32> to vector<16x1xf32>
    %139 = tpu.reciprocal %138 {approx = true} : vector<16x1xf32> -> vector<16x1xf32>
    %140 = vector.broadcast %139 : vector<16x1xf32> to vector<16x16xf32>
    %141 = arith.mulf %136, %140 : vector<16x16xf32>
    %142 = arith.truncf %141 : vector<16x16xf32> to vector<16x16xbf16>
    %143 = vector.extract_strided_slice %86 {offsets = [0, 8], sizes = [16, 8], strides = [1, 1]} : vector<16x32xbf16> to vector<16x8xbf16>
    %cst_44 = arith.constant dense<0.000000e+00> : vector<16x8xf32>
    %144 = tpu.matmul %142, %143, %cst_44 {dimension_numbers = #tpu.dot_dimension_numbers<[1], [0], [0], [1], [0, 0, 1, 1], [], []>} : vector<16x16xbf16>, vector<16x8xbf16>, vector<16x8xf32> -> vector<16x8xf32>
    %c0_45 = arith.constant 0 : index
    %c8 = arith.constant 8 : index
    %145 = vector.load %arg18[%c0_45, %c8] : memref<16x32xf32, #tpu.memory_space<vmem>>, vector<16x8xf32>
    tpu.vector_store %arg18[%c0_45, %c8], %144 {strides = array<i32>} : memref<16x32xf32, #tpu.memory_space<vmem>>, vector<16x8xf32>,
    %146 = vector.extract_strided_slice %45 {offsets = [0, 16], sizes = [16, 8], strides = [1, 1]} : vector<16x32xbf16> to vector<16x8xbf16>
    %147 = vector.extract_strided_slice %84 {offsets = [0, 16], sizes = [16, 8], strides = [1, 1]} : vector<16x32xbf16> to vector<16x8xbf16>
    %cst_46 = arith.constant dense<0.000000e+00> : vector<16x16xf32>
    %148 = tpu.matmul %146, %147, %cst_46 {dimension_numbers = #tpu.dot_dimension_numbers<[1], [1], [0], [0], [0, 0, 1, 0], [], []>} : vector<16x8xbf16>, vector<16x8xbf16>, vector<16x16xf32> -> vector<16x16xf32>
    %cst_47 = arith.constant -1.000000e+30 : f32
    %149 = vector.broadcast %cst_47 : f32 to vector<16x16xf32>
    %150 = arith.select %107, %148, %149 : vector<16x16xi1>, vector<16x16xf32>
    %cst_48 = arith.constant dense<0xFF800000> : vector<16xf32>
    %151 = vector.multi_reduction <maximumf>, %150, %cst_48 [1] : vector<16x16xf32> to vector<16xf32>
    %152 = vector.shape_cast %151 : vector<16xf32> to vector<16x1xf32>
    %153 = vector.broadcast %152 : vector<16x1xf32> to vector<16x16xf32>
    %154 = arith.subf %150, %153 : vector<16x16xf32>
    %155 = math.exp %154 : vector<16x16xf32>
    %cst_49 = arith.constant dense<0.000000e+00> : vector<16xf32>
    %156 = vector.multi_reduction <add>, %155, %cst_49 [1] : vector<16x16xf32> to vector<16xf32>
    %157 = vector.shape_cast %156 : vector<16xf32> to vector<16x1xf32>
    %158 = tpu.reciprocal %157 {approx = true} : vector<16x1xf32> -> vector<16x1xf32>
    %159 = vector.broadcast %158 : vector<16x1xf32> to vector<16x16xf32>
    %160 = arith.mulf %155, %159 : vector<16x16xf32>
    %161 = arith.truncf %160 : vector<16x16xf32> to vector<16x16xbf16>
    %162 = vector.extract_strided_slice %86 {offsets = [0, 16], sizes = [16, 8], strides = [1, 1]} : vector<16x32xbf16> to vector<16x8xbf16>
    %cst_50 = arith.constant dense<0.000000e+00> : vector<16x8xf32>
    %163 = tpu.matmul %161, %162, %cst_50 {dimension_numbers = #tpu.dot_dimension_numbers<[1], [0], [0], [1], [0, 0, 1, 1], [], []>} : vector<16x16xbf16>, vector<16x8xbf16>, vector<16x8xf32> -> vector<16x8xf32>
    %c0_51 = arith.constant 0 : index
    %c16 = arith.constant 16 : index
    %164 = vector.load %arg18[%c0_51, %c16] : memref<16x32xf32, #tpu.memory_space<vmem>>, vector<16x8xf32>
    tpu.vector_store %arg18[%c0_51, %c16], %163 {strides = array<i32>} : memref<16x32xf32, #tpu.memory_space<vmem>>, vector<16x8xf32>,
    %165 = vector.extract_strided_slice %45 {offsets = [0, 24], sizes = [16, 8], strides = [1, 1]} : vector<16x32xbf16> to vector<16x8xbf16>
    %166 = vector.extract_strided_slice %84 {offsets = [0, 24], sizes = [16, 8], strides = [1, 1]} : vector<16x32xbf16> to vector<16x8xbf16>
    %cst_52 = arith.constant dense<0.000000e+00> : vector<16x16xf32>
    %167 = tpu.matmul %165, %166, %cst_52 {dimension_numbers = #tpu.dot_dimension_numbers<[1], [1], [0], [0], [0, 0, 1, 0], [], []>} : vector<16x8xbf16>, vector<16x8xbf16>, vector<16x16xf32> -> vector<16x16xf32>
    %cst_53 = arith.constant -1.000000e+30 : f32
    %168 = vector.broadcast %cst_53 : f32 to vector<16x16xf32>
    %169 = arith.select %107, %167, %168 : vector<16x16xi1>, vector<16x16xf32>
    %cst_54 = arith.constant dense<0xFF800000> : vector<16xf32>
    %170 = vector.multi_reduction <maximumf>, %169, %cst_54 [1] : vector<16x16xf32> to vector<16xf32>
    %171 = vector.shape_cast %170 : vector<16xf32> to vector<16x1xf32>
    %172 = vector.broadcast %171 : vector<16x1xf32> to vector<16x16xf32>
    %173 = arith.subf %169, %172 : vector<16x16xf32>
    %174 = math.exp %173 : vector<16x16xf32>
    %cst_55 = arith.constant dense<0.000000e+00> : vector<16xf32>
    %175 = vector.multi_reduction <add>, %174, %cst_55 [1] : vector<16x16xf32> to vector<16xf32>
    %176 = vector.shape_cast %175 : vector<16xf32> to vector<16x1xf32>
    %177 = tpu.reciprocal %176 {approx = true} : vector<16x1xf32> -> vector<16x1xf32>
    %178 = vector.broadcast %177 : vector<16x1xf32> to vector<16x16xf32>
    %179 = arith.mulf %174, %178 : vector<16x16xf32>
    %180 = arith.truncf %179 : vector<16x16xf32> to vector<16x16xbf16>
    %181 = vector.extract_strided_slice %86 {offsets = [0, 24], sizes = [16, 8], strides = [1, 1]} : vector<16x32xbf16> to vector<16x8xbf16>
    %cst_56 = arith.constant dense<0.000000e+00> : vector<16x8xf32>
    %182 = tpu.matmul %180, %181, %cst_56 {dimension_numbers = #tpu.dot_dimension_numbers<[1], [0], [0], [1], [0, 0, 1, 1], [], []>} : vector<16x16xbf16>, vector<16x8xbf16>, vector<16x8xf32> -> vector<16x8xf32>
    %c0_57 = arith.constant 0 : index
    %c24 = arith.constant 24 : index
    %183 = vector.load %arg18[%c0_57, %c24] : memref<16x32xf32, #tpu.memory_space<vmem>>, vector<16x8xf32>
    tpu.vector_store %arg18[%c0_57, %c24], %182 {strides = array<i32>} : memref<16x32xf32, #tpu.memory_space<vmem>>, vector<16x8xf32>,
    %c0_58 = arith.constant 0 : index
    %c0_59 = arith.constant 0 : index
    %184 = vector.load %arg18[%c0_58, %c0_59] : memref<16x32xf32, #tpu.memory_space<vmem>>, vector<16x32xf32>
    %185 = arith.truncf %184 : vector<16x32xf32> to vector<16x32xbf16>
    %c0_60 = arith.constant 0 : index
    %c0_61 = arith.constant 0 : index
    %186 = vector.load %arg9[%c0_60, %c0_61] : memref<32x32xbf16, #tpu.memory_space<vmem>>, vector<32x32xbf16>
    %cst_62 = arith.constant dense<0.000000e+00> : vector<16x32xf32>
    %187 = tpu.matmul %185, %186, %cst_62 {dimension_numbers = #tpu.dot_dimension_numbers<[1], [0], [0], [1], [0, 0, 1, 1], [], []>} : vector<16x32xbf16>, vector<32x32xbf16>, vector<16x32xf32> -> vector<16x32xf32>
    %c0_63 = arith.constant 0 : index
    %c0_64 = arith.constant 0 : index
    %188 = vector.load %arg10[%c0_63, %c0_64] : memref<1x32xf32, #tpu.memory_space<vmem>>, vector<1x32xf32>
    %189 = vector.shape_cast %188 : vector<1x32xf32> to vector<32xf32>
    %190 = vector.shape_cast %189 : vector<32xf32> to vector<1x32xf32>
    %191 = vector.broadcast %190 : vector<1x32xf32> to vector<16x32xf32>
    %192 = arith.addf %187, %191 : vector<16x32xf32>
    %193 = arith.addf %8, %192 : vector<16x32xf32>
    %c0_65 = arith.constant 0 : index
    %c0_66 = arith.constant 0 : index
    %194 = vector.load %arg11[%c0_65, %c0_66] : memref<1x32xf32, #tpu.memory_space<vmem>>, vector<1x32xf32>
    %195 = vector.shape_cast %194 : vector<1x32xf32> to vector<32xf32>
    %c0_67 = arith.constant 0 : index
    %c0_68 = arith.constant 0 : index
    %196 = vector.load %arg12[%c0_67, %c0_68] : memref<1x32xf32, #tpu.memory_space<vmem>>, vector<1x32xf32>
    %197 = vector.shape_cast %196 : vector<1x32xf32> to vector<32xf32>
    %cst_69 = arith.constant dense<0.000000e+00> : vector<16xf32>
    %198 = vector.multi_reduction <add>, %193, %cst_69 [1] : vector<16x32xf32> to vector<16xf32>
    %199 = vector.shape_cast %198 : vector<16xf32> to vector<16x1xf32>
    %cst_70 = arith.constant 3.200000e+01 : f32
    %200 = vector.broadcast %cst_70 : f32 to vector<16x1xf32>
    %201 = arith.divf %199, %200 : vector<16x1xf32>
    %202 = vector.broadcast %201 : vector<16x1xf32> to vector<16x32xf32>
    %203 = arith.subf %193, %202 : vector<16x32xf32>
    %204 = arith.mulf %203, %203 : vector<16x32xf32>
    %cst_71 = arith.constant dense<0.000000e+00> : vector<16xf32>
    %205 = vector.multi_reduction <add>, %204, %cst_71 [1] : vector<16x32xf32> to vector<16xf32>
    %206 = vector.shape_cast %205 : vector<16xf32> to vector<16x1xf32>
    %cst_72 = arith.constant 3.200000e+01 : f32
    %207 = vector.broadcast %cst_72 : f32 to vector<16x1xf32>
    %208 = arith.divf %206, %207 : vector<16x1xf32>
    %cst_73 = arith.constant 9.99999974E-6 : f32
    %209 = vector.broadcast %cst_73 : f32 to vector<16x1xf32>
    %210 = arith.addf %208, %209 : vector<16x1xf32>
    %211 = math.rsqrt %210 : vector<16x1xf32>
    %212 = vector.broadcast %211 : vector<16x1xf32> to vector<16x32xf32>
    %213 = arith.mulf %203, %212 : vector<16x32xf32>
    %214 = vector.shape_cast %195 : vector<32xf32> to vector<1x32xf32>
    %215 = vector.broadcast %214 : vector<1x32xf32> to vector<16x32xf32>
    %216 = arith.mulf %213, %215 : vector<16x32xf32>
    %217 = vector.shape_cast %197 : vector<32xf32> to vector<1x32xf32>
    %218 = vector.broadcast %217 : vector<1x32xf32> to vector<16x32xf32>
    %219 = arith.addf %216, %218 : vector<16x32xf32>
    %220 = arith.truncf %219 : vector<16x32xf32> to vector<16x32xbf16>
    %c0_74 = arith.constant 0 : index
    %c0_75 = arith.constant 0 : index
    %221 = vector.load %arg13[%c0_74, %c0_75] : memref<32x128xbf16, #tpu.memory_space<vmem>>, vector<32x128xbf16>
    %cst_76 = arith.constant dense<0.000000e+00> : vector<16x128xf32>
    %222 = tpu.matmul %220, %221, %cst_76 {dimension_numbers = #tpu.dot_dimension_numbers<[1], [0], [0], [1], [0, 0, 1, 1], [], []>} : vector<16x32xbf16>, vector<32x128xbf16>, vector<16x128xf32> -> vector<16x128xf32>
    %c0_77 = arith.constant 0 : index
    %c0_78 = arith.constant 0 : index
    %223 = vector.load %arg14[%c0_77, %c0_78] : memref<1x128xf32, #tpu.memory_space<vmem>>, vector<1x128xf32>
    %224 = vector.shape_cast %223 : vector<1x128xf32> to vector<128xf32>
    %225 = vector.shape_cast %224 : vector<128xf32> to vector<1x128xf32>
    %226 = vector.broadcast %225 : vector<1x128xf32> to vector<16x128xf32>
    %227 = arith.addf %222, %226 : vector<16x128xf32>
    %cst_79 = arith.constant 5.000000e-01 : f32
    %228 = vector.broadcast %cst_79 : f32 to vector<16x128xf32>
    %229 = arith.mulf %228, %227 : vector<16x128xf32>
    %230 = arith.mulf %227, %227 : vector<16x128xf32>
    %231 = arith.mulf %230, %227 : vector<16x128xf32>
    %cst_80 = arith.constant 4.471500e-02 : f32
    %232 = vector.broadcast %cst_80 : f32 to vector<16x128xf32>
    %233 = arith.mulf %232, %231 : vector<16x128xf32>
    %234 = arith.addf %227, %233 : vector<16x128xf32>
    %cst_81 = arith.constant 0.797884583 : f32
    %235 = vector.broadcast %cst_81 : f32 to vector<16x128xf32>
    %236 = arith.mulf %235, %234 : vector<16x128xf32>
    %237 = math.tanh %236 : vector<16x128xf32>
    %cst_82 = arith.constant 1.000000e+00 : f32
    %238 = vector.broadcast %cst_82 : f32 to vector<16x128xf32>
    %239 = arith.addf %238, %237 : vector<16x128xf32>
    %240 = arith.mulf %229, %239 : vector<16x128xf32>
    %241 = arith.truncf %240 : vector<16x128xf32> to vector<16x128xbf16>
    %c0_83 = arith.constant 0 : index
    %c0_84 = arith.constant 0 : index
    %242 = vector.load %arg15[%c0_83, %c0_84] : memref<128x32xbf16, #tpu.memory_space<vmem>>, vector<128x32xbf16>
    %cst_85 = arith.constant dense<0.000000e+00> : vector<16x32xf32>
    %243 = tpu.matmul %241, %242, %cst_85 {dimension_numbers = #tpu.dot_dimension_numbers<[1], [0], [0], [1], [0, 0, 1, 1], [], []>} : vector<16x128xbf16>, vector<128x32xbf16>, vector<16x32xf32> -> vector<16x32xf32>
    %c0_86 = arith.constant 0 : index
    %c0_87 = arith.constant 0 : index
    %244 = vector.load %arg16[%c0_86, %c0_87] : memref<1x32xf32, #tpu.memory_space<vmem>>, vector<1x32xf32>
    %245 = vector.shape_cast %244 : vector<1x32xf32> to vector<32xf32>
    %246 = vector.shape_cast %245 : vector<32xf32> to vector<1x32xf32>
    %247 = vector.broadcast %246 : vector<1x32xf32> to vector<16x32xf32>
    %248 = arith.addf %243, %247 : vector<16x32xf32>
    %249 = arith.addf %193, %248 : vector<16x32xf32>
    %c0_88 = arith.constant 0 : index
    %c0_89 = arith.constant 0 : index
    %c0_90 = arith.constant 0 : index
    %250 = vector.load %arg17[%c0_88, %c0_89, %c0_90] : memref<1x16x32xf32, #tpu.memory_space<vmem>>, vector<1x16x32xf32>
    %251 = vector.shape_cast %250 : vector<1x16x32xf32> to vector<16x32xf32>
    %252 = vector.shape_cast %249 : vector<16x32xf32> to vector<1x16x32xf32>
    tpu.vector_store %arg17[%c0_88, %c0_89, %c0_90], %252 {strides = array<i32>} : memref<1x16x32xf32, #tpu.memory_space<vmem>>, vector<1x16x32xf32>,
    return
  }
  func.func @transform_0(%arg0: i32, %arg1: i32) -> (i32, i32, i32) {
    %c0_i32 = arith.constant 0 : i32
    %c0_i32_0 = arith.constant 0 : i32
    %c0_i32_1 = arith.constant 0 : i32
    return %arg0, %c0_i32, %c0_i32_0 : i32, i32, i32
  }
  func.func @transform_1(%arg0: i32, %arg1: i32) -> (i32, i32) {
    %c0_i32 = arith.constant 0 : i32
    %c0_i32_0 = arith.constant 0 : i32
    %c0_i32_1 = arith.constant 0 : i32
    return %c0_i32, %c0_i32_0 : i32, i32
  }
  func.func @transform_2(%arg0: i32, %arg1: i32) -> (i32, i32) {
    %c0_i32 = arith.constant 0 : i32
    %c0_i32_0 = arith.constant 0 : i32
    %c0_i32_1 = arith.constant 0 : i32
    return %c0_i32, %c0_i32_0 : i32, i32
  }
  func.func @transform_3(%arg0: i32, %arg1: i32) -> (i32, i32) {
    %c0_i32 = arith.constant 0 : i32
    %c0_i32_0 = arith.constant 0 : i32
    %c0_i32_1 = arith.constant 0 : i32
    return %c0_i32, %c0_i32_0 : i32, i32
  }
  func.func @transform_4(%arg0: i32, %arg1: i32) -> (i32, i32) {
    %c0_i32 = arith.constant 0 : i32
    %c0_i32_0 = arith.constant 0 : i32
    %c0_i32_1 = arith.constant 0 : i32
    return %c0_i32, %c0_i32_0 : i32, i32
  }
  func.func @transform_5(%arg0: i32, %arg1: i32) -> (i32, i32) {
    %c0_i32 = arith.constant 0 : i32
    %c0_i32_0 = arith.constant 0 : i32
    %c0_i32_1 = arith.constant 0 : i32
    return %c0_i32, %c0_i32_0 : i32, i32
  }
  func.func @transform_6(%arg0: i32, %arg1: i32) -> (i32, i32) {
    %c0_i32 = arith.constant 0 : i32
    %c0_i32_0 = arith.constant 0 : i32
    %c0_i32_1 = arith.constant 0 : i32
    return %c0_i32, %c0_i32_0 : i32, i32
  }
  func.func @transform_7(%arg0: i32, %arg1: i32) -> (i32, i32) {
    %c0_i32 = arith.constant 0 : i32
    %c0_i32_0 = arith.constant 0 : i32
    %c0_i32_1 = arith.constant 0 : i32
    return %c0_i32, %c0_i32_0 : i32, i32
  }
  func.func @transform_8(%arg0: i32, %arg1: i32) -> (i32, i32) {
    %c0_i32 = arith.constant 0 : i32
    %c0_i32_0 = arith.constant 0 : i32
    %c0_i32_1 = arith.constant 0 : i32
    return %c0_i32, %c0_i32_0 : i32, i32
  }
  func.func @transform_9(%arg0: i32, %arg1: i32) -> (i32, i32) {
    %c0_i32 = arith.constant 0 : i32
    %c0_i32_0 = arith.constant 0 : i32
    %c0_i32_1 = arith.constant 0 : i32
    return %c0_i32, %c0_i32_0 : i32, i32
  }
  func.func @transform_10(%arg0: i32, %arg1: i32) -> (i32, i32) {
    %c0_i32 = arith.constant 0 : i32
    %c0_i32_0 = arith.constant 0 : i32
    %c0_i32_1 = arith.constant 0 : i32
    return %c0_i32, %c0_i32_0 : i32, i32
  }
  func.func @transform_11(%arg0: i32, %arg1: i32) -> (i32, i32) {
    %c0_i32 = arith.constant 0 : i32
    %c0_i32_0 = arith.constant 0 : i32
    %c0_i32_1 = arith.constant 0 : i32
    return %c0_i32, %c0_i32_0 : i32, i32
  }
  func.func @transform_12(%arg0: i32, %arg1: i32) -> (i32, i32) {
    %c0_i32 = arith.constant 0 : i32
    %c0_i32_0 = arith.constant 0 : i32
    %c0_i32_1 = arith.constant 0 : i32
    return %c0_i32, %c0_i32_0 : i32, i32
  }
  func.func @transform_13(%arg0: i32, %arg1: i32) -> (i32, i32) {
    %c0_i32 = arith.constant 0 : i32
    %c0_i32_0 = arith.constant 0 : i32
    %c0_i32_1 = arith.constant 0 : i32
    return %c0_i32, %c0_i32_0 : i32, i32
  }
  func.func @transform_14(%arg0: i32, %arg1: i32) -> (i32, i32) {
    %c0_i32 = arith.constant 0 : i32
    %c0_i32_0 = arith.constant 0 : i32
    %c0_i32_1 = arith.constant 0 : i32
    return %c0_i32, %c0_i32_0 : i32, i32
  }
  func.func @transform_15(%arg0: i32, %arg1: i32) -> (i32, i32, i32) {
    %c0_i32 = arith.constant 0 : i32
    %c0_i32_0 = arith.constant 0 : i32
    return %arg0, %arg1, %c0_i32 : i32, i32, i32
  }
}

module attributes {stable_mosaic.version = 11 : i64} {
  func.func @nat_layer_kernel(%arg0: i32, %arg1: i32, %arg2: memref<1x16x32xf32, #tpu.memory_space<vmem>>, %arg3: memref<1x32xf32, #tpu.memory_space<vmem>>, %arg4: memref<1x32xf32, #tpu.memory_space<vmem>>, %arg5: memref<32x32xbf16, #tpu.memory_space<vmem>>, %arg6: memref<1x32xf32, #tpu.memory_space<vmem>>, %arg7: memref<32x64xbf16, #tpu.memory_space<vmem>>, %arg8: memref<1x64xf32, #tpu.memory_space<vmem>>, %arg9: memref<32x32xbf16, #tpu.memory_space<vmem>>, %arg10: memref<1x32xf32, #tpu.memory_space<vmem>>, %arg11: memref<1x32xf32, #tpu.memory_space<vmem>>, %arg12: memref<1x32xf32, #tpu.memory_space<vmem>>, %arg13: memref<32x128xbf16, #tpu.memory_space<vmem>>, %arg14: memref<1x128xf32, #tpu.memory_space<vmem>>, %arg15: memref<128x32xbf16, #tpu.memory_space<vmem>>, %arg16: memref<1x32xf32, #tpu.memory_space<vmem>>, %arg17: memref<1x16x32xf32, #tpu.memory_space<vmem>>, %arg18: memref<16x32xf32, #tpu.memory_space<vmem>>) attributes {dimension_semantics = [#tpu.dimension_semantics<parallel>, #tpu.dimension_semantics<parallel>], iteration_bounds = array<i64: 2, 1>, scalar_prefetch = 0 : i64, scratch_operands = 1 : i64, tpu.core_type = #tpu.core_type<tc>, window_params = [{transform_indices = @transform_0, window_bounds = array<i64: 1, 16, 32>}, {pipeline_mode = #tpu.pipeline_mode<synchronous>, transform_indices = @transform_1, window_bounds = array<i64: 1, 32>}, {pipeline_mode = #tpu.pipeline_mode<synchronous>, transform_indices = @transform_2, window_bounds = array<i64: 1, 32>}, {pipeline_mode = #tpu.pipeline_mode<synchronous>, transform_indices = @transform_3, window_bounds = array<i64: 32, 32>}, {pipeline_mode = #tpu.pipeline_mode<synchronous>, transform_indices = @transform_4, window_bounds = array<i64: 1, 32>}, {pipeline_mode = #tpu.pipeline_mode<synchronous>, transform_indices = @transform_5, window_bounds = array<i64: 32, 64>}, {pipeline_mode = #tpu.pipeline_mode<synchronous>, transform_indices = @transform_6, window_bounds = array<i64: 1, 64>}, {pipeline_mode = #tpu.pipeline_mode<synchronous>, transform_indices = @transform_7, window_bounds = array<i64: 32, 32>}, {pipeline_mode = #tpu.pipeline_mode<synchronous>, transform_indices = @transform_8, window_bounds = array<i64: 1, 32>}, {pipeline_mode = #tpu.pipeline_mode<synchronous>, transform_indices = @transform_9, window_bounds = array<i64: 1, 32>}, {pipeline_mode = #tpu.pipeline_mode<synchronous>, transform_indices = @transform_10, window_bounds = array<i64: 1, 32>}, {pipeline_mode = #tpu.pipeline_mode<synchronous>, transform_indices = @transform_11, window_bounds = array<i64: 32, 128>}, {pipeline_mode = #tpu.pipeline_mode<synchronous>, transform_indices = @transform_12, window_bounds = array<i64: 1, 128>}, {pipeline_mode = #tpu.pipeline_mode<synchronous>, transform_indices = @transform_13, window_bounds = array<i64: 128, 32>}, {pipeline_mode = #tpu.pipeline_mode<synchronous>, transform_indices = @transform_14, window_bounds = array<i64: 1, 32>}, {transform_indices = @transform_15, window_bounds = array<i64: 1, 16, 32>}]} {
    %c16_i32 = arith.constant 16 : i32
    %0 = arith.muli %arg1, %c16_i32 : i32
    %1 = tpu.assume_multiple %0, 8 : i32
    %c8_i32 = arith.constant 8 : i32
    %2 = arith.subi %1, %c8_i32 : i32
    %c0_i32 = arith.constant 0 : i32
    %c0_i32_0 = arith.constant 0 : i32
    %3 = arith.maxsi %c0_i32, %2 : i32
    %4 = arith.minsi %c0_i32_0, %3 : i32
    %5 = tpu.assume_multiple %4, 8 : i32
    %c0 = arith.constant 0 : index
    %6 = arith.index_cast %1 : i32 to index
    %c0_1 = arith.constant 0 : index
    %7 = vector.load %arg2[%c0, %6, %c0_1] : memref<1x16x32xf32, #tpu.memory_space<vmem>>, vector<1x16x32xf32>
    %8 = vector.shape_cast %7 : vector<1x16x32xf32> to vector<16x32xf32>
    %c0_2 = arith.constant 0 : index
    %c0_3 = arith.constant 0 : index
    %9 = vector.load %arg3[%c0_2, %c0_3] : memref<1x32xf32, #tpu.memory_space<vmem>>, vector<1x32xf32>
    %10 = vector.shape_cast %9 : vector<1x32xf32> to vector<32xf32>
    %c0_4 = arith.constant 0 : index
    %c0_5 = arith.constant 0 : index
    %11 = vector.load %arg4[%c0_4, %c0_5] : memref<1x32xf32, #tpu.memory_space<vmem>>, vector<1x32xf32>
    %12 = vector.shape_cast %11 : vector<1x32xf32> to vector<32xf32>
    %cst = arith.constant dense<0.000000e+00> : vector<16xf32>
    %13 = vector.multi_reduction <add>, %8, %cst [1] : vector<16x32xf32> to vector<16xf32>
    %14 = vector.shape_cast %13 : vector<16xf32> to vector<16x1xf32>
    %cst_6 = arith.constant 3.200000e+01 : f32
    %15 = vector.broadcast %cst_6 : f32 to vector<16x1xf32>
    %16 = arith.divf %14, %15 : vector<16x1xf32>
    %17 = vector.broadcast %16 : vector<16x1xf32> to vector<16x32xf32>
    %18 = arith.subf %8, %17 : vector<16x32xf32>
    %19 = arith.mulf %18, %18 : vector<16x32xf32>
    %cst_7 = arith.constant dense<0.000000e+00> : vector<16xf32>
    %20 = vector.multi_reduction <add>, %19, %cst_7 [1] : vector<16x32xf32> to vector<16xf32>
    %21 = vector.shape_cast %20 : vector<16xf32> to vector<16x1xf32>
    %cst_8 = arith.constant 3.200000e+01 : f32
    %22 = vector.broadcast %cst_8 : f32 to vector<16x1xf32>
    %23 = arith.divf %21, %22 : vector<16x1xf32>
    %cst_9 = arith.constant 9.99999974E-6 : f32
    %24 = vector.broadcast %cst_9 : f32 to vector<16x1xf32>
    %25 = arith.addf %23, %24 : vector<16x1xf32>
    %26 = math.rsqrt %25 : vector<16x1xf32>
    %27 = vector.broadcast %26 : vector<16x1xf32> to vector<16x32xf32>
    %28 = arith.mulf %18, %27 : vector<16x32xf32>
    %29 = vector.shape_cast %10 : vector<32xf32> to vector<1x32xf32>
    %30 = vector.broadcast %29 : vector<1x32xf32> to vector<16x32xf32>
    %31 = arith.mulf %28, %30 : vector<16x32xf32>
    %32 = vector.shape_cast %12 : vector<32xf32> to vector<1x32xf32>
    %33 = vector.broadcast %32 : vector<1x32xf32> to vector<16x32xf32>
    %34 = arith.addf %31, %33 : vector<16x32xf32>
    %35 = arith.truncf %34 : vector<16x32xf32> to vector<16x32xbf16>
    %c0_10 = arith.constant 0 : index
    %c0_11 = arith.constant 0 : index
    %36 = vector.load %arg5[%c0_10, %c0_11] : memref<32x32xbf16, #tpu.memory_space<vmem>>, vector<32x32xbf16>
    %cst_12 = arith.constant dense<0.000000e+00> : vector<16x32xf32>
    %37 = tpu.matmul %35, %36, %cst_12 {dimension_numbers = #tpu.dot_dimension_numbers<[1], [0], [0], [1], [0, 0, 1, 1], [], []>} : vector<16x32xbf16>, vector<32x32xbf16>, vector<16x32xf32> -> vector<16x32xf32>
    %c0_13 = arith.constant 0 : index
    %c0_14 = arith.constant 0 : index
    %38 = vector.load %arg6[%c0_13, %c0_14] : memref<1x32xf32, #tpu.memory_space<vmem>>, vector<1x32xf32>
    %39 = vector.shape_cast %38 : vector<1x32xf32> to vector<32xf32>
    %40 = vector.shape_cast %39 : vector<32xf32> to vector<1x32xf32>
    %41 = vector.broadcast %40 : vector<1x32xf32> to vector<16x32xf32>
    %42 = arith.addf %37, %41 : vector<16x32xf32>
    %cst_15 = arith.constant 0.353553385 : f32
    %43 = vector.broadcast %cst_15 : f32 to vector<16x32xf32>
    %44 = arith.mulf %42, %43 : vector<16x32xf32>
    %45 = arith.truncf %44 : vector<16x32xf32> to vector<16x32xbf16>
    %c0_16 = arith.constant 0 : index
    %46 = arith.index_cast %5 : i32 to index
    %c0_17 = arith.constant 0 : index
    %47 = vector.load %arg2[%c0_16, %46, %c0_17] : memref<1x16x32xf32, #tpu.memory_space<vmem>>, vector<1x16x32xf32>
    %48 = vector.shape_cast %47 : vector<1x16x32xf32> to vector<16x32xf32>
    %c0_18 = arith.constant 0 : index
    %c0_19 = arith.constant 0 : index
    %49 = vector.load %arg3[%c0_18, %c0_19] : memref<1x32xf32, #tpu.memory_space<vmem>>, vector<1x32xf32>
    %50 = vector.shape_cast %49 : vector<1x32xf32> to vector<32xf32>
    %c0_20 = arith.constant 0 : index
    %c0_21 = arith.constant 0 : index
    %51 = vector.load %arg4[%c0_20, %c0_21] : memref<1x32xf32, #tpu.memory_space<vmem>>, vector<1x32xf32>
    %52 = vector.shape_cast %51 : vector<1x32xf32> to vector<32xf32>
    %cst_22 = arith.constant dense<0.000000e+00> : vector<16xf32>
    %53 = vector.multi_reduction <add>, %48, %cst_22 [1] : vector<16x32xf32> to vector<16xf32>
    %54 = vector.shape_cast %53 : vector<16xf32> to vector<16x1xf32>
    %cst_23 = arith.constant 3.200000e+01 : f32
    %55 = vector.broadcast %cst_23 : f32 to vector<16x1xf32>
    %56 = arith.divf %54, %55 : vector<16x1xf32>
    %57 = vector.broadcast %56 : vector<16x1xf32> to vector<16x32xf32>
    %58 = arith.subf %48, %57 : vector<16x32xf32>
    %59 = arith.mulf %58, %58 : vector<16x32xf32>
    %cst_24 = arith.constant dense<0.000000e+00> : vector<16xf32>
    %60 = vector.multi_reduction <add>, %59, %cst_24 [1] : vector<16x32xf32> to vector<16xf32>
    %61 = vector.shape_cast %60 : vector<16xf32> to vector<16x1xf32>
    %cst_25 = arith.constant 3.200000e+01 : f32
    %62 = vector.broadcast %cst_25 : f32 to vector<16x1xf32>
    %63 = arith.divf %61, %62 : vector<16x1xf32>
    %cst_26 = arith.constant 9.99999974E-6 : f32
    %64 = vector.broadcast %cst_26 : f32 to vector<16x1xf32>
    %65 = arith.addf %63, %64 : vector<16x1xf32>
    %66 = math.rsqrt %65 : vector<16x1xf32>
    %67 = vector.broadcast %66 : vector<16x1xf32> to vector<16x32xf32>
    %68 = arith.mulf %58, %67 : vector<16x32xf32>
    %69 = vector.shape_cast %50 : vector<32xf32> to vector<1x32xf32>
    %70 = vector.broadcast %69 : vector<1x32xf32> to vector<16x32xf32>
    %71 = arith.mulf %68, %70 : vector<16x32xf32>
    %72 = vector.shape_cast %52 : vector<32xf32> to vector<1x32xf32>
    %73 = vector.broadcast %72 : vector<1x32xf32> to vector<16x32xf32>
    %74 = arith.addf %71, %73 : vector<16x32xf32>
    %75 = arith.truncf %74 : vector<16x32xf32> to vector<16x32xbf16>
    %c0_27 = arith.constant 0 : index
    %c0_28 = arith.constant 0 : index
    %76 = vector.load %arg7[%c0_27, %c0_28] : memref<32x64xbf16, #tpu.memory_space<vmem>>, vector<32x64xbf16>
    %cst_29 = arith.constant dense<0.000000e+00> : vector<16x64xf32>
    %77 = tpu.matmul %75, %76, %cst_29 {dimension_numbers = #tpu.dot_dimension_numbers<[1], [0], [0], [1], [0, 0, 1, 1], [], []>} : vector<16x32xbf16>, vector<32x64xbf16>, vector<16x64xf32> -> vector<16x64xf32>
    %c0_30 = arith.constant 0 : index
    %c0_31 = arith.constant 0 : index
    %78 = vector.load %arg8[%c0_30, %c0_31] : memref<1x64xf32, #tpu.memory_space<vmem>>, vector<1x64xf32>
    %79 = vector.shape_cast %78 : vector<1x64xf32> to vector<64xf32>
    %80 = vector.shape_cast %79 : vector<64xf32> to vector<1x64xf32>
    %81 = vector.broadcast %80 : vector<1x64xf32> to vector<16x64xf32>
    %82 = arith.addf %77, %81 : vector<16x64xf32>
    %83 = vector.extract_strided_slice %82 {offsets = [0, 0], sizes = [16, 32], strides = [1, 1]} : vector<16x64xf32> to vector<16x32xf32>
    %84 = arith.truncf %83 : vector<16x32xf32> to vector<16x32xbf16>
    %85 = vector.extract_strided_slice %82 {offsets = [0, 32], sizes = [16, 32], strides = [1, 1]} : vector<16x64xf32> to vector<16x32xf32>
    %86 = arith.truncf %85 : vector<16x32xf32> to vector<16x32xbf16>
    %87 = tpu.iota {dimensions = array<i32: 0>} : vector<16x1xi32>
    %88 = vector.broadcast %1 : i32 to vector<16x1xi32>
    %89 = arith.addi %87, %88 : vector<16x1xi32>
    %90 = tpu.iota {dimensions = array<i32: 1>} : vector<1x16xi32>
    %91 = vector.broadcast %5 : i32 to vector<1x16xi32>
    %92 = arith.addi %90, %91 : vector<1x16xi32>
    %c3_i32 = arith.constant 3 : i32
    %93 = vector.broadcast %c3_i32 : i32 to vector<16x1xi32>
    %94 = arith.subi %89, %93 : vector<16x1xi32>
    %c0_i32_32 = arith.constant 0 : i32
    %c9_i32 = arith.constant 9 : i32
    %95 = vector.broadcast %c0_i32_32 : i32 to vector<16x1xi32>
    %96 = arith.maxsi %95, %94 : vector<16x1xi32>
    %97 = vector.broadcast %c9_i32 : i32 to vector<16x1xi32>
    %98 = arith.minsi %97, %96 : vector<16x1xi32>
    %99 = vector.broadcast %92 : vector<1x16xi32> to vector<16x16xi32>
    %100 = vector.broadcast %98 : vector<16x1xi32> to vector<16x16xi32>
    %101 = arith.cmpi sge, %99, %100 : vector<16x16xi32>
    %c7_i32 = arith.constant 7 : i32
    %102 = vector.broadcast %c7_i32 : i32 to vector<16x1xi32>
    %103 = arith.addi %98, %102 : vector<16x1xi32>
    %104 = vector.broadcast %92 : vector<1x16xi32> to vector<16x16xi32>
    %105 = vector.broadcast %103 : vector<16x1xi32> to vector<16x16xi32>
    %106 = arith.cmpi slt, %104, %105 : vector<16x16xi32>
    %107 = arith.andi %101, %106 : vector<16x16xi1>
    %108 = vector.extract_strided_slice %45 {offsets = [0, 0], sizes = [16, 8], strides = [1, 1]} : vector<16x32xbf16> to vector<16x8xbf16>
    %109 = vector.extract_strided_slice %84 {offsets = [0, 0], sizes = [16, 8], strides = [1, 1]} : vector<16x32xbf16> to vector<16x8xbf16>
    %cst_33 = arith.constant dense<0.000000e+00> : vector<16x16xf32>
    %110 = tpu.matmul %108, %109, %cst_33 {dimension_numbers = #tpu.dot_dimension_numbers<[1], [1], [0], [0], [0, 0, 1, 0], [], []>} : vector<16x8xbf16>, vector<16x8xbf16>, vector<16x16xf32> -> vector<16x16xf32>
    %cst_34 = arith.constant -1.000000e+30 : f32
    %111 = vector.broadcast %cst_34 : f32 to vector<16x16xf32>
    %112 = arith.select %107, %110, %111 : vector<16x16xi1>, vector<16x16xf32>
    %cst_35 = arith.constant dense<0xFF800000> : vector<16xf32>
    %113 = vector.multi_reduction <maximumf>, %112, %cst_35 [1] : vector<16x16xf32> to vector<16xf32>
    %114 = vector.shape_cast %113 : vector<16xf32> to vector<16x1xf32>
    %115 = vector.broadcast %114 : vector<16x1xf32> to vector<16x16xf32>
    %116 = arith.subf %112, %115 : vector<16x16xf32>
    %117 = math.exp %116 : vector<16x16xf32>
    %cst_36 = arith.constant dense<0.000000e+00> : vector<16xf32>
    %118 = vector.multi_reduction <add>, %117, %cst_36 [1] : vector<16x16xf32> to vector<16xf32>
    %119 = vector.shape_cast %118 : vector<16xf32> to vector<16x1xf32>
    %120 = tpu.reciprocal %119 {approx = true} : vector<16x1xf32> -> vector<16x1xf32>
    %121 = vector.broadcast %120 : vector<16x1xf32> to vector<16x16xf32>
    %122 = arith.mulf %117, %121 : vector<16x16xf32>
    %123 = arith.truncf %122 : vector<16x16xf32> to vector<16x16xbf16>
    %124 = vector.extract_strided_slice %86 {offsets = [0, 0], sizes = [16, 8], strides = [1, 1]} : vector<16x32xbf16> to vector<16x8xbf16>
    %cst_37 = arith.constant dense<0.000000e+00> : vector<16x8xf32>
    %125 = tpu.matmul %123, %124, %cst_37 {dimension_numbers = #tpu.dot_dimension_numbers<[1], [0], [0], [1], [0, 0, 1, 1], [], []>} : vector<16x16xbf16>, vector<16x8xbf16>, vector<16x8xf32> -> vector<16x8xf32>
    %c0_38 = arith.constant 0 : index
    %c0_39 = arith.constant 0 : index
    %126 = vector.load %arg18[%c0_38, %c0_39] : memref<16x32xf32, #tpu.memory_space<vmem>>, vector<16x8xf32>
    tpu.vector_store %arg18[%c0_38, %c0_39], %125 {strides = array<i32>} : memref<16x32xf32, #tpu.memory_space<vmem>>, vector<16x8xf32>,
    %127 = vector.extract_strided_slice %45 {offsets = [0, 8], sizes = [16, 8], strides = [1, 1]} : vector<16x32xbf16> to vector<16x8xbf16>
    %128 = vector.extract_strided_slice %84 {offsets = [0, 8], sizes = [16, 8], strides = [1, 1]} : vector<16x32xbf16> to vector<16x8xbf16>
    %cst_40 = arith.constant dense<0.000000e+00> : vector<16x16xf32>
    %129 = tpu.matmul %127, %128, %cst_40 {dimension_numbers = #tpu.dot_dimension_numbers<[1], [1], [0], [0], [0, 0, 1, 0], [], []>} : vector<16x8xbf16>, vector<16x8xbf16>, vector<16x16xf32> -> vector<16x16xf32>
    %cst_41 = arith.constant -1.000000e+30 : f32
    %130 = vector.broadcast %cst_41 : f32 to vector<16x16xf32>
    %131 = arith.select %107, %129, %130 : vector<16x16xi1>, vector<16x16xf32>
    %cst_42 = arith.constant dense<0xFF800000> : vector<16xf32>
    %132 = vector.multi_reduction <maximumf>, %131, %cst_42 [1] : vector<16x16xf32> to vector<16xf32>
    %133 = vector.shape_cast %132 : vector<16xf32> to vector<16x1xf32>
    %134 = vector.broadcast %133 : vector<16x1xf32> to vector<16x16xf32>
    %135 = arith.subf %131, %134 : vector<16x16xf32>
    %136 = math.exp %135 : vector<16x16xf32>
    %cst_43 = arith.constant dense<0.000000e+00> : vector<16xf32>
    %137 = vector.multi_reduction <add>, %136, %cst_43 [1] : vector<16x16xf32> to vector<16xf32>
    %138 = vector.shape_cast %137 : vector<16xf32> to vector<16x1xf32>
    %139 = tpu.reciprocal %138 {approx = true} : vector<16x1xf32> -> vector<16x1xf32>
    %140 = vector.broadcast %139 : vector<16x1xf32> to vector<16x16xf32>
    %141 = arith.mulf %136, %140 : vector<16x16xf32>
    %142 = arith.truncf %141 : vector<16x16xf32> to vector<16x16xbf16>
    %143 = vector.extract_strided_slice %86 {offsets = [0, 8], sizes = [16, 8], strides = [1, 1]} : vector<16x32xbf16> to vector<16x8xbf16>
    %cst_44 = arith.constant dense<0.000000e+00> : vector<16x8xf32>
    %144 = tpu.matmul %142, %143, %cst_44 {dimension_numbers = #tpu.dot_dimension_numbers<[1], [0], [0], [1], [0, 0, 1, 1], [], []>} : vector<16x16xbf16>, vector<16x8xbf16>, vector<16x8xf32> -> vector<16x8xf32>
    %c0_45 = arith.constant 0 : index
    %c8 = arith.constant 8 : index
    %145 = vector.load %arg18[%c0_45, %c8] : memref<16x32xf32, #tpu.memory_space<vmem>>, vector<16x8xf32>
    tpu.vector_store %arg18[%c0_45, %c8], %144 {strides = array<i32>} : memref<16x32xf32, #tpu.memory_space<vmem>>, vector<16x8xf32>,
    %146 = vector.extract_strided_slice %45 {offsets = [0, 16], sizes = [16, 8], strides = [1, 1]} : vector<16x32xbf16> to vector<16x8xbf16>
    %147 = vector.extract_strided_slice %84 {offsets = [0, 16], sizes = [16, 8], strides = [1, 1]} : vector<16x32xbf16> to vector<16x8xbf16>
    %cst_46 = arith.constant dense<0.000000e+00> : vector<16x16xf32>
    %148 = tpu.matmul %146, %147, %cst_46 {dimension_numbers = #tpu.dot_dimension_numbers<[1], [1], [0], [0], [0, 0, 1, 0], [], []>} : vector<16x8xbf16>, vector<16x8xbf16>, vector<16x16xf32> -> vector<16x16xf32>
    %cst_47 = arith.constant -1.000000e+30 : f32
    %149 = vector.broadcast %cst_47 : f32 to vector<16x16xf32>
    %150 = arith.select %107, %148, %149 : vector<16x16xi1>, vector<16x16xf32>
    %cst_48 = arith.constant dense<0xFF800000> : vector<16xf32>
    %151 = vector.multi_reduction <maximumf>, %150, %cst_48 [1] : vector<16x16xf32> to vector<16xf32>
    %152 = vector.shape_cast %151 : vector<16xf32> to vector<16x1xf32>
    %153 = vector.broadcast %152 : vector<16x1xf32> to vector<16x16xf32>
    %154 = arith.subf %150, %153 : vector<16x16xf32>
    %155 = math.exp %154 : vector<16x16xf32>
    %cst_49 = arith.constant dense<0.000000e+00> : vector<16xf32>
    %156 = vector.multi_reduction <add>, %155, %cst_49 [1] : vector<16x16xf32> to vector<16xf32>
    %157 = vector.shape_cast %156 : vector<16xf32> to vector<16x1xf32>
    %158 = tpu.reciprocal %157 {approx = true} : vector<16x1xf32> -> vector<16x1xf32>
    %159 = vector.broadcast %158 : vector<16x1xf32> to vector<16x16xf32>
    %160 = arith.mulf %155, %159 : vector<16x16xf32>
    %161 = arith.truncf %160 : vector<16x16xf32> to vector<16x16xbf16>
    %162 = vector.extract_strided_slice %86 {offsets = [0, 16], sizes = [16, 8], strides = [1, 1]} : vector<16x32xbf16> to vector<16x8xbf16>
    %cst_50 = arith.constant dense<0.000000e+00> : vector<16x8xf32>
    %163 = tpu.matmul %161, %162, %cst_50 {dimension_numbers = #tpu.dot_dimension_numbers<[1], [0], [0], [1], [0, 0, 1, 1], [], []>} : vector<16x16xbf16>, vector<16x8xbf16>, vector<16x8xf32> -> vector<16x8xf32>
    %c0_51 = arith.constant 0 : index
    %c16 = arith.constant 16 : index
    %164 = vector.load %arg18[%c0_51, %c16] : memref<16x32xf32, #tpu.memory_space<vmem>>, vector<16x8xf32>
    tpu.vector_store %arg18[%c0_51, %c16], %163 {strides = array<i32>} : memref<16x32xf32, #tpu.memory_space<vmem>>, vector<16x8xf32>,
    %165 = vector.extract_strided_slice %45 {offsets = [0, 24], sizes = [16, 8], strides = [1, 1]} : vector<16x32xbf16> to vector<16x8xbf16>
    %166 = vector.extract_strided_slice %84 {offsets = [0, 24], sizes = [16, 8], strides = [1, 1]} : vector<16x32xbf16> to vector<16x8xbf16>
    %cst_52 = arith.constant dense<0.000000e+00> : vector<16x16xf32>
    %167 = tpu.matmul %165, %166, %cst_52 {dimension_numbers = #tpu.dot_dimension_numbers<[1], [1], [0], [0], [0, 0, 1, 0], [], []>} : vector<16x8xbf16>, vector<16x8xbf16>, vector<16x16xf32> -> vector<16x16xf32>
    %cst_53 = arith.constant -1.000000e+30 : f32
    %168 = vector.broadcast %cst_53 : f32 to vector<16x16xf32>
    %169 = arith.select %107, %167, %168 : vector<16x16xi1>, vector<16x16xf32>
    %cst_54 = arith.constant dense<0xFF800000> : vector<16xf32>
    %170 = vector.multi_reduction <maximumf>, %169, %cst_54 [1] : vector<16x16xf32> to vector<16xf32>
    %171 = vector.shape_cast %170 : vector<16xf32> to vector<16x1xf32>
    %172 = vector.broadcast %171 : vector<16x1xf32> to vector<16x16xf32>
    %173 = arith.subf %169, %172 : vector<16x16xf32>
    %174 = math.exp %173 : vector<16x16xf32>
    %cst_55 = arith.constant dense<0.000000e+00> : vector<16xf32>
    %175 = vector.multi_reduction <add>, %174, %cst_55 [1] : vector<16x16xf32> to vector<16xf32>
    %176 = vector.shape_cast %175 : vector<16xf32> to vector<16x1xf32>
    %177 = tpu.reciprocal %176 {approx = true} : vector<16x1xf32> -> vector<16x1xf32>
    %178 = vector.broadcast %177 : vector<16x1xf32> to vector<16x16xf32>
    %179 = arith.mulf %174, %178 : vector<16x16xf32>
    %180 = arith.truncf %179 : vector<16x16xf32> to vector<16x16xbf16>
    %181 = vector.extract_strided_slice %86 {offsets = [0, 24], sizes = [16, 8], strides = [1, 1]} : vector<16x32xbf16> to vector<16x8xbf16>
    %cst_56 = arith.constant dense<0.000000e+00> : vector<16x8xf32>
    %182 = tpu.matmul %180, %181, %cst_56 {dimension_numbers = #tpu.dot_dimension_numbers<[1], [0], [0], [1], [0, 0, 1, 1], [], []>} : vector<16x16xbf16>, vector<16x8xbf16>, vector<16x8xf32> -> vector<16x8xf32>
    %c0_57 = arith.constant 0 : index
    %c24 = arith.constant 24 : index
    %183 = vector.load %arg18[%c0_57, %c24] : memref<16x32xf32, #tpu.memory_space<vmem>>, vector<16x8xf32>
    tpu.vector_store %arg18[%c0_57, %c24], %182 {strides = array<i32>} : memref<16x32xf32, #tpu.memory_space<vmem>>, vector<16x8xf32>,
    %c0_58 = arith.constant 0 : index
    %c0_59 = arith.constant 0 : index
    %184 = vector.load %arg18[%c0_58, %c0_59] : memref<16x32xf32, #tpu.memory_space<vmem>>, vector<16x32xf32>
    %185 = arith.truncf %184 : vector<16x32xf32> to vector<16x32xbf16>
    %c0_60 = arith.constant 0 : index
    %c0_61 = arith.constant 0 : index
    %186 = vector.load %arg9[%c0_60, %c0_61] : memref<32x32xbf16, #tpu.memory_space<vmem>>, vector<32x32xbf16>
    %cst_62 = arith.constant dense<0.000000e+00> : vector<16x32xf32>
    %187 = tpu.matmul %185, %186, %cst_62 {dimension_numbers = #tpu.dot_dimension_numbers<[1], [0], [0], [1], [0, 0, 1, 1], [], []>} : vector<16x32xbf16>, vector<32x32xbf16>, vector<16x32xf32> -> vector<16x32xf32>
    %c0_63 = arith.constant 0 : index
    %c0_64 = arith.constant 0 : index
    %188 = vector.load %arg10[%c0_63, %c0_64] : memref<1x32xf32, #tpu.memory_space<vmem>>, vector<1x32xf32>
    %189 = vector.shape_cast %188 : vector<1x32xf32> to vector<32xf32>
    %190 = vector.shape_cast %189 : vector<32xf32> to vector<1x32xf32>
    %191 = vector.broadcast %190 : vector<1x32xf32> to vector<16x32xf32>
    %192 = arith.addf %187, %191 : vector<16x32xf32>
    %193 = arith.addf %8, %192 : vector<16x32xf32>
    %c0_65 = arith.constant 0 : index
    %c0_66 = arith.constant 0 : index
    %194 = vector.load %arg11[%c0_65, %c0_66] : memref<1x32xf32, #tpu.memory_space<vmem>>, vector<1x32xf32>
    %195 = vector.shape_cast %194 : vector<1x32xf32> to vector<32xf32>
    %c0_67 = arith.constant 0 : index
    %c0_68 = arith.constant 0 : index
    %196 = vector.load %arg12[%c0_67, %c0_68] : memref<1x32xf32, #tpu.memory_space<vmem>>, vector<1x32xf32>
    %197 = vector.shape_cast %196 : vector<1x32xf32> to vector<32xf32>
    %cst_69 = arith.constant dense<0.000000e+00> : vector<16xf32>
    %198 = vector.multi_reduction <add>, %193, %cst_69 [1] : vector<16x32xf32> to vector<16xf32>
    %199 = vector.shape_cast %198 : vector<16xf32> to vector<16x1xf32>
    %cst_70 = arith.constant 3.200000e+01 : f32
    %200 = vector.broadcast %cst_70 : f32 to vector<16x1xf32>
    %201 = arith.divf %199, %200 : vector<16x1xf32>
    %202 = vector.broadcast %201 : vector<16x1xf32> to vector<16x32xf32>
    %203 = arith.subf %193, %202 : vector<16x32xf32>
    %204 = arith.mulf %203, %203 : vector<16x32xf32>
    %cst_71 = arith.constant dense<0.000000e+00> : vector<16xf32>
    %205 = vector.multi_reduction <add>, %204, %cst_71 [1] : vector<16x32xf32> to vector<16xf32>
    %206 = vector.shape_cast %205 : vector<16xf32> to vector<16x1xf32>
    %cst_72 = arith.constant 3.200000e+01 : f32
    %207 = vector.broadcast %cst_72 : f32 to vector<16x1xf32>
    %208 = arith.divf %206, %207 : vector<16x1xf32>
    %cst_73 = arith.constant 9.99999974E-6 : f32
    %209 = vector.broadcast %cst_73 : f32 to vector<16x1xf32>
    %210 = arith.addf %208, %209 : vector<16x1xf32>
    %211 = math.rsqrt %210 : vector<16x1xf32>
    %212 = vector.broadcast %211 : vector<16x1xf32> to vector<16x32xf32>
    %213 = arith.mulf %203, %212 : vector<16x32xf32>
    %214 = vector.shape_cast %195 : vector<32xf32> to vector<1x32xf32>
    %215 = vector.broadcast %214 : vector<1x32xf32> to vector<16x32xf32>
    %216 = arith.mulf %213, %215 : vector<16x32xf32>
    %217 = vector.shape_cast %197 : vector<32xf32> to vector<1x32xf32>
    %218 = vector.broadcast %217 : vector<1x32xf32> to vector<16x32xf32>
    %219 = arith.addf %216, %218 : vector<16x32xf32>
    %220 = arith.truncf %219 : vector<16x32xf32> to vector<16x32xbf16>
    %c0_74 = arith.constant 0 : index
    %c0_75 = arith.constant 0 : index
    %221 = vector.load %arg13[%c0_74, %c0_75] : memref<32x128xbf16, #tpu.memory_space<vmem>>, vector<32x128xbf16>
    %cst_76 = arith.constant dense<0.000000e+00> : vector<16x128xf32>
    %222 = tpu.matmul %220, %221, %cst_76 {dimension_numbers = #tpu.dot_dimension_numbers<[1], [0], [0], [1], [0, 0, 1, 1], [], []>} : vector<16x32xbf16>, vector<32x128xbf16>, vector<16x128xf32> -> vector<16x128xf32>
    %c0_77 = arith.constant 0 : index
    %c0_78 = arith.constant 0 : index
    %223 = vector.load %arg14[%c0_77, %c0_78] : memref<1x128xf32, #tpu.memory_space<vmem>>, vector<1x128xf32>
    %224 = vector.shape_cast %223 : vector<1x128xf32> to vector<128xf32>
    %225 = vector.shape_cast %224 : vector<128xf32> to vector<1x128xf32>
    %226 = vector.broadcast %225 : vector<1x128xf32> to vector<16x128xf32>
    %227 = arith.addf %222, %226 : vector<16x128xf32>
    %cst_79 = arith.constant 5.000000e-01 : f32
    %228 = vector.broadcast %cst_79 : f32 to vector<16x128xf32>
    %229 = arith.mulf %228, %227 : vector<16x128xf32>
    %230 = arith.mulf %227, %227 : vector<16x128xf32>
    %231 = arith.mulf %230, %227 : vector<16x128xf32>
    %cst_80 = arith.constant 4.471500e-02 : f32
    %232 = vector.broadcast %cst_80 : f32 to vector<16x128xf32>
    %233 = arith.mulf %232, %231 : vector<16x128xf32>
    %234 = arith.addf %227, %233 : vector<16x128xf32>
    %cst_81 = arith.constant 0.797884583 : f32
    %235 = vector.broadcast %cst_81 : f32 to vector<16x128xf32>
    %236 = arith.mulf %235, %234 : vector<16x128xf32>
    %237 = math.tanh %236 : vector<16x128xf32>
    %cst_82 = arith.constant 1.000000e+00 : f32
    %238 = vector.broadcast %cst_82 : f32 to vector<16x128xf32>
    %239 = arith.addf %238, %237 : vector<16x128xf32>
    %240 = arith.mulf %229, %239 : vector<16x128xf32>
    %241 = arith.truncf %240 : vector<16x128xf32> to vector<16x128xbf16>
    %c0_83 = arith.constant 0 : index
    %c0_84 = arith.constant 0 : index
    %242 = vector.load %arg15[%c0_83, %c0_84] : memref<128x32xbf16, #tpu.memory_space<vmem>>, vector<128x32xbf16>
    %cst_85 = arith.constant dense<0.000000e+00> : vector<16x32xf32>
    %243 = tpu.matmul %241, %242, %cst_85 {dimension_numbers = #tpu.dot_dimension_numbers<[1], [0], [0], [1], [0, 0, 1, 1], [], []>} : vector<16x128xbf16>, vector<128x32xbf16>, vector<16x32xf32> -> vector<16x32xf32>
    %c0_86 = arith.constant 0 : index
    %c0_87 = arith.constant 0 : index
    %244 = vector.load %arg16[%c0_86, %c0_87] : memref<1x32xf32, #tpu.memory_space<vmem>>, vector<1x32xf32>
    %245 = vector.shape_cast %244 : vector<1x32xf32> to vector<32xf32>
    %246 = vector.shape_cast %245 : vector<32xf32> to vector<1x32xf32>
    %247 = vector.broadcast %246 : vector<1x32xf32> to vector<16x32xf32>
    %248 = arith.addf %243, %247 : vector<16x32xf32>
    %249 = arith.addf %193, %248 : vector<16x32xf32>
    %c0_88 = arith.constant 0 : index
    %c0_89 = arith.constant 0 : index
    %c0_90 = arith.constant 0 : index
    %250 = vector.load %arg17[%c0_88, %c0_89, %c0_90] : memref<1x16x32xf32, #tpu.memory_space<vmem>>, vector<1x16x32xf32>
    %251 = vector.shape_cast %250 : vector<1x16x32xf32> to vector<16x32xf32>
    %252 = vector.shape_cast %249 : vector<16x32xf32> to vector<1x16x32xf32>
    tpu.vector_store %arg17[%c0_88, %c0_89, %c0_90], %252 {strides = array<i32>} : memref<1x16x32xf32, #tpu.memory_space<vmem>>, vector<1x16x32xf32>,
    return
  }
  func.func @transform_0(%arg0: i32, %arg1: i32) -> (i32, i32, i32) {
    %c0_i32 = arith.constant 0 : i32
    %c0_i32_0 = arith.constant 0 : i32
    %c0_i32_1 = arith.constant 0 : i32
    return %arg0, %c0_i32, %c0_i32_0 : i32, i32, i32
  }
  func.func @transform_1(%arg0: i32, %arg1: i32) -> (i32, i32) {
    %c0_i32 = arith.constant 0 : i32
    %c0_i32_0 = arith.constant 0 : i32
    %c0_i32_1 = arith.constant 0 : i32
    return %c0_i32, %c0_i32_0 : i32, i32
  }
  func.func @transform_2(%arg0: i32, %arg1: i32) -> (i32, i32) {
    %c0_i32 = arith.constant 0 : i32
    %c0_i32_0 = arith.constant 0 : i32
    %c0_i32_1 = arith.constant 0 : i32
    return %c0_i32, %c0_i32_0 : i32, i32
  }
  func.func @transform_3(%arg0: i32, %arg1: i32) -> (i32, i32) {
    %c0_i32 = arith.constant 0 : i32
    %c0_i32_0 = arith.constant 0 : i32
    %c0_i32_1 = arith.constant 0 : i32
    return %c0_i32, %c0_i32_0 : i32, i32
  }
  func.func @transform_4(%arg0: i32, %arg1: i32) -> (i32, i32) {
    %c0_i32 = arith.constant 0 : i32
    %c0_i32_0 = arith.constant 0 : i32
    %c0_i32_1 = arith.constant 0 : i32
    return %c0_i32, %c0_i32_0 : i32, i32
  }
  func.func @transform_5(%arg0: i32, %arg1: i32) -> (i32, i32) {
    %c0_i32 = arith.constant 0 : i32
    %c0_i32_0 = arith.constant 0 : i32
    %c0_i32_1 = arith.constant 0 : i32
    return %c0_i32, %c0_i32_0 : i32, i32
  }
  func.func @transform_6(%arg0: i32, %arg1: i32) -> (i32, i32) {
    %c0_i32 = arith.constant 0 : i32
    %c0_i32_0 = arith.constant 0 : i32
    %c0_i32_1 = arith.constant 0 : i32
    return %c0_i32, %c0_i32_0 : i32, i32
  }
  func.func @transform_7(%arg0: i32, %arg1: i32) -> (i32, i32) {
    %c0_i32 = arith.constant 0 : i32
    %c0_i32_0 = arith.constant 0 : i32
    %c0_i32_1 = arith.constant 0 : i32
    return %c0_i32, %c0_i32_0 : i32, i32
  }
  func.func @transform_8(%arg0: i32, %arg1: i32) -> (i32, i32) {
    %c0_i32 = arith.constant 0 : i32
    %c0_i32_0 = arith.constant 0 : i32
    %c0_i32_1 = arith.constant 0 : i32
    return %c0_i32, %c0_i32_0 : i32, i32
  }
  func.func @transform_9(%arg0: i32, %arg1: i32) -> (i32, i32) {
    %c0_i32 = arith.constant 0 : i32
    %c0_i32_0 = arith.constant 0 : i32
    %c0_i32_1 = arith.constant 0 : i32
    return %c0_i32, %c0_i32_0 : i32, i32
  }
  func.func @transform_10(%arg0: i32, %arg1: i32) -> (i32, i32) {
    %c0_i32 = arith.constant 0 : i32
    %c0_i32_0 = arith.constant 0 : i32
    %c0_i32_1 = arith.constant 0 : i32
    return %c0_i32, %c0_i32_0 : i32, i32
  }
  func.func @transform_11(%arg0: i32, %arg1: i32) -> (i32, i32) {
    %c0_i32 = arith.constant 0 : i32
    %c0_i32_0 = arith.constant 0 : i32
    %c0_i32_1 = arith.constant 0 : i32
    return %c0_i32, %c0_i32_0 : i32, i32
  }
  func.func @transform_12(%arg0: i32, %arg1: i32) -> (i32, i32) {
    %c0_i32 = arith.constant 0 : i32
    %c0_i32_0 = arith.constant 0 : i32
    %c0_i32_1 = arith.constant 0 : i32
    return %c0_i32, %c0_i32_0 : i32, i32
  }
  func.func @transform_13(%arg0: i32, %arg1: i32) -> (i32, i32) {
    %c0_i32 = arith.constant 0 : i32
    %c0_i32_0 = arith.constant 0 : i32
    %c0_i32_1 = arith.constant 0 : i32
    return %c0_i32, %c0_i32_0 : i32, i32
  }
  func.func @transform_14(%arg0: i32, %arg1: i32) -> (i32, i32) {
    %c0_i32 = arith.constant 0 : i32
    %c0_i32_0 = arith.constant 0 : i32
    %c0_i32_1 = arith.constant 0 : i32
    return %c0_i32, %c0_i32_0 : i32, i32
  }
  func.func @transform_15(%arg0: i32, %arg1: i32) -> (i32, i32, i32) {
    %c0_i32 = arith.constant 0 : i32
    %c0_i32_0 = arith.constant 0 : i32
    return %arg0, %arg1, %c0_i32 : i32, i32, i32
  }
}

</mosaic_0001>

<llo_original>
// kernel: tpu_custom_call.1
$region0: #{tpu_custom_call.1}
  #allocation0 [shape = 'u32[]', space=smem, size = 0x4, offset = 0x4, fixed_abs, tag = 'smem constant byte address 0x4 - core index']
  #allocation1 [shape = 'u32[144,128]{1,0:T(1,128)}', space=vmem, size = 0x12000, scoped, tag = 'internal scratch']
  #allocation2 [shape = 'f32[16,32]{1,0:T(8,128)}', space=vmem, size = 0x2000, scoped, tag = 'scratch operand']
  %s0 = inlined_call_operand.vmem [shape: f32[2,16,32], index: 0, kind: input, shape index: {}]
  %s1 = inlined_call_operand.vmem [shape: f32[1,32], index: 1, kind: input, shape index: {}]
  %s2 = inlined_call_operand.vmem [shape: f32[1,32], index: 2, kind: input, shape index: {}]
  %s3 = inlined_call_operand.vmem [shape: bf16[32,32], index: 3, kind: input, shape index: {}]
  %s4 = inlined_call_operand.vmem [shape: f32[1,32], index: 4, kind: input, shape index: {}]
  %s5 = inlined_call_operand.vmem [shape: bf16[32,64], index: 5, kind: input, shape index: {}]
  %s6 = inlined_call_operand.vmem [shape: f32[1,64], index: 6, kind: input, shape index: {}]
  %s7 = inlined_call_operand.vmem [shape: bf16[32,32], index: 7, kind: input, shape index: {}]
  %s8 = inlined_call_operand.vmem [shape: f32[1,32], index: 8, kind: input, shape index: {}]
  %s9 = inlined_call_operand.vmem [shape: f32[1,32], index: 9, kind: input, shape index: {}]
  %s10 = inlined_call_operand.vmem [shape: f32[1,32], index: 10, kind: input, shape index: {}]
  %s11 = inlined_call_operand.hbm [shape: bf16[32,128], index: 11, kind: input, shape index: {}]
  %s12 = inlined_call_operand.hbm [shape: f32[1,128], index: 12, kind: input, shape index: {}]
  %s13 = inlined_call_operand.vmem [shape: bf16[128,32], index: 13, kind: input, shape index: {}]
  %s14 = inlined_call_operand.vmem [shape: f32[1,32], index: 14, kind: input, shape index: {}]
  %s15 = inlined_call_operand.hbm [shape: f32[2,16,32], index: 15, kind: output, shape index: {}]
  %s16 = sld [smem:[#allocation0]]
  $region101: #{tpu_custom_call.1} parent=0
    _
  %s18 = ssub.s32 1, %s16
  %s19 = scalar_select 0, %s18, %s16
  $region1: #{tpu_custom_call.1} parent=0
    #allocation3 [shape = 'u8[8192]{0}', space=vmem, size = 0x2000, scoped, tag = 'input window, operand 11, single buffered']
    #allocation4 [shape = 's32[2]{0}', space=sflag, size = 0x8, scoped, tag = 'scoped memory for tpu_custom_call.1']
    #allocation5 [shape = 's32[2]{0}', space=sflag, size = 0x8, scoped, tag = 'scoped memory for tpu_custom_call.1']
    #allocation6 [shape = 'u8[512]{0}', space=vmem, size = 0x400, scoped, tag = 'input window, operand 12, single buffered']
    #allocation7 [shape = 's32[1]{0}', space=sflag, size = 0x4, scoped, tag = 'scoped memory for tpu_custom_call.1']
    #allocation8 [shape = 'u8[16384]{0}', space=vmem, size = 0x4000, scoped, tag = 'output window, operand 0']
    %20 = vsyncpa [#allocation4], 0
    %21 = vsyncpa [#allocation7], 0
    %22 = vsyncpa [#allocation5], 0
    %s23 = scalar_lea.sflag [#allocation5], 1
    %24 = vsyncpa %s23, 0
    loop: start=0, step=1, limit=4
    $region2: #{tpu_custom_call.1} parent=1 // loop_pre_header
      _
    $region3: #{tpu_custom_call.1} parent=1 // loop_header
      %s26 = sphi 0, %s30
      %p27 = scmp.ge.s32.totalorder %s26, 4
      %s33 = sphi 0, %s45
      %s34 = sphi 0, %s41
      %s35 = sphi 0, %s33
      %s36 = sphi 0, %s34
      %s37 = sphi 0, %s35
      %s38 = sphi 0, %s36
      %s48 = sphi 0, %s50
      %s51 = sphi 0, %s48
      %s52 = sphi 0, %s51
      %s68 = sphi 0, %s52
      %s72 = sphi 0, %s72
      %s74 = sphi 0, %s72
      %s75 = sphi 0, %s74
      %s89 = sphi 0, %s75
      %s93 = sphi 0, %s93
      %s95 = sphi 0, %s93
      %s96 = sphi 0, %s95
      %s110 = sphi 0, %s96
      %s114 = sphi 0, %s114
      %s116 = sphi 0, %s114
      %s117 = sphi 0, %s116
      %s131 = sphi 0, %s117
      %s135 = sphi 0, %s135
      %s137 = sphi 0, %s135
      %s138 = sphi 0, %s137
      %s152 = sphi 0, %s138
      %s156 = sphi 0, %s156
      %s158 = sphi 0, %s156
      %s159 = sphi 0, %s158
      %s173 = sphi 0, %s159
      %s177 = sphi 0, %s177
      %s179 = sphi 0, %s177
      %s180 = sphi 0, %s179
      %s194 = sphi 0, %s180
      %s198 = sphi 0, %s198
      %s200 = sphi 0, %s198
      %s201 = sphi 0, %s200
      %s215 = sphi 0, %s201
      %s219 = sphi 0, %s219
      %s221 = sphi 0, %s219
      %s222 = sphi 0, %s221
      %s236 = sphi 0, %s222
      %s240 = sphi 0, %s240
      %s242 = sphi 0, %s240
      %s243 = sphi 0, %s242
      %s257 = sphi 0, %s243
      %s261 = sphi 0, %s261
      %s263 = sphi 0, %s261
      %s264 = sphi 0, %s263
      %s278 = sphi 0, %s264
      %s282 = sphi 0, %s282
      %s284 = sphi 0, %s282
      %s285 = sphi 0, %s284
      %s299 = sphi 0, %s285
      %s303 = sphi 0, %s303
      %s305 = sphi 0, %s303
      %s306 = sphi 0, %s305
      %s320 = sphi 0, %s306
      %s324 = sphi 0, %s324
      %s326 = sphi 0, %s324
      %s327 = sphi 0, %s326
      %s341 = sphi 0, %s327
      %s345 = sphi 0, %s345
      %s347 = sphi 0, %s345
      %s348 = sphi 0, %s347
      %s362 = sphi 0, %s348
      %s370 = sphi 0, %s372
      %s373 = sphi 0, %s370
      %s374 = sphi 0, %s373
      %s390 = sphi 0, %s374
    $region4: #{tpu_custom_call.1} parent=1 // loop_header_branch
      %29 = sbr.rel (%p27) target = $region8
    $region5: #{tpu_custom_call.1} parent=1 // loop_body
      %s31 = ssub.s32 %s26, 1
      %s32 = ssub.s32 %s26, 2
      %s39 = sadd.s32 1, %s34
      %p40 = scmp.ge.s32.totalorder %s39, 1
      %s41 = scalar_select %p40, 0, %s39
      %s42 = sadd.s32 1, %s33
      %s43 = scalar_select %p40, %s42, %s33
      %p44 = scmp.ge.s32.totalorder %s43, 2
      %s45 = scalar_select %p44, 0, %s43
      %s46 = ssub.s32 %s33, %s45
      %p47 = scmp.eq.s32.totalorder %s46, 0
      %s49 = sadd.s32 %s48, 1
      %s50 = scalar_select %p47, %s48, %s49
      %p53 = pneg %p47
      %p54 = scmp.eq.s32.totalorder %s26, 1
      %p55 = por %p53, %p54
      %p56 = scmp.ne.s32.totalorder %s48, %s51
      %p57 = scmp.eq.s32.totalorder %s26, 0
      %p58 = por %p56, %p57
      %p59 = scmp.ne.s32.totalorder %s48, %s51
      %p60 = scmp.eq.s32.totalorder %s31, 1
      %p61 = por %p59, %p60
      %p62 = scmp.ne.s32.totalorder %s51, %s52
      %p63 = scmp.eq.s32.totalorder %s31, 0
      %p64 = por %p62, %p63
      %p65 = scmp.ne.s32.totalorder %s51, %s52
      %p66 = scmp.eq.s32.totalorder %s32, 1
      %p67 = por %p65, %p66
      %p69 = scmp.ne.s32.totalorder %s52, %s68
      %p70 = scmp.eq.s32.totalorder %s32, 0
      %p71 = por %p69, %p70
      %s73 = sadd.s32 %s72, 1
      %p76 = scmp.eq.s32.totalorder %s26, 1
      %p77 = scmp.ne.s32.totalorder %s72, %s74
      %p78 = scmp.eq.s32.totalorder %s26, 0
      %p79 = por %p77, %p78
      %p80 = scmp.ne.s32.totalorder %s72, %s74
      %p81 = scmp.eq.s32.totalorder %s31, 1
      %p82 = por %p80, %p81
      %p83 = scmp.ne.s32.totalorder %s74, %s75
      %p84 = scmp.eq.s32.totalorder %s31, 0
      %p85 = por %p83, %p84
      %p86 = scmp.ne.s32.totalorder %s74, %s75
      %p87 = scmp.eq.s32.totalorder %s32, 1
      %p88 = por %p86, %p87
      %p90 = scmp.ne.s32.totalorder %s75, %s89
      %p91 = scmp.eq.s32.totalorder %s32, 0
      %p92 = por %p90, %p91
      %s94 = sadd.s32 %s93, 1
      %p97 = scmp.eq.s32.totalorder %s26, 1
      %p98 = scmp.ne.s32.totalorder %s93, %s95
      %p99 = scmp.eq.s32.totalorder %s26, 0
      %p100 = por %p98, %p99
      %p101 = scmp.ne.s32.totalorder %s93, %s95
      %p102 = scmp.eq.s32.totalorder %s31, 1
      %p103 = por %p101, %p102
      %p104 = scmp.ne.s32.totalorder %s95, %s96
      %p105 = scmp.eq.s32.totalorder %s31, 0
      %p106 = por %p104, %p105
      %p107 = scmp.ne.s32.totalorder %s95, %s96
      %p108 = scmp.eq.s32.totalorder %s32, 1
      %p109 = por %p107, %p108
      %p111 = scmp.ne.s32.totalorder %s96, %s110
      %p112 = scmp.eq.s32.totalorder %s32, 0
      %p113 = por %p111, %p112
      %s115 = sadd.s32 %s114, 1
      %p118 = scmp.eq.s32.totalorder %s26, 1
      %p119 = scmp.ne.s32.totalorder %s114, %s116
      %p120 = scmp.eq.s32.totalorder %s26, 0
      %p121 = por %p119, %p120
      %p122 = scmp.ne.s32.totalorder %s114, %s116
      %p123 = scmp.eq.s32.totalorder %s31, 1
      %p124 = por %p122, %p123
      %p125 = scmp.ne.s32.totalorder %s116, %s117
      %p126 = scmp.eq.s32.totalorder %s31, 0
      %p127 = por %p125, %p126
      %p128 = scmp.ne.s32.totalorder %s116, %s117
      %p129 = scmp.eq.s32.totalorder %s32, 1
      %p130 = por %p128, %p129
      %p132 = scmp.ne.s32.totalorder %s117, %s131
      %p133 = scmp.eq.s32.totalorder %s32, 0
      %p134 = por %p132, %p133
      %s136 = sadd.s32 %s135, 1
      %p139 = scmp.eq.s32.totalorder %s26, 1
      %p140 = scmp.ne.s32.totalorder %s135, %s137
      %p141 = scmp.eq.s32.totalorder %s26, 0
      %p142 = por %p140, %p141
      %p143 = scmp.ne.s32.totalorder %s135, %s137
      %p144 = scmp.eq.s32.totalorder %s31, 1
      %p145 = por %p143, %p144
      %p146 = scmp.ne.s32.totalorder %s137, %s138
      %p147 = scmp.eq.s32.totalorder %s31, 0
      %p148 = por %p146, %p147
      %p149 = scmp.ne.s32.totalorder %s137, %s138
      %p150 = scmp.eq.s32.totalorder %s32, 1
      %p151 = por %p149, %p150
      %p153 = scmp.ne.s32.totalorder %s138, %s152
      %p154 = scmp.eq.s32.totalorder %s32, 0
      %p155 = por %p153, %p154
      %s157 = sadd.s32 %s156, 1
      %p160 = scmp.eq.s32.totalorder %s26, 1
      %p161 = scmp.ne.s32.totalorder %s156, %s158
      %p162 = scmp.eq.s32.totalorder %s26, 0
      %p163 = por %p161, %p162
      %p164 = scmp.ne.s32.totalorder %s156, %s158
      %p165 = scmp.eq.s32.totalorder %s31, 1
      %p166 = por %p164, %p165
      %p167 = scmp.ne.s32.totalorder %s158, %s159
      %p168 = scmp.eq.s32.totalorder %s31, 0
      %p169 = por %p167, %p168
      %p170 = scmp.ne.s32.totalorder %s158, %s159
      %p171 = scmp.eq.s32.totalorder %s32, 1
      %p172 = por %p170, %p171
      %p174 = scmp.ne.s32.totalorder %s159, %s173
      %p175 = scmp.eq.s32.totalorder %s32, 0
      %p176 = por %p174, %p175
      %s178 = sadd.s32 %s177, 1
      %p181 = scmp.eq.s32.totalorder %s26, 1
      %p182 = scmp.ne.s32.totalorder %s177, %s179
      %p183 = scmp.eq.s32.totalorder %s26, 0
      %p184 = por %p182, %p183
      %p185 = scmp.ne.s32.totalorder %s177, %s179
      %p186 = scmp.eq.s32.totalorder %s31, 1
      %p187 = por %p185, %p186
      %p188 = scmp.ne.s32.totalorder %s179, %s180
      %p189 = scmp.eq.s32.totalorder %s31, 0
      %p190 = por %p188, %p189
      %p191 = scmp.ne.s32.totalorder %s179, %s180
      %p192 = scmp.eq.s32.totalorder %s32, 1
      %p193 = por %p191, %p192
      %p195 = scmp.ne.s32.totalorder %s180, %s194
      %p196 = scmp.eq.s32.totalorder %s32, 0
      %p197 = por %p195, %p196
      %s199 = sadd.s32 %s198, 1
      %p202 = scmp.eq.s32.totalorder %s26, 1
      %p203 = scmp.ne.s32.totalorder %s198, %s200
      %p204 = scmp.eq.s32.totalorder %s26, 0
      %p205 = por %p203, %p204
      %p206 = scmp.ne.s32.totalorder %s198, %s200
      %p207 = scmp.eq.s32.totalorder %s31, 1
      %p208 = por %p206, %p207
      %p209 = scmp.ne.s32.totalorder %s200, %s201
      %p210 = scmp.eq.s32.totalorder %s31, 0
      %p211 = por %p209, %p210
      %p212 = scmp.ne.s32.totalorder %s200, %s201
      %p213 = scmp.eq.s32.totalorder %s32, 1
      %p214 = por %p212, %p213
      %p216 = scmp.ne.s32.totalorder %s201, %s215
      %p217 = scmp.eq.s32.totalorder %s32, 0
      %p218 = por %p216, %p217
      %s220 = sadd.s32 %s219, 1
      %p223 = scmp.eq.s32.totalorder %s26, 1
      %p224 = scmp.ne.s32.totalorder %s219, %s221
      %p225 = scmp.eq.s32.totalorder %s26, 0
      %p226 = por %p224, %p225
      %p227 = scmp.ne.s32.totalorder %s219, %s221
      %p228 = scmp.eq.s32.totalorder %s31, 1
      %p229 = por %p227, %p228
      %p230 = scmp.ne.s32.totalorder %s221, %s222
      %p231 = scmp.eq.s32.totalorder %s31, 0
      %p232 = por %p230, %p231
      %p233 = scmp.ne.s32.totalorder %s221, %s222
      %p234 = scmp.eq.s32.totalorder %s32, 1
      %p235 = por %p233, %p234
      %p237 = scmp.ne.s32.totalorder %s222, %s236
      %p238 = scmp.eq.s32.totalorder %s32, 0
      %p239 = por %p237, %p238
      %s241 = sadd.s32 %s240, 1
      %p244 = scmp.eq.s32.totalorder %s26, 1
      %p245 = scmp.ne.s32.totalorder %s240, %s242
      %p246 = scmp.eq.s32.totalorder %s26, 0
      %p247 = por %p245, %p246
      %p248 = scmp.ne.s32.totalorder %s240, %s242
      %p249 = scmp.eq.s32.totalorder %s31, 1
      %p250 = por %p248, %p249
      %p251 = scmp.ne.s32.totalorder %s242, %s243
      %p252 = scmp.eq.s32.totalorder %s31, 0
      %p253 = por %p251, %p252
      %p254 = scmp.ne.s32.totalorder %s242, %s243
      %p255 = scmp.eq.s32.totalorder %s32, 1
      %p256 = por %p254, %p255
      %p258 = scmp.ne.s32.totalorder %s243, %s257
      %p259 = scmp.eq.s32.totalorder %s32, 0
      %p260 = por %p258, %p259
      %s262 = sadd.s32 %s261, 1
      %p265 = scmp.eq.s32.totalorder %s26, 1
      %p266 = scmp.ne.s32.totalorder %s261, %s263
      %p267 = scmp.eq.s32.totalorder %s26, 0
      %p268 = por %p266, %p267
      %p269 = scmp.ne.s32.totalorder %s261, %s263
      %p270 = scmp.eq.s32.totalorder %s31, 1
      %p271 = por %p269, %p270
      %p272 = scmp.ne.s32.totalorder %s263, %s264
      %p273 = scmp.eq.s32.totalorder %s31, 0
      %p274 = por %p272, %p273
      %p275 = scmp.ne.s32.totalorder %s263, %s264
      %p276 = scmp.eq.s32.totalorder %s32, 1
      %p277 = por %p275, %p276
      %p279 = scmp.ne.s32.totalorder %s264, %s278
      %p280 = scmp.eq.s32.totalorder %s32, 0
      %p281 = por %p279, %p280
      %s283 = sadd.s32 %s282, 1
      %p286 = scmp.eq.s32.totalorder %s26, 1
      %p287 = scmp.ne.s32.totalorder %s282, %s284
      %p288 = scmp.eq.s32.totalorder %s26, 0
      %p289 = por %p287, %p288
      %p290 = scmp.ne.s32.totalorder %s282, %s284
      %p291 = scmp.eq.s32.totalorder %s31, 1
      %p292 = por %p290, %p291
      %p293 = scmp.ne.s32.totalorder %s284, %s285
      %p294 = scmp.eq.s32.totalorder %s31, 0
      %p295 = por %p293, %p294
      %p296 = scmp.ne.s32.totalorder %s284, %s285
      %p297 = scmp.eq.s32.totalorder %s32, 1
      %p298 = por %p296, %p297
      %p300 = scmp.ne.s32.totalorder %s285, %s299
      %p301 = scmp.eq.s32.totalorder %s32, 0
      %p302 = por %p300, %p301
      %s304 = sadd.s32 %s303, 1
      %p307 = scmp.eq.s32.totalorder %s26, 1
      %p308 = scmp.ne.s32.totalorder %s303, %s305
      %p309 = scmp.eq.s32.totalorder %s26, 0
      %p310 = por %p308, %p309
      %p311 = scmp.ne.s32.totalorder %s303, %s305
      %p312 = scmp.eq.s32.totalorder %s31, 1
      %p313 = por %p311, %p312
      %p314 = scmp.ne.s32.totalorder %s305, %s306
      %p315 = scmp.eq.s32.totalorder %s31, 0
      %p316 = por %p314, %p315
      %p317 = scmp.ne.s32.totalorder %s305, %s306
      %p318 = scmp.eq.s32.totalorder %s32, 1
      %p319 = por %p317, %p318
      %p321 = scmp.ne.s32.totalorder %s306, %s320
      %p322 = scmp.eq.s32.totalorder %s32, 0
      %p323 = por %p321, %p322
      %s325 = sadd.s32 %s324, 1
      %p328 = scmp.eq.s32.totalorder %s26, 1
      %p329 = scmp.ne.s32.totalorder %s324, %s326
      %p330 = scmp.eq.s32.totalorder %s26, 0
      %p331 = por %p329, %p330
      %p332 = scmp.ne.s32.totalorder %s324, %s326
      %p333 = scmp.eq.s32.totalorder %s31, 1
      %p334 = por %p332, %p333
      %p335 = scmp.ne.s32.totalorder %s326, %s327
      %p336 = scmp.eq.s32.totalorder %s31, 0
      %p337 = por %p335, %p336
      %p338 = scmp.ne.s32.totalorder %s326, %s327
      %p339 = scmp.eq.s32.totalorder %s32, 1
      %p340 = por %p338, %p339
      %p342 = scmp.ne.s32.totalorder %s327, %s341
      %p343 = scmp.eq.s32.totalorder %s32, 0
      %p344 = por %p342, %p343
      %s346 = sadd.s32 %s345, 1
      %p349 = scmp.eq.s32.totalorder %s26, 1
      %p350 = scmp.ne.s32.totalorder %s345, %s347
      %p351 = scmp.eq.s32.totalorder %s26, 0
      %p352 = por %p350, %p351
      %p353 = scmp.ne.s32.totalorder %s345, %s347
      %p354 = scmp.eq.s32.totalorder %s31, 1
      %p355 = por %p353, %p354
      %p356 = scmp.ne.s32.totalorder %s347, %s348
      %p357 = scmp.eq.s32.totalorder %s31, 0
      %p358 = por %p356, %p357
      %p359 = scmp.ne.s32.totalorder %s347, %s348
      %p360 = scmp.eq.s32.totalorder %s32, 1
      %p361 = por %p359, %p360
      %p363 = scmp.ne.s32.totalorder %s348, %s362
      %p364 = scmp.eq.s32.totalorder %s32, 0
      %p365 = por %p363, %p364
      %s366 = ssub.s32 %s33, %s45
      %s367 = ssub.s32 %s34, %s41
      %s368 = sor.u32 %s366, %s367
      %p369 = scmp.eq.s32.totalorder %s368, 0
      %s371 = sadd.s32 %s370, 1
      %s372 = scalar_select %p369, %s370, %s371
      %p375 = pneg %p369
      %p376 = scmp.eq.s32.totalorder %s26, 1
      %p377 = por %p375, %p376
      %p378 = scmp.ne.s32.totalorder %s370, %s373
      %p379 = scmp.eq.s32.totalorder %s26, 0
      %p380 = por %p378, %p379
      %p381 = scmp.ne.s32.totalorder %s370, %s373
      %p382 = scmp.eq.s32.totalorder %s31, 1
      %p383 = por %p381, %p382
      %p384 = scmp.ne.s32.totalorder %s373, %s374
      %p385 = scmp.eq.s32.totalorder %s31, 0
      %p386 = por %p384, %p385
      %p387 = scmp.ne.s32.totalorder %s373, %s374
      %p388 = scmp.eq.s32.totalorder %s32, 1
      %p389 = por %p387, %p388
      %p391 = scmp.ne.s32.totalorder %s374, %s390
      %p392 = scmp.eq.s32.totalorder %s32, 0
      %p393 = por %p391, %p392
      %p394 = scmp.le.s32.totalorder 1, %s26
      %p395 = scmp.lt.s32.totalorder %s26, 3
      %p396 = pnand %p394, %p395
      %p397 = pneg %p396
      // Predicated region
      $region9: #{tpu_custom_call.1} parent=5 // pred_check
        _
      $region10: #{tpu_custom_call.1} parent=5 // pred_check_branch
        %399 = sbr.rel (%p396) target = $region12
      $region11: #{tpu_custom_call.1} parent=5 // pred_region
        %s400 = ssub.s32 %s26, 1
        // Predicated region
        $region13: #{tpu_custom_call.1} parent=11 // pred_check
          %p401 = pneg %p85
        $region14: #{tpu_custom_call.1} parent=11 // pred_check_branch
          %403 = sbr.rel (%p401) target = $region16
        $region15: #{tpu_custom_call.1} parent=11 // pred_region
          _
        $region16: #{tpu_custom_call.1} parent=11 // pred_fallthru
          _
        // Predicated region
        $region17: #{tpu_custom_call.1} parent=11 // pred_check
          %p404 = pneg %p106
        $region18: #{tpu_custom_call.1} parent=11 // pred_check_branch
          %406 = sbr.rel (%p404) target = $region20
        $region19: #{tpu_custom_call.1} parent=11 // pred_region
          _
        $region20: #{tpu_custom_call.1} parent=11 // pred_fallthru
          _
        // Predicated region
        $region21: #{tpu_custom_call.1} parent=11 // pred_check
          %p407 = pneg %p127
        $region22: #{tpu_custom_call.1} parent=11 // pred_check_branch
          %409 = sbr.rel (%p407) target = $region24
        $region23: #{tpu_custom_call.1} parent=11 // pred_region
          _
        $region24: #{tpu_custom_call.1} parent=11 // pred_fallthru
          _
        // Predicated region
        $region25: #{tpu_custom_call.1} parent=11 // pred_check
          %p410 = pneg %p148
        $region26: #{tpu_custom_call.1} parent=11 // pred_check_branch
          %412 = sbr.rel (%p410) target = $region28
        $region27: #{tpu_custom_call.1} parent=11 // pred_region
          _
        $region28: #{tpu_custom_call.1} parent=11 // pred_fallthru
          _
        // Predicated region
        $region29: #{tpu_custom_call.1} parent=11 // pred_check
          %p413 = pneg %p169
        $region30: #{tpu_custom_call.1} parent=11 // pred_check_branch
          %415 = sbr.rel (%p413) target = $region32
        $region31: #{tpu_custom_call.1} parent=11 // pred_region
          _
        $region32: #{tpu_custom_call.1} parent=11 // pred_fallthru
          _
        // Predicated region
        $region33: #{tpu_custom_call.1} parent=11 // pred_check
          %p416 = pneg %p190
        $region34: #{tpu_custom_call.1} parent=11 // pred_check_branch
          %418 = sbr.rel (%p416) target = $region36
        $region35: #{tpu_custom_call.1} parent=11 // pred_region
          _
        $region36: #{tpu_custom_call.1} parent=11 // pred_fallthru
          _
        // Predicated region
        $region37: #{tpu_custom_call.1} parent=11 // pred_check
          %p419 = pneg %p211
        $region38: #{tpu_custom_call.1} parent=11 // pred_check_branch
          %421 = sbr.rel (%p419) target = $region40
        $region39: #{tpu_custom_call.1} parent=11 // pred_region
          _
        $region40: #{tpu_custom_call.1} parent=11 // pred_fallthru
          _
        // Predicated region
        $region41: #{tpu_custom_call.1} parent=11 // pred_check
          %p422 = pneg %p232
        $region42: #{tpu_custom_call.1} parent=11 // pred_check_branch
          %424 = sbr.rel (%p422) target = $region44
        $region43: #{tpu_custom_call.1} parent=11 // pred_region
          _
        $region44: #{tpu_custom_call.1} parent=11 // pred_fallthru
          _
        // Predicated region
        $region45: #{tpu_custom_call.1} parent=11 // pred_check
          %p425 = pneg %p253
        $region46: #{tpu_custom_call.1} parent=11 // pred_check_branch
          %427 = sbr.rel (%p425) target = $region48
        $region47: #{tpu_custom_call.1} parent=11 // pred_region
          _
        $region48: #{tpu_custom_call.1} parent=11 // pred_fallthru
          _
        // Predicated region
        $region49: #{tpu_custom_call.1} parent=11 // pred_check
          %p428 = pneg %p274
        $region50: #{tpu_custom_call.1} parent=11 // pred_check_branch
          %430 = sbr.rel (%p428) target = $region52
        $region51: #{tpu_custom_call.1} parent=11 // pred_region
          _
        $region52: #{tpu_custom_call.1} parent=11 // pred_fallthru
          _
        // Predicated region
        $region53: #{tpu_custom_call.1} parent=11 // pred_check
          %p431 = pneg %p295
        $region54: #{tpu_custom_call.1} parent=11 // pred_check_branch
          %433 = sbr.rel (%p431) target = $region56
        $region55: #{tpu_custom_call.1} parent=11 // pred_region
          %s435 = ssub.s32 256, 256
          %436 = vsyncadd [#allocation4], %s435
          %s437 = sshll.u32 [#allocation3], 4
          %s438 = int_to_ptr.vmem [resolvable:$true] %s437
          %443 = dma.hbm_to_vmem [thread:$0]  %s11, 256, %s438, [#allocation4], 64, 64, 4
        $region56: #{tpu_custom_call.1} parent=11 // pred_fallthru
          _
        // Predicated region
        $region57: #{tpu_custom_call.1} parent=11 // pred_check
          %p444 = pneg %p316
        $region58: #{tpu_custom_call.1} parent=11 // pred_check_branch
          %446 = sbr.rel (%p444) target = $region60
        $region59: #{tpu_custom_call.1} parent=11 // pred_region
          %s448 = ssub.s32 16, 16
          %449 = vsyncadd [#allocation7], %s448
          %s451 = sshll.u32 [#allocation6], 4
          %s452 = int_to_ptr.vmem [resolvable:$true] %s451
          %454 = dma.hbm_to_vmem [thread:$0]  %s12, 16, %s452, [#allocation7]
        $region60: #{tpu_custom_call.1} parent=11 // pred_fallthru
          _
        // Predicated region
        $region61: #{tpu_custom_call.1} parent=11 // pred_check
          %p455 = pneg %p337
        $region62: #{tpu_custom_call.1} parent=11 // pred_check_branch
          %457 = sbr.rel (%p455) target = $region64
        $region63: #{tpu_custom_call.1} parent=11 // pred_region
          _
        $region64: #{tpu_custom_call.1} parent=11 // pred_fallthru
          _
        // Predicated region
        $region65: #{tpu_custom_call.1} parent=11 // pred_check
          %p458 = pneg %p358
        $region66: #{tpu_custom_call.1} parent=11 // pred_check_branch
          %460 = sbr.rel (%p458) target = $region68
        $region67: #{tpu_custom_call.1} parent=11 // pred_region
          _
        $region68: #{tpu_custom_call.1} parent=11 // pred_fallthru
          _
      $region12: #{tpu_custom_call.1} parent=5 // pred_fallthru
        _
      %p461 = scmp.lt.s32.totalorder %s26, 2
      // Predicated region
      $region69: #{tpu_custom_call.1} parent=5 // pred_check
        %p462 = pneg %p461
      $region70: #{tpu_custom_call.1} parent=5 // pred_check_branch
        %464 = sbr.rel (%p462) target = $region72
      $region71: #{tpu_custom_call.1} parent=5 // pred_region
        // Predicated region
        $region73: #{tpu_custom_call.1} parent=71 // pred_check
          %p465 = pneg %p58
        $region74: #{tpu_custom_call.1} parent=71 // pred_check_branch
          %467 = sbr.rel (%p465) target = $region76
        $region75: #{tpu_custom_call.1} parent=71 // pred_region
          %p468 = scmp.lt.s32.totalorder %s33, 1
          %s469 = scalar_select %p468, %s33, 1
          %s470 = smul.addr %s469, 2
          %s471 = smul.addr %s470, 8
          %s472 = scalar_lea.vmem %s0, %s471
        $region76: #{tpu_custom_call.1} parent=71 // pred_fallthru
          _
      $region72: #{tpu_custom_call.1} parent=5 // pred_fallthru
        _
      %p473 = scmp.le.s32.totalorder 1, %s26
      %p474 = scmp.lt.s32.totalorder %s26, 3
      %p475 = pnand %p473, %p474
      %p476 = pneg %p475
      // Predicated region
      $region77: #{tpu_custom_call.1} parent=5 // pred_check
        _
      $region78: #{tpu_custom_call.1} parent=5 // pred_check_branch
        %478 = sbr.rel (%p475) target = $region80
      $region79: #{tpu_custom_call.1} parent=5 // pred_region
        %s479 = ssub.s32 %s26, 1
        // Predicated region
        $region81: #{tpu_custom_call.1} parent=79 // pred_check
          %p480 = pneg %p295
        $region82: #{tpu_custom_call.1} parent=79 // pred_check_branch
          %482 = sbr.rel (%p480) target = $region84
        $region83: #{tpu_custom_call.1} parent=79 // pred_region
          %483 = dma.done [#allocation4], 256
        $region84: #{tpu_custom_call.1} parent=79 // pred_fallthru
          _
        // Predicated region
        $region85: #{tpu_custom_call.1} parent=79 // pred_check
          %p484 = pneg %p316
        $region86: #{tpu_custom_call.1} parent=79 // pred_check_branch
          %486 = sbr.rel (%p484) target = $region88
        $region87: #{tpu_custom_call.1} parent=79 // pred_region
          %487 = dma.done [#allocation7], 16
        $region88: #{tpu_custom_call.1} parent=79 // pred_fallthru
          _
        %p488 = scmp.lt.s32.totalorder %s35, 1
        %s489 = scalar_select %p488, %s35, 1
        %s490 = smul.addr %s489, 2
        %s491 = smul.addr %s490, 8
        %s492 = scalar_lea.vmem %s0, %s491
        %p493 = pneg %p64
        %p494 = pneg %p61
        %p495 = pneg %p85
        %p496 = pneg %p82
        %p497 = pneg %p106
        %p498 = pneg %p103
        %p499 = pneg %p127
        %p500 = pneg %p124
        %p501 = pneg %p148
        %p502 = pneg %p145
        %p503 = pneg %p169
        %p504 = pneg %p166
        %p505 = pneg %p190
        %p506 = pneg %p187
        %p507 = pneg %p211
        %p508 = pneg %p208
        %p509 = pneg %p232
        %p510 = pneg %p229
        %p511 = pneg %p253
        %p512 = pneg %p250
        %p513 = pneg %p274
        %p514 = pneg %p271
        %p515 = pneg %p295
        %p516 = pneg %p292
        %p517 = pneg %p316
        %p518 = pneg %p313
        %p519 = pneg %p337
        %p520 = pneg %p334
        %p521 = pneg %p358
        %p522 = pneg %p355
        %p523 = pneg %p386
        %p524 = pneg %p383
        %s525 = sand.u32 %s373, 1
        %s526 = scalar_lea.sflag [#allocation5], %s525
        %s527 = sand.u32 %s373, 1
        %s528 = smul.addr %s527, 16
        %s529 = scalar_lea.vmem [#allocation8], %s528
        %p530 = scmp.lt.s32.totalorder %s35, 1
        %s531 = scalar_select %p530, %s35, 1
        %s532 = smul.addr %s531, 2
        %s533 = smul.addr %s532, 8
        %s534 = scalar_lea.vmem %s0, %s533
        %s535 = smul.u32 2, %s36
        %s537 = smul.u32 %s36, 16
        %s538 = ssub.s32 %s537, 8
        %p539 = scmp.gt.s32.totalorder %s538, 0
        %s540 = scalar_select %p539, %s538, 0
        %p541 = scmp.lt.s32.totalorder %s540, 0
        %s542 = scalar_select %p541, %s540, 0
        %s543 = scalar_lea.vmem %s534, %s537
        %v544 = vld [vmem:[%s543] sm:$0xff]
        %v545 = vld [vmem:[%s543 + $0x8] sm:$0xff]
        %v546 = vld [vmem:[%s1] sm:$0x1]
        %v547 = vld [vmem:[%s2] sm:$0x1]
        %vm548 = vcmask 261120
        %v549 = vsel %vm548, %v544, 0.0
        %550 = vadd.xlane.f32.xlu0 %v549
        %v551 = vpop.xlane.xlu0 %550
        %v552 = vsel %vm548, %v545, 0.0
        %553 = vadd.xlane.f32.xlu0 %v552
        %v554 = vpop.xlane.xlu0 %553
        %v555 = vrcp.pop 32.0
        %v556 = vmul.f32 %v551, %v555
        %v557 = vmul.f32 %v554, %v555
        %v558 = vsub.f32 %v544, %v556
        %v559 = vsub.f32 %v545, %v557
        %v560 = vmul.f32 %v558, %v558
        %v561 = vmul.f32 %v559, %v559
        %v562 = vsel %vm548, %v560, 0.0
        %563 = vadd.xlane.f32.xlu0 %v562
        %v564 = vpop.xlane.xlu0 %563
        %v565 = vsel %vm548, %v561, 0.0
        %566 = vadd.xlane.f32.xlu0 %v565
        %v567 = vpop.xlane.xlu0 %566
        %v568 = vmul.f32 %v564, %v555
        %v569 = vmul.f32 %v567, %v555
        %v570 = vadd.f32 %v568, 1e-05
        %v571 = vadd.f32 %v569, 1e-05
        %v572 = vrsqrt.pop %v570
        %v573 = vrsqrt.pop %v571
        %v574 = vmul.f32 %v558, %v572
        %v575 = vmul.f32 %v559, %v573
        %v577 = vlaneseq
        %v578 = vshrl.u32 %v577, 7
        %v579 = vsub.s32 0, %v578
        %v580 = vrot.slane %v546, %v579
        %v582 = vmul.f32 %v574, %v580
        %v583 = vmul.f32 %v575, %v580
        %v585 = vlaneseq
        %v586 = vshrl.u32 %v585, 7
        %v587 = vsub.s32 0, %v586
        %v588 = vrot.slane %v547, %v587
        %v590 = vadd.f32 %v582, %v588
        %v591 = vadd.f32 %v583, %v588
        %v592 = vpack.c.bf16 %v591, %v590
        %v593 = vld [vmem:[%s3] sm:$0xf]
        %v594 = vld [vmem:[%s3 + $0x4] sm:$0xf]
        %v595 = vld [vmem:[%s3 + $0x8] sm:$0xf]
        %v596 = vld [vmem:[%s3 + $0xc] sm:$0xf]
        %v597 = vld [vmem:[%s4] sm:$0x1]
        %v599 = vlaneseq
        %v600 = vshrl.u32 %v599, 7
        %v601 = vsub.s32 0, %v600
        %v602 = vrot.slane %v597, %v601
        %v608 = vunpack.c.l.b16 %v593
        %v609 = vunpack.c.l.b16 %v594
        %v610 = vunpack.c.l.b16 %v595
        %v611 = vunpack.c.l.b16 %v596
        %v612 = vpack.c.b16 %v609, %v608
        %v613 = vpack.c.b16 %v611, %v610
        %v617 = vsel %vm548, %v592, 0
        %619 = vmatprep.subr.bf16.mxu0 0
        %620 = vmatpush1.bf16.msra.mxu0 0
        %621 = vmatprep.subr.bf16.mxu0 0
        %622 = vmatpush1.bf16.msra.mxu0 0
        %623 = vmatprep.subr.bf16.mxu0 0
        %624 = vmatpush1.bf16.msra.mxu0 0
        %625 = vmatprep.subr.bf16.mxu0 0
        %626 = vmatpush1.bf16.msra.mxu0 0
        %627 = vmatprep.subr.bf16.mxu0 0
        %628 = vmatpush1.bf16.msra.mxu0 0
        %629 = vmatprep.subr.bf16.mxu0 0
        %630 = vmatpush1.bf16.msra.mxu0 0
        %631 = vmatprep.subr.bf16.mxu0 0
        %632 = vmatpush1.bf16.msra.mxu0 %v613
        %633 = vmatprep.subr.bf16.mxu0 0
        %634 = vmatpush1.bf16.msra.mxu0 %v612
        %635 = vmatprep.subr.bf16.mxu0 0
        %636 = vmatpush2.bf16.msra.mxu0 0
        %637 = vmatprep.subr.bf16.mxu0 0
        %638 = vmatpush2.bf16.msra.mxu0 0
        %639 = vmatprep.subr.bf16.mxu0 0
        %640 = vmatpush2.bf16.msra.mxu0 0
        %641 = vmatprep.subr.bf16.mxu0 0
        %642 = vmatpush2.bf16.msra.mxu0 0
        %643 = vmatprep.subr.bf16.mxu0 0
        %644 = vmatpush2.bf16.msra.mxu0 0
        %645 = vmatprep.subr.bf16.mxu0 0
        %646 = vmatpush2.bf16.msra.mxu0 0
        %647 = vmatprep.subr.bf16.mxu0 0
        %648 = vmatpush2.bf16.msra.mxu0 0
        %649 = vmatprep.subr.bf16.mxu0 0
        %650 = vmatpush2.bf16.msra.mxu0 0
        %651 = vmatprep.mubr.bf16.mxu0 0
        %652 = vmatmul.mubr.bf16.gmra.mxu0 %v617
        %v653 = vpop.f32.mrf.mxu0
        %v654 = vadd.f32 %v602, %v653
        %v655 = vpop.f32.mrf.mxu0
        %v656 = vpop.f32.mrf.mxu0
        %v657 = vadd.f32 %v602, %v656
        %v658 = vpop.f32.mrf.mxu0
        %659 = vdwg.mxu0
        %v660 = vmul.f32 %v654, 0.35355338
        %v661 = vmul.f32 %v657, 0.35355338
        %v662 = vpack.c.bf16 %v661, %v660
        %s663 = scalar_lea.vmem %s534, %s542
        %v664 = vld [vmem:[%s663] sm:$0xff]
        %v665 = vld [vmem:[%s663 + $0x8] sm:$0xff]
        %v666 = vsel %vm548, %v664, 0.0
        %667 = vadd.xlane.f32.xlu0 %v666
        %v668 = vpop.xlane.xlu0 %667
        %v669 = vsel %vm548, %v665, 0.0
        %670 = vadd.xlane.f32.xlu0 %v669
        %v671 = vpop.xlane.xlu0 %670
        %v672 = vmul.f32 %v668, %v555
        %v673 = vmul.f32 %v671, %v555
        %v674 = vsub.f32 %v664, %v672
        %v675 = vsub.f32 %v665, %v673
        %v676 = vmul.f32 %v674, %v674
        %v677 = vmul.f32 %v675, %v675
        %v678 = vsel %vm548, %v676, 0.0
        %679 = vadd.xlane.f32.xlu0 %v678
        %v680 = vpop.xlane.xlu0 %679
        %v681 = vsel %vm548, %v677, 0.0
        %682 = vadd.xlane.f32.xlu0 %v681
        %v683 = vpop.xlane.xlu0 %682
        %v684 = vmul.f32 %v680, %v555
        %v685 = vmul.f32 %v683, %v555
        %v686 = vadd.f32 %v684, 1e-05
        %v687 = vadd.f32 %v685, 1e-05
        %v688 = vrsqrt.pop %v686
        %v689 = vrsqrt.pop %v687
        %v690 = vmul.f32 %v674, %v688
        %v691 = vmul.f32 %v675, %v689
        %v692 = vmul.f32 %v690, %v580
        %v693 = vmul.f32 %v691, %v580
        %v694 = vadd.f32 %v692, %v588
        %v695 = vadd.f32 %v693, %v588
        %v696 = vpack.c.bf16 %v695, %v694
        %v697 = vld [vmem:[%s5] sm:$0xf]
        %v698 = vld [vmem:[%s5 + $0x4] sm:$0xf]
        %v699 = vld [vmem:[%s5 + $0x8] sm:$0xf]
        %v700 = vld [vmem:[%s5 + $0xc] sm:$0xf]
        %v701 = vld [vmem:[%s6] sm:$0x1]
        %v703 = vlaneseq
        %v704 = vshrl.u32 %v703, 7
        %v705 = vsub.s32 0, %v704
        %v706 = vrot.slane %v701, %v705
        %v712 = vunpack.c.l.b16 %v697
        %v713 = vunpack.c.l.b16 %v698
        %v714 = vunpack.c.l.b16 %v699
        %v715 = vunpack.c.l.b16 %v700
        %v716 = vpack.c.b16 %v713, %v712
        %v717 = vpack.c.b16 %v715, %v714
        %v721 = vsel %vm548, %v696, 0
        %723 = vmatprep.subr.bf16.mxu0 0
        %724 = vmatpush1.bf16.msra.mxu0 0
        %725 = vmatprep.subr.bf16.mxu0 0
        %726 = vmatpush1.bf16.msra.mxu0 0
        %727 = vmatprep.subr.bf16.mxu0 0
        %728 = vmatpush1.bf16.msra.mxu0 0
        %729 = vmatprep.subr.bf16.mxu0 0
        %730 = vmatpush1.bf16.msra.mxu0 0
        %731 = vmatprep.subr.bf16.mxu0 0
        %732 = vmatpush1.bf16.msra.mxu0 0
        %733 = vmatprep.subr.bf16.mxu0 0
        %734 = vmatpush1.bf16.msra.mxu0 0
        %735 = vmatprep.subr.bf16.mxu0 0
        %736 = vmatpush1.bf16.msra.mxu0 %v717
        %737 = vmatprep.subr.bf16.mxu0 0
        %738 = vmatpush1.bf16.msra.mxu0 %v716
        %739 = vmatprep.subr.bf16.mxu0 0
        %740 = vmatpush2.bf16.msra.mxu0 0
        %741 = vmatprep.subr.bf16.mxu0 0
        %742 = vmatpush2.bf16.msra.mxu0 0
        %743 = vmatprep.subr.bf16.mxu0 0
        %744 = vmatpush2.bf16.msra.mxu0 0
        %745 = vmatprep.subr.bf16.mxu0 0
        %746 = vmatpush2.bf16.msra.mxu0 0
        %747 = vmatprep.subr.bf16.mxu0 0
        %748 = vmatpush2.bf16.msra.mxu0 0
        %749 = vmatprep.subr.bf16.mxu0 0
        %750 = vmatpush2.bf16.msra.mxu0 0
        %751 = vmatprep.subr.bf16.mxu0 0
        %752 = vmatpush2.bf16.msra.mxu0 0
        %753 = vmatprep.subr.bf16.mxu0 0
        %754 = vmatpush2.bf16.msra.mxu0 0
        %755 = vmatprep.mubr.bf16.mxu0 0
        %756 = vmatmul.mubr.bf16.gmra.mxu0 %v721
        %v757 = vpop.f32.mrf.mxu0
        %v758 = vadd.f32 %v706, %v757
        %v759 = vpop.f32.mrf.mxu0
        %v760 = vpop.f32.mrf.mxu0
        %v761 = vadd.f32 %v706, %v760
        %v762 = vpop.f32.mrf.mxu0
        %763 = vdwg.mxu0
        %v764 = vpack.c.bf16 %v761, %v758
        %v765 = vlaneseq
        %v766 = vshrl.u32 %v765, 7
        %v767 = vadd.s32 %v766, 8
        %v768 = vstv %s537
        %v769 = vadd.s32 %v766, %v768
        %v770 = vadd.s32 %v767, %v768
        %v771 = vlaneseq
        %v772 = vand.u32 %v771, 127
        %v773 = vstv %s542
        %v774 = vadd.s32 %v772, %v773
        %v775 = vsub.s32 %v769, 3
        %v776 = vsub.s32 %v770, 3
        %vm777 = vcmp.gt.s32.totalorder %v775, 0
        %v778 = vsel %vm777, %v775, 0
        %vm779 = vcmp.gt.s32.totalorder %v776, 0
        %v780 = vsel %vm779, %v776, 0
        %vm781 = vcmp.lt.s32.totalorder %v778, 9
        %v782 = vsel %vm781, %v778, 9
        %vm783 = vcmp.lt.s32.totalorder %v780, 9
        %v784 = vsel %vm783, %v780, 9
        %vm785 = vcmp.ge.s32.totalorder %v774, %v782
        %vm786 = vcmp.ge.s32.totalorder %v774, %v784
        %v787 = vadd.s32 %v782, 7
        %v788 = vadd.s32 %v784, 7
        %vm789 = vcmp.lt.s32.totalorder %v774, %v787
        %vm790 = vcmp.lt.s32.totalorder %v774, %v788
        %vm791 = vmand %vm785, %vm789
        %vm792 = vmand %vm786, %vm790
        %vm793 = vcmask 64512
        %v795 = vsel %vm793, %v662, 0
        %v798 = vsel %vm793, %v764, 0
        %800 = vmatprep.subr.bf16.mxu0 0
        %801 = vmatpush1.bf16.xpose.msra.mxu0 0
        %802 = vmatprep.subr.bf16.mxu0 0
        %803 = vmatpush1.bf16.xpose.msra.mxu0 0
        %804 = vmatprep.subr.bf16.mxu0 0
        %805 = vmatpush1.bf16.xpose.msra.mxu0 0
        %806 = vmatprep.subr.bf16.mxu0 0
        %807 = vmatpush1.bf16.xpose.msra.mxu0 0
        %808 = vmatprep.subr.bf16.mxu0 0
        %809 = vmatpush1.bf16.xpose.msra.mxu0 0
        %810 = vmatprep.subr.bf16.mxu0 0
        %811 = vmatpush1.bf16.xpose.msra.mxu0 0
        %812 = vmatprep.subr.bf16.mxu0 0
        %813 = vmatpush1.bf16.xpose.msra.mxu0 0
        %814 = vmatprep.subr.bf16.mxu0 0
        %815 = vmatpush1.bf16.xpose.msra.mxu0 %v798
        %816 = vmatprep.subr.bf16.mxu0 0
        %817 = vmatpush2.bf16.xpose.msra.mxu0 0
        %818 = vmatprep.subr.bf16.mxu0 0
        %819 = vmatpush2.bf16.xpose.msra.mxu0 0
        %820 = vmatprep.subr.bf16.mxu0 0
        %821 = vmatpush2.bf16.xpose.msra.mxu0 0
        %822 = vmatprep.subr.bf16.mxu0 0
        %823 = vmatpush2.bf16.xpose.msra.mxu0 0
        %824 = vmatprep.subr.bf16.mxu0 0
        %825 = vmatpush2.bf16.xpose.msra.mxu0 0
        %826 = vmatprep.subr.bf16.mxu0 0
        %827 = vmatpush2.bf16.xpose.msra.mxu0 0
        %828 = vmatprep.subr.bf16.mxu0 0
        %829 = vmatpush2.bf16.xpose.msra.mxu0 0
        %830 = vmatprep.subr.bf16.mxu0 0
        %831 = vmatpush2.bf16.xpose.msra.mxu0 0
        %832 = vmatprep.mubr.bf16.mxu0 0
        %833 = vmatmul.mubr.bf16.gmra.mxu0 %v795
        %v834 = vpop.f32.mrf.mxu0
        %v835 = vadd.f32 0.0, %v834
        %v836 = vpop.f32.mrf.mxu0
        %v837 = vpop.f32.mrf.mxu0
        %v838 = vadd.f32 0.0, %v837
        %v839 = vpop.f32.mrf.mxu0
        %840 = vdwg.mxu0
        %v841 = vsel %vm791, %v835, -1e+30
        %v842 = vsel %vm792, %v838, -1e+30
        %vm843 = vcmask 130048
        %v844 = vsel %vm843, %v841, -inf
        %845 = vmax.xlane.f32.xlu0 %v844
        %v846 = vpop.xlane.xlu0 %845
        %v847 = vsel %vm843, %v842, -inf
        %848 = vmax.xlane.f32.xlu0 %v847
        %v849 = vpop.xlane.xlu0 %848
        %v850 = vsub.f32 %v841, %v846
        %v851 = vsub.f32 %v842, %v849
        %v852 = vmul.f32 %v850, 1.442695
        %v853 = vpow.pop %v852
        %v854 = vmul.f32 %v851, 1.442695
        %v855 = vpow.pop %v854
        %v856 = vsel %vm843, %v853, 0.0
        %857 = vadd.xlane.f32.xlu0 %v856
        %v858 = vpop.xlane.xlu0 %857
        %v859 = vsel %vm843, %v855, 0.0
        %860 = vadd.xlane.f32.xlu0 %v859
        %v861 = vpop.xlane.xlu0 %860
        %v862 = vrcp.pop %v858
        %v863 = vrcp.pop %v861
        %v864 = vmul.f32 %v853, %v862
        %v865 = vmul.f32 %v855, %v863
        %v866 = vpack.c.bf16 %v865, %v864
        %868 = vrot.lane.b32.xlu0 %v764, 96
        %v869 = vpop.permute.xlu0 %868
        %v872 = vsel %vm843, %v866, 0
        %874 = vmatprep.subr.bf16.mxu0 0
        %875 = vmatpush1.bf16.msra.mxu0 0
        %876 = vmatprep.subr.bf16.mxu0 0
        %877 = vmatpush1.bf16.msra.mxu0 0
        %878 = vmatprep.subr.bf16.mxu0 0
        %879 = vmatpush1.bf16.msra.mxu0 0
        %880 = vmatprep.subr.bf16.mxu0 0
        %881 = vmatpush1.bf16.msra.mxu0 0
        %882 = vmatprep.subr.bf16.mxu0 0
        %883 = vmatpush1.bf16.msra.mxu0 0
        %884 = vmatprep.subr.bf16.mxu0 0
        %885 = vmatpush1.bf16.msra.mxu0 0
        %886 = vmatprep.subr.bf16.mxu0 0
        %887 = vmatpush1.bf16.msra.mxu0 0
        %888 = vmatprep.subr.bf16.mxu0 0
        %889 = vmatpush1.bf16.msra.mxu0 %v869
        %890 = vmatprep.subr.bf16.mxu0 0
        %891 = vmatpush2.bf16.msra.mxu0 0
        %892 = vmatprep.subr.bf16.mxu0 0
        %893 = vmatpush2.bf16.msra.mxu0 0
        %894 = vmatprep.subr.bf16.mxu0 0
        %895 = vmatpush2.bf16.msra.mxu0 0
        %896 = vmatprep.subr.bf16.mxu0 0
        %897 = vmatpush2.bf16.msra.mxu0 0
        %898 = vmatprep.subr.bf16.mxu0 0
        %899 = vmatpush2.bf16.msra.mxu0 0
        %900 = vmatprep.subr.bf16.mxu0 0
        %901 = vmatpush2.bf16.msra.mxu0 0
        %902 = vmatprep.subr.bf16.mxu0 0
        %903 = vmatpush2.bf16.msra.mxu0 0
        %904 = vmatprep.subr.bf16.mxu0 0
        %905 = vmatpush2.bf16.msra.mxu0 0
        %906 = vmatprep.mubr.bf16.mxu0 0
        %907 = vmatmul.mubr.bf16.gmra.mxu0 %v872
        %v908 = vpop.f32.mrf.mxu0
        %v909 = vadd.f32 0.0, %v908
        %v910 = vpop.f32.mrf.mxu0
        %v911 = vpop.f32.mrf.mxu0
        %v912 = vadd.f32 0.0, %v911
        %v913 = vpop.f32.mrf.mxu0
        %914 = vdwg.mxu0
        %915 = vst.msk [vmem:[#allocation2] sm:$0xff] %vm793, %v909
        %916 = vst.msk [vmem:[#allocation2 + $0x8] sm:$0xff] %vm793, %v912
        %918 = vrot.lane.b32.xlu0 %v662, 120
        %v919 = vpop.permute.xlu0 %918
        %920 = vrot.lane.b32.xlu0 %v764, 120
        %v921 = vpop.permute.xlu0 %920
        %v923 = vsel %vm793, %v919, 0
        %v926 = vsel %vm793, %v921, 0
        %928 = vmatprep.subr.bf16.mxu0 0
        %929 = vmatpush1.bf16.xpose.msra.mxu0 0
        %930 = vmatprep.subr.bf16.mxu0 0
        %931 = vmatpush1.bf16.xpose.msra.mxu0 0
        %932 = vmatprep.subr.bf16.mxu0 0
        %933 = vmatpush1.bf16.xpose.msra.mxu0 0
        %934 = vmatprep.subr.bf16.mxu0 0
        %935 = vmatpush1.bf16.xpose.msra.mxu0 0
        %936 = vmatprep.subr.bf16.mxu0 0
        %937 = vmatpush1.bf16.xpose.msra.mxu0 0
        %938 = vmatprep.subr.bf16.mxu0 0
        %939 = vmatpush1.bf16.xpose.msra.mxu0 0
        %940 = vmatprep.subr.bf16.mxu0 0
        %941 = vmatpush1.bf16.xpose.msra.mxu0 0
        %942 = vmatprep.subr.bf16.mxu0 0
        %943 = vmatpush1.bf16.xpose.msra.mxu0 %v926
        %944 = vmatprep.subr.bf16.mxu0 0
        %945 = vmatpush2.bf16.xpose.msra.mxu0 0
        %946 = vmatprep.subr.bf16.mxu0 0
        %947 = vmatpush2.bf16.xpose.msra.mxu0 0
        %948 = vmatprep.subr.bf16.mxu0 0
        %949 = vmatpush2.bf16.xpose.msra.mxu0 0
        %950 = vmatprep.subr.bf16.mxu0 0
        %951 = vmatpush2.bf16.xpose.msra.mxu0 0
        %952 = vmatprep.subr.bf16.mxu0 0
        %953 = vmatpush2.bf16.xpose.msra.mxu0 0
        %954 = vmatprep.subr.bf16.mxu0 0
        %955 = vmatpush2.bf16.xpose.msra.mxu0 0
        %956 = vmatprep.subr.bf16.mxu0 0
        %957 = vmatpush2.bf16.xpose.msra.mxu0 0
        %958 = vmatprep.subr.bf16.mxu0 0
        %959 = vmatpush2.bf16.xpose.msra.mxu0 0
        %960 = vmatprep.mubr.bf16.mxu0 0
        %961 = vmatmul.mubr.bf16.gmra.mxu0 %v923
        %v962 = vpop.f32.mrf.mxu0
        %v963 = vadd.f32 0.0, %v962
        %v964 = vpop.f32.mrf.mxu0
        %v965 = vpop.f32.mrf.mxu0
        %v966 = vadd.f32 0.0, %v965
        %v967 = vpop.f32.mrf.mxu0
        %968 = vdwg.mxu0
        %v969 = vsel %vm791, %v963, -1e+30
        %v970 = vsel %vm792, %v966, -1e+30
        %v971 = vsel %vm843, %v969, -inf
        %972 = vmax.xlane.f32.xlu0 %v971
        %v973 = vpop.xlane.xlu0 %972
        %v974 = vsel %vm843, %v970, -inf
        %975 = vmax.xlane.f32.xlu0 %v974
        %v976 = vpop.xlane.xlu0 %975
        %v977 = vsub.f32 %v969, %v973
        %v978 = vsub.f32 %v970, %v976
        %v979 = vmul.f32 %v977, 1.442695
        %v980 = vpow.pop %v979
        %v981 = vmul.f32 %v978, 1.442695
        %v982 = vpow.pop %v981
        %v983 = vsel %vm843, %v980, 0.0
        %984 = vadd.xlane.f32.xlu0 %v983
        %v985 = vpop.xlane.xlu0 %984
        %v986 = vsel %vm843, %v982, 0.0
        %987 = vadd.xlane.f32.xlu0 %v986
        %v988 = vpop.xlane.xlu0 %987
        %v989 = vrcp.pop %v985
        %v990 = vrcp.pop %v988
        %v991 = vmul.f32 %v980, %v989
        %v992 = vmul.f32 %v982, %v990
        %v993 = vpack.c.bf16 %v992, %v991
        %994 = vrot.lane.b32.xlu0 %v764, 88
        %v995 = vpop.permute.xlu0 %994
        %v998 = vsel %vm843, %v993, 0
        %1000 = vmatprep.subr.bf16.mxu0 0
        %1001 = vmatpush1.bf16.msra.mxu0 0
        %1002 = vmatprep.subr.bf16.mxu0 0
        %1003 = vmatpush1.bf16.msra.mxu0 0
        %1004 = vmatprep.subr.bf16.mxu0 0
        %1005 = vmatpush1.bf16.msra.mxu0 0
        %1006 = vmatprep.subr.bf16.mxu0 0
        %1007 = vmatpush1.bf16.msra.mxu0 0
        %1008 = vmatprep.subr.bf16.mxu0 0
        %1009 = vmatpush1.bf16.msra.mxu0 0
        %1010 = vmatprep.subr.bf16.mxu0 0
        %1011 = vmatpush1.bf16.msra.mxu0 0
        %1012 = vmatprep.subr.bf16.mxu0 0
        %1013 = vmatpush1.bf16.msra.mxu0 0
        %1014 = vmatprep.subr.bf16.mxu0 0
        %1015 = vmatpush1.bf16.msra.mxu0 %v995
        %1016 = vmatprep.subr.bf16.mxu0 0
        %1017 = vmatpush2.bf16.msra.mxu0 0
        %1018 = vmatprep.subr.bf16.mxu0 0
        %1019 = vmatpush2.bf16.msra.mxu0 0
        %1020 = vmatprep.subr.bf16.mxu0 0
        %1021 = vmatpush2.bf16.msra.mxu0 0
        %1022 = vmatprep.subr.bf16.mxu0 0
        %1023 = vmatpush2.bf16.msra.mxu0 0
        %1024 = vmatprep.subr.bf16.mxu0 0
        %1025 = vmatpush2.bf16.msra.mxu0 0
        %1026 = vmatprep.subr.bf16.mxu0 0
        %1027 = vmatpush2.bf16.msra.mxu0 0
        %1028 = vmatprep.subr.bf16.mxu0 0
        %1029 = vmatpush2.bf16.msra.mxu0 0
        %1030 = vmatprep.subr.bf16.mxu0 0
        %1031 = vmatpush2.bf16.msra.mxu0 0
        %1032 = vmatprep.mubr.bf16.mxu0 0
        %1033 = vmatmul.mubr.bf16.gmra.mxu0 %v998
        %v1034 = vpop.f32.mrf.mxu0
        %v1035 = vadd.f32 0.0, %v1034
        %v1036 = vpop.f32.mrf.mxu0
        %v1037 = vpop.f32.mrf.mxu0
        %v1038 = vadd.f32 0.0, %v1037
        %v1039 = vpop.f32.mrf.mxu0
        %1040 = vdwg.mxu0
        %1043 = vrot.lane.b32.xlu0 %v1035, 8
        %v1044 = vpop.permute.xlu0 %1043
        %1045 = vrot.lane.b32.xlu0 %v1038, 8
        %v1046 = vpop.permute.xlu0 %1045
        %vm1049 = vcmask 130112
        %1050 = vst.msk [vmem:[#allocation2] sm:$0xff] %vm1049, %v1044
        %1051 = vst.msk [vmem:[#allocation2 + $0x8] sm:$0xff] %vm1049, %v1046
        %1052 = vrot.lane.b32.xlu0 %v662, 112
        %v1053 = vpop.permute.xlu0 %1052
        %1054 = vrot.lane.b32.xlu0 %v764, 112
        %v1055 = vpop.permute.xlu0 %1054
        %v1057 = vsel %vm793, %v1053, 0
        %v1060 = vsel %vm793, %v1055, 0
        %1062 = vmatprep.subr.bf16.mxu0 0
        %1063 = vmatpush1.bf16.xpose.msra.mxu0 0
        %1064 = vmatprep.subr.bf16.mxu0 0
        %1065 = vmatpush1.bf16.xpose.msra.mxu0 0
        %1066 = vmatprep.subr.bf16.mxu0 0
        %1067 = vmatpush1.bf16.xpose.msra.mxu0 0
        %1068 = vmatprep.subr.bf16.mxu0 0
        %1069 = vmatpush1.bf16.xpose.msra.mxu0 0
        %1070 = vmatprep.subr.bf16.mxu0 0
        %1071 = vmatpush1.bf16.xpose.msra.mxu0 0
        %1072 = vmatprep.subr.bf16.mxu0 0
        %1073 = vmatpush1.bf16.xpose.msra.mxu0 0
        %1074 = vmatprep.subr.bf16.mxu0 0
        %1075 = vmatpush1.bf16.xpose.msra.mxu0 0
        %1076 = vmatprep.subr.bf16.mxu0 0
        %1077 = vmatpush1.bf16.xpose.msra.mxu0 %v1060
        %1078 = vmatprep.subr.bf16.mxu0 0
        %1079 = vmatpush2.bf16.xpose.msra.mxu0 0
        %1080 = vmatprep.subr.bf16.mxu0 0
        %1081 = vmatpush2.bf16.xpose.msra.mxu0 0
        %1082 = vmatprep.subr.bf16.mxu0 0
        %1083 = vmatpush2.bf16.xpose.msra.mxu0 0
        %1084 = vmatprep.subr.bf16.mxu0 0
        %1085 = vmatpush2.bf16.xpose.msra.mxu0 0
        %1086 = vmatprep.subr.bf16.mxu0 0
        %1087 = vmatpush2.bf16.xpose.msra.mxu0 0
        %1088 = vmatprep.subr.bf16.mxu0 0
        %1089 = vmatpush2.bf16.xpose.msra.mxu0 0
        %1090 = vmatprep.subr.bf16.mxu0 0
        %1091 = vmatpush2.bf16.xpose.msra.mxu0 0
        %1092 = vmatprep.subr.bf16.mxu0 0
        %1093 = vmatpush2.bf16.xpose.msra.mxu0 0
        %1094 = vmatprep.mubr.bf16.mxu0 0
        %1095 = vmatmul.mubr.bf16.gmra.mxu0 %v1057
        %v1096 = vpop.f32.mrf.mxu0
        %v1097 = vadd.f32 0.0, %v1096
        %v1098 = vpop.f32.mrf.mxu0
        %v1099 = vpop.f32.mrf.mxu0
        %v1100 = vadd.f32 0.0, %v1099
        %v1101 = vpop.f32.mrf.mxu0
        %1102 = vdwg.mxu0
        %v1103 = vsel %vm791, %v1097, -1e+30
        %v1104 = vsel %vm792, %v1100, -1e+30
        %v1105 = vsel %vm843, %v1103, -inf
        %1106 = vmax.xlane.f32.xlu0 %v1105
        %v1107 = vpop.xlane.xlu0 %1106
        %v1108 = vsel %vm843, %v1104, -inf
        %1109 = vmax.xlane.f32.xlu0 %v1108
        %v1110 = vpop.xlane.xlu0 %1109
        %v1111 = vsub.f32 %v1103, %v1107
        %v1112 = vsub.f32 %v1104, %v1110
        %v1113 = vmul.f32 %v1111, 1.442695
        %v1114 = vpow.pop %v1113
        %v1115 = vmul.f32 %v1112, 1.442695
        %v1116 = vpow.pop %v1115
        %v1117 = vsel %vm843, %v1114, 0.0
        %1118 = vadd.xlane.f32.xlu0 %v1117
        %v1119 = vpop.xlane.xlu0 %1118
        %v1120 = vsel %vm843, %v1116, 0.0
        %1121 = vadd.xlane.f32.xlu0 %v1120
        %v1122 = vpop.xlane.xlu0 %1121
        %v1123 = vrcp.pop %v1119
        %v1124 = vrcp.pop %v1122
        %v1125 = vmul.f32 %v1114, %v1123
        %v1126 = vmul.f32 %v1116, %v1124
        %v1127 = vpack.c.bf16 %v1126, %v1125
        %1128 = vrot.lane.b32.xlu0 %v764, 80
        %v1129 = vpop.permute.xlu0 %1128
        %v1132 = vsel %vm843, %v1127, 0
        %1134 = vmatprep.subr.bf16.mxu0 0
        %1135 = vmatpush1.bf16.msra.mxu0 0
        %1136 = vmatprep.subr.bf16.mxu0 0
        %1137 = vmatpush1.bf16.msra.mxu0 0
        %1138 = vmatprep.subr.bf16.mxu0 0
        %1139 = vmatpush1.bf16.msra.mxu0 0
        %1140 = vmatprep.subr.bf16.mxu0 0
        %1141 = vmatpush1.bf16.msra.mxu0 0
        %1142 = vmatprep.subr.bf16.mxu0 0
        %1143 = vmatpush1.bf16.msra.mxu0 0
        %1144 = vmatprep.subr.bf16.mxu0 0
        %1145 = vmatpush1.bf16.msra.mxu0 0
        %1146 = vmatprep.subr.bf16.mxu0 0
        %1147 = vmatpush1.bf16.msra.mxu0 0
        %1148 = vmatprep.subr.bf16.mxu0 0
        %1149 = vmatpush1.bf16.msra.mxu0 %v1129
        %1150 = vmatprep.subr.bf16.mxu0 0
        %1151 = vmatpush2.bf16.msra.mxu0 0
        %1152 = vmatprep.subr.bf16.mxu0 0
        %1153 = vmatpush2.bf16.msra.mxu0 0
        %1154 = vmatprep.subr.bf16.mxu0 0
        %1155 = vmatpush2.bf16.msra.mxu0 0
        %1156 = vmatprep.subr.bf16.mxu0 0
        %1157 = vmatpush2.bf16.msra.mxu0 0
        %1158 = vmatprep.subr.bf16.mxu0 0
        %1159 = vmatpush2.bf16.msra.mxu0 0
        %1160 = vmatprep.subr.bf16.mxu0 0
        %1161 = vmatpush2.bf16.msra.mxu0 0
        %1162 = vmatprep.subr.bf16.mxu0 0
        %1163 = vmatpush2.bf16.msra.mxu0 0
        %1164 = vmatprep.subr.bf16.mxu0 0
        %1165 = vmatpush2.bf16.msra.mxu0 0
        %1166 = vmatprep.mubr.bf16.mxu0 0
        %1167 = vmatmul.mubr.bf16.gmra.mxu0 %v1132
        %v1168 = vpop.f32.mrf.mxu0
        %v1169 = vadd.f32 0.0, %v1168
        %v1170 = vpop.f32.mrf.mxu0
        %v1171 = vpop.f32.mrf.mxu0
        %v1172 = vadd.f32 0.0, %v1171
        %v1173 = vpop.f32.mrf.mxu0
        %1174 = vdwg.mxu0
        %1177 = vrot.lane.b32.xlu0 %v1169, 16
        %v1178 = vpop.permute.xlu0 %1177
        %1179 = vrot.lane.b32.xlu0 %v1172, 16
        %v1180 = vpop.permute.xlu0 %1179
        %vm1183 = vcmask 195712
        %1184 = vst.msk [vmem:[#allocation2] sm:$0xff] %vm1183, %v1178
        %1185 = vst.msk [vmem:[#allocation2 + $0x8] sm:$0xff] %vm1183, %v1180
        %1186 = vrot.lane.b32.xlu0 %v662, 104
        %v1187 = vpop.permute.xlu0 %1186
        %1188 = vrot.lane.b32.xlu0 %v764, 104
        %v1189 = vpop.permute.xlu0 %1188
        %v1191 = vsel %vm793, %v1187, 0
        %v1194 = vsel %vm793, %v1189, 0
        %1196 = vmatprep.subr.bf16.mxu0 0
        %1197 = vmatpush1.bf16.xpose.msra.mxu0 0
        %1198 = vmatprep.subr.bf16.mxu0 0
        %1199 = vmatpush1.bf16.xpose.msra.mxu0 0
        %1200 = vmatprep.subr.bf16.mxu0 0
        %1201 = vmatpush1.bf16.xpose.msra.mxu0 0
        %1202 = vmatprep.subr.bf16.mxu0 0
        %1203 = vmatpush1.bf16.xpose.msra.mxu0 0
        %1204 = vmatprep.subr.bf16.mxu0 0
        %1205 = vmatpush1.bf16.xpose.msra.mxu0 0
        %1206 = vmatprep.subr.bf16.mxu0 0
        %1207 = vmatpush1.bf16.xpose.msra.mxu0 0
        %1208 = vmatprep.subr.bf16.mxu0 0
        %1209 = vmatpush1.bf16.xpose.msra.mxu0 0
        %1210 = vmatprep.subr.bf16.mxu0 0
        %1211 = vmatpush1.bf16.xpose.msra.mxu0 %v1194
        %1212 = vmatprep.subr.bf16.mxu0 0
        %1213 = vmatpush2.bf16.xpose.msra.mxu0 0
        %1214 = vmatprep.subr.bf16.mxu0 0
        %1215 = vmatpush2.bf16.xpose.msra.mxu0 0
        %1216 = vmatprep.subr.bf16.mxu0 0
        %1217 = vmatpush2.bf16.xpose.msra.mxu0 0
        %1218 = vmatprep.subr.bf16.mxu0 0
        %1219 = vmatpush2.bf16.xpose.msra.mxu0 0
        %1220 = vmatprep.subr.bf16.mxu0 0
        %1221 = vmatpush2.bf16.xpose.msra.mxu0 0
        %1222 = vmatprep.subr.bf16.mxu0 0
        %1223 = vmatpush2.bf16.xpose.msra.mxu0 0
        %1224 = vmatprep.subr.bf16.mxu0 0
        %1225 = vmatpush2.bf16.xpose.msra.mxu0 0
        %1226 = vmatprep.subr.bf16.mxu0 0
        %1227 = vmatpush2.bf16.xpose.msra.mxu0 0
        %1228 = vmatprep.mubr.bf16.mxu0 0
        %1229 = vmatmul.mubr.bf16.gmra.mxu0 %v1191
        %v1230 = vpop.f32.mrf.mxu0
        %v1231 = vadd.f32 0.0, %v1230
        %v1232 = vpop.f32.mrf.mxu0
        %v1233 = vpop.f32.mrf.mxu0
        %v1234 = vadd.f32 0.0, %v1233
        %v1235 = vpop.f32.mrf.mxu0
        %1236 = vdwg.mxu0
        %v1237 = vsel %vm791, %v1231, -1e+30
        %v1238 = vsel %vm792, %v1234, -1e+30
        %v1239 = vsel %vm843, %v1237, -inf
        %1240 = vmax.xlane.f32.xlu0 %v1239
        %v1241 = vpop.xlane.xlu0 %1240
        %v1242 = vsel %vm843, %v1238, -inf
        %1243 = vmax.xlane.f32.xlu0 %v1242
        %v1244 = vpop.xlane.xlu0 %1243
        %v1245 = vsub.f32 %v1237, %v1241
        %v1246 = vsub.f32 %v1238, %v1244
        %v1247 = vmul.f32 %v1245, 1.442695
        %v1248 = vpow.pop %v1247
        %v1249 = vmul.f32 %v1246, 1.442695
        %v1250 = vpow.pop %v1249
        %v1251 = vsel %vm843, %v1248, 0.0
        %1252 = vadd.xlane.f32.xlu0 %v1251
        %v1253 = vpop.xlane.xlu0 %1252
        %v1254 = vsel %vm843, %v1250, 0.0
        %1255 = vadd.xlane.f32.xlu0 %v1254
        %v1256 = vpop.xlane.xlu0 %1255
        %v1257 = vrcp.pop %v1253
        %v1258 = vrcp.pop %v1256
        %v1259 = vmul.f32 %v1248, %v1257
        %v1260 = vmul.f32 %v1250, %v1258
        %v1261 = vpack.c.bf16 %v1260, %v1259
        %1262 = vrot.lane.b32.xlu0 %v764, 72
        %v1263 = vpop.permute.xlu0 %1262
        %v1266 = vsel %vm843, %v1261, 0
        %1268 = vmatprep.subr.bf16.mxu0 0
        %1269 = vmatpush1.bf16.msra.mxu0 0
        %1270 = vmatprep.subr.bf16.mxu0 0
        %1271 = vmatpush1.bf16.msra.mxu0 0
        %1272 = vmatprep.subr.bf16.mxu0 0
        %1273 = vmatpush1.bf16.msra.mxu0 0
        %1274 = vmatprep.subr.bf16.mxu0 0
        %1275 = vmatpush1.bf16.msra.mxu0 0
        %1276 = vmatprep.subr.bf16.mxu0 0
        %1277 = vmatpush1.bf16.msra.mxu0 0
        %1278 = vmatprep.subr.bf16.mxu0 0
        %1279 = vmatpush1.bf16.msra.mxu0 0
        %1280 = vmatprep.subr.bf16.mxu0 0
        %1281 = vmatpush1.bf16.msra.mxu0 0
        %1282 = vmatprep.subr.bf16.mxu0 0
        %1283 = vmatpush1.bf16.msra.mxu0 %v1263
        %1284 = vmatprep.subr.bf16.mxu0 0
        %1285 = vmatpush2.bf16.msra.mxu0 0
        %1286 = vmatprep.subr.bf16.mxu0 0
        %1287 = vmatpush2.bf16.msra.mxu0 0
        %1288 = vmatprep.subr.bf16.mxu0 0
        %1289 = vmatpush2.bf16.msra.mxu0 0
        %1290 = vmatprep.subr.bf16.mxu0 0
        %1291 = vmatpush2.bf16.msra.mxu0 0
        %1292 = vmatprep.subr.bf16.mxu0 0
        %1293 = vmatpush2.bf16.msra.mxu0 0
        %1294 = vmatprep.subr.bf16.mxu0 0
        %1295 = vmatpush2.bf16.msra.mxu0 0
        %1296 = vmatprep.subr.bf16.mxu0 0
        %1297 = vmatpush2.bf16.msra.mxu0 0
        %1298 = vmatprep.subr.bf16.mxu0 0
        %1299 = vmatpush2.bf16.msra.mxu0 0
        %1300 = vmatprep.mubr.bf16.mxu0 0
        %1301 = vmatmul.mubr.bf16.gmra.mxu0 %v1266
        %v1302 = vpop.f32.mrf.mxu0
        %v1303 = vadd.f32 0.0, %v1302
        %v1304 = vpop.f32.mrf.mxu0
        %v1305 = vpop.f32.mrf.mxu0
        %v1306 = vadd.f32 0.0, %v1305
        %v1307 = vpop.f32.mrf.mxu0
        %1308 = vdwg.mxu0
        %1311 = vrot.lane.b32.xlu0 %v1303, 24
        %v1312 = vpop.permute.xlu0 %1311
        %1313 = vrot.lane.b32.xlu0 %v1306, 24
        %v1314 = vpop.permute.xlu0 %1313
        %vm1317 = vcmask 261312
        %1318 = vst.msk [vmem:[#allocation2] sm:$0xff] %vm1317, %v1312
        %1319 = vst.msk [vmem:[#allocation2 + $0x8] sm:$0xff] %vm1317, %v1314
        %v1320 = vld [vmem:[#allocation2] sm:$0xff]
        %v1321 = vld [vmem:[#allocation2 + $0x8] sm:$0xff]
        %v1322 = vpack.c.bf16 %v1321, %v1320
        %v1323 = vld [vmem:[%s7] sm:$0xf]
        %v1324 = vld [vmem:[%s7 + $0x4] sm:$0xf]
        %v1325 = vld [vmem:[%s7 + $0x8] sm:$0xf]
        %v1326 = vld [vmem:[%s7 + $0xc] sm:$0xf]
        %v1327 = vld [vmem:[%s8] sm:$0x1]
        %v1329 = vlaneseq
        %v1330 = vshrl.u32 %v1329, 7
        %v1331 = vsub.s32 0, %v1330
        %v1332 = vrot.slane %v1327, %v1331
        %v1338 = vunpack.c.l.b16 %v1323
        %v1339 = vunpack.c.l.b16 %v1324
        %v1340 = vunpack.c.l.b16 %v1325
        %v1341 = vunpack.c.l.b16 %v1326
        %v1342 = vpack.c.b16 %v1339, %v1338
        %v1343 = vpack.c.b16 %v1341, %v1340
        %v1347 = vsel %vm548, %v1322, 0
        %1349 = vmatprep.subr.bf16.mxu0 0
        %1350 = vmatpush1.bf16.msra.mxu0 0
        %1351 = vmatprep.subr.bf16.mxu0 0
        %1352 = vmatpush1.bf16.msra.mxu0 0
        %1353 = vmatprep.subr.bf16.mxu0 0
        %1354 = vmatpush1.bf16.msra.mxu0 0
        %1355 = vmatprep.subr.bf16.mxu0 0
        %1356 = vmatpush1.bf16.msra.mxu0 0
        %1357 = vmatprep.subr.bf16.mxu0 0
        %1358 = vmatpush1.bf16.msra.mxu0 0
        %1359 = vmatprep.subr.bf16.mxu0 0
        %1360 = vmatpush1.bf16.msra.mxu0 0
        %1361 = vmatprep.subr.bf16.mxu0 0
        %1362 = vmatpush1.bf16.msra.mxu0 %v1343
        %1363 = vmatprep.subr.bf16.mxu0 0
        %1364 = vmatpush1.bf16.msra.mxu0 %v1342
        %1365 = vmatprep.subr.bf16.mxu0 0
        %1366 = vmatpush2.bf16.msra.mxu0 0
        %1367 = vmatprep.subr.bf16.mxu0 0
        %1368 = vmatpush2.bf16.msra.mxu0 0
        %1369 = vmatprep.subr.bf16.mxu0 0
        %1370 = vmatpush2.bf16.msra.mxu0 0
        %1371 = vmatprep.subr.bf16.mxu0 0
        %1372 = vmatpush2.bf16.msra.mxu0 0
        %1373 = vmatprep.subr.bf16.mxu0 0
        %1374 = vmatpush2.bf16.msra.mxu0 0
        %1375 = vmatprep.subr.bf16.mxu0 0
        %1376 = vmatpush2.bf16.msra.mxu0 0
        %1377 = vmatprep.subr.bf16.mxu0 0
        %1378 = vmatpush2.bf16.msra.mxu0 0
        %1379 = vmatprep.subr.bf16.mxu0 0
        %1380 = vmatpush2.bf16.msra.mxu0 0
        %1381 = vmatprep.mubr.bf16.mxu0 0
        %1382 = vmatmul.mubr.bf16.gmra.mxu0 %v1347
        %v1383 = vpop.f32.mrf.mxu0
        %v1384 = vadd.f32 %v1332, %v1383
        %v1385 = vpop.f32.mrf.mxu0
        %v1386 = vpop.f32.mrf.mxu0
        %v1387 = vadd.f32 %v1332, %v1386
        %v1388 = vpop.f32.mrf.mxu0
        %1389 = vdwg.mxu0
        %v1390 = vadd.f32 %v544, %v1384
        %v1391 = vadd.f32 %v545, %v1387
        %v1392 = vld [vmem:[%s9] sm:$0x1]
        %v1393 = vld [vmem:[%s10] sm:$0x1]
        %v1394 = vsel %vm548, %v1390, 0.0
        %1395 = vadd.xlane.f32.xlu0 %v1394
        %v1396 = vpop.xlane.xlu0 %1395
        %v1397 = vsel %vm548, %v1391, 0.0
        %1398 = vadd.xlane.f32.xlu0 %v1397
        %v1399 = vpop.xlane.xlu0 %1398
        %v1400 = vmul.f32 %v1396, %v555
        %v1401 = vmul.f32 %v1399, %v555
        %v1402 = vsub.f32 %v1390, %v1400
        %v1403 = vsub.f32 %v1391, %v1401
        %v1404 = vmul.f32 %v1402, %v1402
        %v1405 = vmul.f32 %v1403, %v1403
        %v1406 = vsel %vm548, %v1404, 0.0
        %1407 = vadd.xlane.f32.xlu0 %v1406
        %v1408 = vpop.xlane.xlu0 %1407
        %v1409 = vsel %vm548, %v1405, 0.0
        %1410 = vadd.xlane.f32.xlu0 %v1409
        %v1411 = vpop.xlane.xlu0 %1410
        %v1412 = vmul.f32 %v1408, %v555
        %v1413 = vmul.f32 %v1411, %v555
        %v1414 = vadd.f32 %v1412, 1e-05
        %v1415 = vadd.f32 %v1413, 1e-05
        %v1416 = vrsqrt.pop %v1414
        %v1417 = vrsqrt.pop %v1415
        %v1418 = vmul.f32 %v1402, %v1416
        %v1419 = vmul.f32 %v1403, %v1417
        %v1421 = vlaneseq
        %v1422 = vshrl.u32 %v1421, 7
        %v1423 = vsub.s32 0, %v1422
        %v1424 = vrot.slane %v1392, %v1423
        %v1426 = vmul.f32 %v1418, %v1424
        %v1427 = vmul.f32 %v1419, %v1424
        %v1429 = vlaneseq
        %v1430 = vshrl.u32 %v1429, 7
        %v1431 = vsub.s32 0, %v1430
        %v1432 = vrot.slane %v1393, %v1431
        %v1434 = vadd.f32 %v1426, %v1432
        %v1435 = vadd.f32 %v1427, %v1432
        %v1436 = vpack.c.bf16 %v1435, %v1434
        %v1437 = vld [vmem:[#allocation3] sm:$0xf]
        %v1438 = vld [vmem:[#allocation3 + $0x4] sm:$0xf]
        %v1439 = vld [vmem:[#allocation3 + $0x8] sm:$0xf]
        %v1440 = vld [vmem:[#allocation3 + $0xc] sm:$0xf]
        %v1441 = vld [vmem:[#allocation6] sm:$0x1]
        %v1443 = vlaneseq
        %v1444 = vshrl.u32 %v1443, 7
        %v1445 = vsub.s32 0, %v1444
        %v1446 = vrot.slane %v1441, %v1445
        %v1452 = vunpack.c.l.b16 %v1437
        %v1453 = vunpack.c.l.b16 %v1438
        %v1454 = vunpack.c.l.b16 %v1439
        %v1455 = vunpack.c.l.b16 %v1440
        %v1456 = vpack.c.b16 %v1453, %v1452
        %v1457 = vpack.c.b16 %v1455, %v1454
        %v1461 = vsel %vm548, %v1436, 0
        %1463 = vmatprep.subr.bf16.mxu0 0
        %1464 = vmatpush1.bf16.msra.mxu0 0
        %1465 = vmatprep.subr.bf16.mxu0 0
        %1466 = vmatpush1.bf16.msra.mxu0 0
        %1467 = vmatprep.subr.bf16.mxu0 0
        %1468 = vmatpush1.bf16.msra.mxu0 0
        %1469 = vmatprep.subr.bf16.mxu0 0
        %1470 = vmatpush1.bf16.msra.mxu0 0
        %1471 = vmatprep.subr.bf16.mxu0 0
        %1472 = vmatpush1.bf16.msra.mxu0 0
        %1473 = vmatprep.subr.bf16.mxu0 0
        %1474 = vmatpush1.bf16.msra.mxu0 0
        %1475 = vmatprep.subr.bf16.mxu0 0
        %1476 = vmatpush1.bf16.msra.mxu0 %v1457
        %1477 = vmatprep.subr.bf16.mxu0 0
        %1478 = vmatpush1.bf16.msra.mxu0 %v1456
        %1479 = vmatprep.subr.bf16.mxu0 0
        %1480 = vmatpush2.bf16.msra.mxu0 0
        %1481 = vmatprep.subr.bf16.mxu0 0
        %1482 = vmatpush2.bf16.msra.mxu0 0
        %1483 = vmatprep.subr.bf16.mxu0 0
        %1484 = vmatpush2.bf16.msra.mxu0 0
        %1485 = vmatprep.subr.bf16.mxu0 0
        %1486 = vmatpush2.bf16.msra.mxu0 0
        %1487 = vmatprep.subr.bf16.mxu0 0
        %1488 = vmatpush2.bf16.msra.mxu0 0
        %1489 = vmatprep.subr.bf16.mxu0 0
        %1490 = vmatpush2.bf16.msra.mxu0 0
        %1491 = vmatprep.subr.bf16.mxu0 0
        %1492 = vmatpush2.bf16.msra.mxu0 0
        %1493 = vmatprep.subr.bf16.mxu0 0
        %1494 = vmatpush2.bf16.msra.mxu0 0
        %1495 = vmatprep.mubr.bf16.mxu0 0
        %1496 = vmatmul.mubr.bf16.gmra.mxu0 %v1461
        %v1497 = vpop.f32.mrf.mxu0
        %v1498 = vadd.f32 %v1446, %v1497
        %v1499 = vpop.f32.mrf.mxu0
        %v1500 = vpop.f32.mrf.mxu0
        %v1501 = vadd.f32 %v1446, %v1500
        %v1502 = vpop.f32.mrf.mxu0
        %1503 = vdwg.mxu0
        %v1504 = vmul.f32 %v1498, 0.5
        %v1505 = vmul.f32 %v1501, 0.5
        %v1506 = vmul.f32 %v1498, %v1498
        %v1507 = vmul.f32 %v1501, %v1501
        %v1508 = vmul.f32 %v1506, %v1498
        %v1509 = vmul.f32 %v1507, %v1501
        %v1510 = vmul.f32 %v1508, 0.044715
        %v1511 = vmul.f32 %v1509, 0.044715
        %v1512 = vadd.f32 %v1498, %v1510
        %v1513 = vadd.f32 %v1501, %v1511
        %v1514 = vmul.f32 %v1512, 0.7978846
        %v1515 = vmul.f32 %v1513, 0.7978846
        %v1516 = vtanh.pop %v1514
        %v1517 = vtanh.pop %v1515
        %v1518 = vadd.f32 %v1516, 1.0
        %v1519 = vadd.f32 %v1517, 1.0
        %v1520 = vmul.f32 %v1504, %v1518
        %v1521 = vmul.f32 %v1505, %v1519
        %v1522 = vpack.c.bf16 %v1521, %v1520
        %v1523 = vld [vmem:[%s13] sm:$0xf]
        %v1524 = vld [vmem:[%s13 + $0x4] sm:$0xf]
        %v1525 = vld [vmem:[%s13 + $0x8] sm:$0xf]
        %v1526 = vld [vmem:[%s13 + $0xc] sm:$0xf]
        %v1527 = vld [vmem:[%s13 + $0x10] sm:$0xf]
        %v1528 = vld [vmem:[%s13 + $0x14] sm:$0xf]
        %v1529 = vld [vmem:[%s13 + $0x18] sm:$0xf]
        %v1530 = vld [vmem:[%s13 + $0x1c] sm:$0xf]
        %v1531 = vld [vmem:[%s13 + $0x20] sm:$0xf]
        %v1532 = vld [vmem:[%s13 + $0x24] sm:$0xf]
        %v1533 = vld [vmem:[%s13 + $0x28] sm:$0xf]
        %v1534 = vld [vmem:[%s13 + $0x2c] sm:$0xf]
        %v1535 = vld [vmem:[%s13 + $0x30] sm:$0xf]
        %v1536 = vld [vmem:[%s13 + $0x34] sm:$0xf]
        %v1537 = vld [vmem:[%s13 + $0x38] sm:$0xf]
        %v1538 = vld [vmem:[%s13 + $0x3c] sm:$0xf]
        %v1539 = vld [vmem:[%s14] sm:$0x1]
        %v1541 = vlaneseq
        %v1542 = vshrl.u32 %v1541, 7
        %v1543 = vsub.s32 0, %v1542
        %v1544 = vrot.slane %v1539, %v1543
        %v1562 = vunpack.c.l.b16 %v1523
        %v1563 = vunpack.c.l.b16 %v1524
        %v1564 = vunpack.c.l.b16 %v1525
        %v1565 = vunpack.c.l.b16 %v1526
        %v1566 = vunpack.c.l.b16 %v1527
        %v1567 = vunpack.c.l.b16 %v1528
        %v1568 = vunpack.c.l.b16 %v1529
        %v1569 = vunpack.c.l.b16 %v1530
        %v1570 = vunpack.c.l.b16 %v1531
        %v1571 = vunpack.c.l.b16 %v1532
        %v1572 = vunpack.c.l.b16 %v1533
        %v1573 = vunpack.c.l.b16 %v1534
        %v1574 = vunpack.c.l.b16 %v1535
        %v1575 = vunpack.c.l.b16 %v1536
        %v1576 = vunpack.c.l.b16 %v1537
        %v1577 = vunpack.c.l.b16 %v1538
        %v1578 = vpack.c.b16 %v1563, %v1562
        %v1579 = vpack.c.b16 %v1565, %v1564
        %v1580 = vpack.c.b16 %v1567, %v1566
        %v1581 = vpack.c.b16 %v1569, %v1568
        %v1582 = vpack.c.b16 %v1571, %v1570
        %v1583 = vpack.c.b16 %v1573, %v1572
        %v1584 = vpack.c.b16 %v1575, %v1574
        %v1585 = vpack.c.b16 %v1577, %v1576
        %1594 = vmatprep.subr.bf16.mxu0 0
        %1595 = vmatpush1.bf16.msra.mxu0 %v1585
        %1596 = vmatprep.subr.bf16.mxu0 0
        %1597 = vmatpush1.bf16.msra.mxu0 %v1584
        %1598 = vmatprep.subr.bf16.mxu0 0
        %1599 = vmatpush1.bf16.msra.mxu0 %v1583
        %1600 = vmatprep.subr.bf16.mxu0 0
        %1601 = vmatpush1.bf16.msra.mxu0 %v1582
        %1602 = vmatprep.subr.bf16.mxu0 0
        %1603 = vmatpush1.bf16.msra.mxu0 %v1581
        %1604 = vmatprep.subr.bf16.mxu0 0
        %1605 = vmatpush1.bf16.msra.mxu0 %v1580
        %1606 = vmatprep.subr.bf16.mxu0 0
        %1607 = vmatpush1.bf16.msra.mxu0 %v1579
        %1608 = vmatprep.subr.bf16.mxu0 0
        %1609 = vmatpush1.bf16.msra.mxu0 %v1578
        %1610 = vmatprep.subr.bf16.mxu0 0
        %1611 = vmatpush2.bf16.msra.mxu0 0
        %1612 = vmatprep.subr.bf16.mxu0 0
        %1613 = vmatpush2.bf16.msra.mxu0 0
        %1614 = vmatprep.subr.bf16.mxu0 0
        %1615 = vmatpush2.bf16.msra.mxu0 0
        %1616 = vmatprep.subr.bf16.mxu0 0
        %1617 = vmatpush2.bf16.msra.mxu0 0
        %1618 = vmatprep.subr.bf16.mxu0 0
        %1619 = vmatpush2.bf16.msra.mxu0 0
        %1620 = vmatprep.subr.bf16.mxu0 0
        %1621 = vmatpush2.bf16.msra.mxu0 0
        %1622 = vmatprep.subr.bf16.mxu0 0
        %1623 = vmatpush2.bf16.msra.mxu0 0
        %1624 = vmatprep.subr.bf16.mxu0 0
        %1625 = vmatpush2.bf16.msra.mxu0 0
        %1626 = vmatprep.mubr.bf16.mxu0 0
        %1627 = vmatmul.mubr.bf16.gmra.mxu0 %v1522
        %v1628 = vpop.f32.mrf.mxu0
        %v1629 = vadd.f32 %v1544, %v1628
        %v1630 = vpop.f32.mrf.mxu0
        %v1631 = vpop.f32.mrf.mxu0
        %v1632 = vadd.f32 %v1544, %v1631
        %v1633 = vpop.f32.mrf.mxu0
        %1634 = vdwg.mxu0
        %v1635 = vadd.f32 %v1390, %v1629
        %v1636 = vadd.f32 %v1391, %v1632
        %1637 = vst.msk [vmem:[%s529] sm:$0xff] %vm548, %v1635
        %1638 = vst.msk [vmem:[%s529 + $0x8] sm:$0xff] %vm548, %v1636
        %s1639 = sand.u32 %s373, 1
        %s1640 = scalar_lea.sflag [#allocation5], %s1639
        %s1641 = sand.u32 %s373, 1
        %s1642 = smul.addr %s1641, 16
        %s1643 = scalar_lea.vmem [#allocation8], %s1642
        // Predicated region
        $region89: #{tpu_custom_call.1} parent=79 // pred_check
          %p1644 = pneg %p383
        $region90: #{tpu_custom_call.1} parent=79 // pred_check_branch
          %1646 = sbr.rel (%p1644) target = $region92
        $region91: #{tpu_custom_call.1} parent=79 // pred_region
          %s1647 = smul.u32 2, %s36
          %s1649 = ssub.s32 256, 256
          %1650 = vsyncadd %s1640, %s1649
          %s1651 = smul.addr %s35, 2
          %s1652 = sadd.s32 %s1647, %s1651
          %s1653 = smul.addr %s1652, 128
          %s1654 = scalar_lea.hbm %s15, %s1653
          %s1655 = sshll.u32 %s1643, 4
          %s1656 = int_to_ptr.vmem [resolvable:$true] %s1655
          %1661 = dma.vmem_to_hbm [thread:$0]  %s1656, 256, %s1654, %s1640, 128, 128, 8
        $region92: #{tpu_custom_call.1} parent=79 // pred_fallthru
          _
      $region80: #{tpu_custom_call.1} parent=5 // pred_fallthru
        _
      %p1662 = scmp.le.s32.totalorder 2, %s26
      // Predicated region
      $region93: #{tpu_custom_call.1} parent=5 // pred_check
        %p1663 = pneg %p1662
      $region94: #{tpu_custom_call.1} parent=5 // pred_check_branch
        %1665 = sbr.rel (%p1663) target = $region96
      $region95: #{tpu_custom_call.1} parent=5 // pred_region
        %s1666 = ssub.s32 %s26, 2
        // Predicated region
        $region97: #{tpu_custom_call.1} parent=95 // pred_check
          %p1667 = pneg %p389
        $region98: #{tpu_custom_call.1} parent=95 // pred_check_branch
          %1669 = sbr.rel (%p1667) target = $region100
        $region99: #{tpu_custom_call.1} parent=95 // pred_region
          %s1670 = sand.u32 %s374, 1
          %s1671 = scalar_lea.sflag [#allocation5], %s1670
          %s1672 = sand.u32 %s374, 1
          %s1673 = smul.addr %s1672, 16
          %s1674 = scalar_lea.vmem [#allocation8], %s1673
          %1675 = dma.done %s1671, 256
        $region100: #{tpu_custom_call.1} parent=95 // pred_fallthru
          _
      $region96: #{tpu_custom_call.1} parent=5 // pred_fallthru
        _
    $region6: #{tpu_custom_call.1} parent=1 // loop_footer
      %s30 = sadd.s32 1, %s26
    $region7: #{tpu_custom_call.1} parent=1 // loop_footer_branch
      %25 = sbr.rel target = $region3
    $region8: #{tpu_custom_call.1} parent=1 // loop_exit
      _
    %1676 = vsyncpa [#allocation4], 1
    %s1677 = scalar_lea.sflag [#allocation4], 1
    %1678 = vsyncpa %s1677, 1
    %1679 = vsyncpa [#allocation7], 1
    %1680 = vsyncpa [#allocation5], 1
    %s1681 = scalar_lea.sflag [#allocation5], 1
    %1682 = vsyncpa %s1681, 1

// kernel: tpu_custom_call.1
$region0: #{tpu_custom_call.1}
  #allocation0 [shape = 'u32[]', space=smem, size = 0x4, offset = 0x4, fixed_abs, tag = 'smem constant byte address 0x4 - core index']
  #allocation1 [shape = 'u32[144,128]{1,0:T(1,128)}', space=vmem, size = 0x12000, scoped, tag = 'internal scratch']
  #allocation2 [shape = 'f32[16,32]{1,0:T(8,128)}', space=vmem, size = 0x2000, scoped, tag = 'scratch operand']
  %s0 = inlined_call_operand.vmem [shape: f32[2,16,32], index: 0, kind: input, shape index: {}]
  %s1 = inlined_call_operand.vmem [shape: f32[1,32], index: 1, kind: input, shape index: {}]
  %s2 = inlined_call_operand.vmem [shape: f32[1,32], index: 2, kind: input, shape index: {}]
  %s3 = inlined_call_operand.vmem [shape: bf16[32,32], index: 3, kind: input, shape index: {}]
  %s4 = inlined_call_operand.vmem [shape: f32[1,32], index: 4, kind: input, shape index: {}]
  %s5 = inlined_call_operand.vmem [shape: bf16[32,64], index: 5, kind: input, shape index: {}]
  %s6 = inlined_call_operand.vmem [shape: f32[1,64], index: 6, kind: input, shape index: {}]
  %s7 = inlined_call_operand.vmem [shape: bf16[32,32], index: 7, kind: input, shape index: {}]
  %s8 = inlined_call_operand.vmem [shape: f32[1,32], index: 8, kind: input, shape index: {}]
  %s9 = inlined_call_operand.vmem [shape: f32[1,32], index: 9, kind: input, shape index: {}]
  %s10 = inlined_call_operand.vmem [shape: f32[1,32], index: 10, kind: input, shape index: {}]
  %s11 = inlined_call_operand.hbm [shape: bf16[32,128], index: 11, kind: input, shape index: {}]
  %s12 = inlined_call_operand.hbm [shape: f32[1,128], index: 12, kind: input, shape index: {}]
  %s13 = inlined_call_operand.vmem [shape: bf16[128,32], index: 13, kind: input, shape index: {}]
  %s14 = inlined_call_operand.vmem [shape: f32[1,32], index: 14, kind: input, shape index: {}]
  %s15 = inlined_call_operand.hbm [shape: f32[2,16,32], index: 15, kind: output, shape index: {}]
  %s16 = sld [smem:[#allocation0]]
  $region101: #{tpu_custom_call.1} parent=0
    _
  %s18 = ssub.s32 1, %s16
  %s19 = scalar_select 0, %s18, %s16
  $region1: #{tpu_custom_call.1} parent=0
    #allocation3 [shape = 'u8[8192]{0}', space=vmem, size = 0x2000, scoped, tag = 'input window, operand 11, single buffered']
    #allocation4 [shape = 's32[2]{0}', space=sflag, size = 0x8, scoped, tag = 'scoped memory for tpu_custom_call.1']
    #allocation5 [shape = 's32[2]{0}', space=sflag, size = 0x8, scoped, tag = 'scoped memory for tpu_custom_call.1']
    #allocation6 [shape = 'u8[512]{0}', space=vmem, size = 0x400, scoped, tag = 'input window, operand 12, single buffered']
    #allocation7 [shape = 's32[1]{0}', space=sflag, size = 0x4, scoped, tag = 'scoped memory for tpu_custom_call.1']
    #allocation8 [shape = 'u8[16384]{0}', space=vmem, size = 0x4000, scoped, tag = 'output window, operand 0']
    %20 = vsyncpa [#allocation4], 0
    %21 = vsyncpa [#allocation7], 0
    %22 = vsyncpa [#allocation5], 0
    %s23 = scalar_lea.sflag [#allocation5], 1
    %24 = vsyncpa %s23, 0
    loop: start=0, step=1, limit=4
    $region2: #{tpu_custom_call.1} parent=1 // loop_pre_header
      _
    $region3: #{tpu_custom_call.1} parent=1 // loop_header
      %s26 = sphi 0, %s30
      %p27 = scmp.ge.s32.totalorder %s26, 4
      %s33 = sphi 0, %s45
      %s34 = sphi 0, %s41
      %s35 = sphi 0, %s33
      %s36 = sphi 0, %s34
      %s37 = sphi 0, %s35
      %s38 = sphi 0, %s36
      %s48 = sphi 0, %s50
      %s51 = sphi 0, %s48
      %s52 = sphi 0, %s51
      %s68 = sphi 0, %s52
      %s72 = sphi 0, %s72
      %s74 = sphi 0, %s72
      %s75 = sphi 0, %s74
      %s89 = sphi 0, %s75
      %s93 = sphi 0, %s93
      %s95 = sphi 0, %s93
      %s96 = sphi 0, %s95
      %s110 = sphi 0, %s96
      %s114 = sphi 0, %s114
      %s116 = sphi 0, %s114
      %s117 = sphi 0, %s116
      %s131 = sphi 0, %s117
      %s135 = sphi 0, %s135
      %s137 = sphi 0, %s135
      %s138 = sphi 0, %s137
      %s152 = sphi 0, %s138
      %s156 = sphi 0, %s156
      %s158 = sphi 0, %s156
      %s159 = sphi 0, %s158
      %s173 = sphi 0, %s159
      %s177 = sphi 0, %s177
      %s179 = sphi 0, %s177
      %s180 = sphi 0, %s179
      %s194 = sphi 0, %s180
      %s198 = sphi 0, %s198
      %s200 = sphi 0, %s198
      %s201 = sphi 0, %s200
      %s215 = sphi 0, %s201
      %s219 = sphi 0, %s219
      %s221 = sphi 0, %s219
      %s222 = sphi 0, %s221
      %s236 = sphi 0, %s222
      %s240 = sphi 0, %s240
      %s242 = sphi 0, %s240
      %s243 = sphi 0, %s242
      %s257 = sphi 0, %s243
      %s261 = sphi 0, %s261
      %s263 = sphi 0, %s261
      %s264 = sphi 0, %s263
      %s278 = sphi 0, %s264
      %s282 = sphi 0, %s282
      %s284 = sphi 0, %s282
      %s285 = sphi 0, %s284
      %s299 = sphi 0, %s285
      %s303 = sphi 0, %s303
      %s305 = sphi 0, %s303
      %s306 = sphi 0, %s305
      %s320 = sphi 0, %s306
      %s324 = sphi 0, %s324
      %s326 = sphi 0, %s324
      %s327 = sphi 0, %s326
      %s341 = sphi 0, %s327
      %s345 = sphi 0, %s345
      %s347 = sphi 0, %s345
      %s348 = sphi 0, %s347
      %s362 = sphi 0, %s348
      %s370 = sphi 0, %s372
      %s373 = sphi 0, %s370
      %s374 = sphi 0, %s373
      %s390 = sphi 0, %s374
    $region4: #{tpu_custom_call.1} parent=1 // loop_header_branch
      %29 = sbr.rel (%p27) target = $region8
    $region5: #{tpu_custom_call.1} parent=1 // loop_body
      %s31 = ssub.s32 %s26, 1
      %s32 = ssub.s32 %s26, 2
      %s39 = sadd.s32 1, %s34
      %p40 = scmp.ge.s32.totalorder %s39, 1
      %s41 = scalar_select %p40, 0, %s39
      %s42 = sadd.s32 1, %s33
      %s43 = scalar_select %p40, %s42, %s33
      %p44 = scmp.ge.s32.totalorder %s43, 2
      %s45 = scalar_select %p44, 0, %s43
      %s46 = ssub.s32 %s33, %s45
      %p47 = scmp.eq.s32.totalorder %s46, 0
      %s49 = sadd.s32 %s48, 1
      %s50 = scalar_select %p47, %s48, %s49
      %p53 = pneg %p47
      %p54 = scmp.eq.s32.totalorder %s26, 1
      %p55 = por %p53, %p54
      %p56 = scmp.ne.s32.totalorder %s48, %s51
      %p57 = scmp.eq.s32.totalorder %s26, 0
      %p58 = por %p56, %p57
      %p59 = scmp.ne.s32.totalorder %s48, %s51
      %p60 = scmp.eq.s32.totalorder %s31, 1
      %p61 = por %p59, %p60
      %p62 = scmp.ne.s32.totalorder %s51, %s52
      %p63 = scmp.eq.s32.totalorder %s31, 0
      %p64 = por %p62, %p63
      %p65 = scmp.ne.s32.totalorder %s51, %s52
      %p66 = scmp.eq.s32.totalorder %s32, 1
      %p67 = por %p65, %p66
      %p69 = scmp.ne.s32.totalorder %s52, %s68
      %p70 = scmp.eq.s32.totalorder %s32, 0
      %p71 = por %p69, %p70
      %s73 = sadd.s32 %s72, 1
      %p76 = scmp.eq.s32.totalorder %s26, 1
      %p77 = scmp.ne.s32.totalorder %s72, %s74
      %p78 = scmp.eq.s32.totalorder %s26, 0
      %p79 = por %p77, %p78
      %p80 = scmp.ne.s32.totalorder %s72, %s74
      %p81 = scmp.eq.s32.totalorder %s31, 1
      %p82 = por %p80, %p81
      %p83 = scmp.ne.s32.totalorder %s74, %s75
      %p84 = scmp.eq.s32.totalorder %s31, 0
      %p85 = por %p83, %p84
      %p86 = scmp.ne.s32.totalorder %s74, %s75
      %p87 = scmp.eq.s32.totalorder %s32, 1
      %p88 = por %p86, %p87
      %p90 = scmp.ne.s32.totalorder %s75, %s89
      %p91 = scmp.eq.s32.totalorder %s32, 0
      %p92 = por %p90, %p91
      %s94 = sadd.s32 %s93, 1
      %p97 = scmp.eq.s32.totalorder %s26, 1
      %p98 = scmp.ne.s32.totalorder %s93, %s95
      %p99 = scmp.eq.s32.totalorder %s26, 0
      %p100 = por %p98, %p99
      %p101 = scmp.ne.s32.totalorder %s93, %s95
      %p102 = scmp.eq.s32.totalorder %s31, 1
      %p103 = por %p101, %p102
      %p104 = scmp.ne.s32.totalorder %s95, %s96
      %p105 = scmp.eq.s32.totalorder %s31, 0
      %p106 = por %p104, %p105
      %p107 = scmp.ne.s32.totalorder %s95, %s96
      %p108 = scmp.eq.s32.totalorder %s32, 1
      %p109 = por %p107, %p108
      %p111 = scmp.ne.s32.totalorder %s96, %s110
      %p112 = scmp.eq.s32.totalorder %s32, 0
      %p113 = por %p111, %p112
      %s115 = sadd.s32 %s114, 1
      %p118 = scmp.eq.s32.totalorder %s26, 1
      %p119 = scmp.ne.s32.totalorder %s114, %s116
      %p120 = scmp.eq.s32.totalorder %s26, 0
      %p121 = por %p119, %p120
      %p122 = scmp.ne.s32.totalorder %s114, %s116
      %p123 = scmp.eq.s32.totalorder %s31, 1
      %p124 = por %p122, %p123
      %p125 = scmp.ne.s32.totalorder %s116, %s117
      %p126 = scmp.eq.s32.totalorder %s31, 0
      %p127 = por %p125, %p126
      %p128 = scmp.ne.s32.totalorder %s116, %s117
      %p129 = scmp.eq.s32.totalorder %s32, 1
      %p130 = por %p128, %p129
      %p132 = scmp.ne.s32.totalorder %s117, %s131
      %p133 = scmp.eq.s32.totalorder %s32, 0
      %p134 = por %p132, %p133
      %s136 = sadd.s32 %s135, 1
      %p139 = scmp.eq.s32.totalorder %s26, 1
      %p140 = scmp.ne.s32.totalorder %s135, %s137
      %p141 = scmp.eq.s32.totalorder %s26, 0
      %p142 = por %p140, %p141
      %p143 = scmp.ne.s32.totalorder %s135, %s137
      %p144 = scmp.eq.s32.totalorder %s31, 1
      %p145 = por %p143, %p144
      %p146 = scmp.ne.s32.totalorder %s137, %s138
      %p147 = scmp.eq.s32.totalorder %s31, 0
      %p148 = por %p146, %p147
      %p149 = scmp.ne.s32.totalorder %s137, %s138
      %p150 = scmp.eq.s32.totalorder %s32, 1
      %p151 = por %p149, %p150
      %p153 = scmp.ne.s32.totalorder %s138, %s152
      %p154 = scmp.eq.s32.totalorder %s32, 0
      %p155 = por %p153, %p154
      %s157 = sadd.s32 %s156, 1
      %p160 = scmp.eq.s32.totalorder %s26, 1
      %p161 = scmp.ne.s32.totalorder %s156, %s158
      %p162 = scmp.eq.s32.totalorder %s26, 0
      %p163 = por %p161, %p162
      %p164 = scmp.ne.s32.totalorder %s156, %s158
      %p165 = scmp.eq.s32.totalorder %s31, 1
      %p166 = por %p164, %p165
      %p167 = scmp.ne.s32.totalorder %s158, %s159
      %p168 = scmp.eq.s32.totalorder %s31, 0
      %p169 = por %p167, %p168
      %p170 = scmp.ne.s32.totalorder %s158, %s159
      %p171 = scmp.eq.s32.totalorder %s32, 1
      %p172 = por %p170, %p171
      %p174 = scmp.ne.s32.totalorder %s159, %s173
      %p175 = scmp.eq.s32.totalorder %s32, 0
      %p176 = por %p174, %p175
      %s178 = sadd.s32 %s177, 1
      %p181 = scmp.eq.s32.totalorder %s26, 1
      %p182 = scmp.ne.s32.totalorder %s177, %s179
      %p183 = scmp.eq.s32.totalorder %s26, 0
      %p184 = por %p182, %p183
      %p185 = scmp.ne.s32.totalorder %s177, %s179
      %p186 = scmp.eq.s32.totalorder %s31, 1
      %p187 = por %p185, %p186
      %p188 = scmp.ne.s32.totalorder %s179, %s180
      %p189 = scmp.eq.s32.totalorder %s31, 0
      %p190 = por %p188, %p189
      %p191 = scmp.ne.s32.totalorder %s179, %s180
      %p192 = scmp.eq.s32.totalorder %s32, 1
      %p193 = por %p191, %p192
      %p195 = scmp.ne.s32.totalorder %s180, %s194
      %p196 = scmp.eq.s32.totalorder %s32, 0
      %p197 = por %p195, %p196
      %s199 = sadd.s32 %s198, 1
      %p202 = scmp.eq.s32.totalorder %s26, 1
      %p203 = scmp.ne.s32.totalorder %s198, %s200
      %p204 = scmp.eq.s32.totalorder %s26, 0
      %p205 = por %p203, %p204
      %p206 = scmp.ne.s32.totalorder %s198, %s200
      %p207 = scmp.eq.s32.totalorder %s31, 1
      %p208 = por %p206, %p207
      %p209 = scmp.ne.s32.totalorder %s200, %s201
      %p210 = scmp.eq.s32.totalorder %s31, 0
      %p211 = por %p209, %p210
      %p212 = scmp.ne.s32.totalorder %s200, %s201
      %p213 = scmp.eq.s32.totalorder %s32, 1
      %p214 = por %p212, %p213
      %p216 = scmp.ne.s32.totalorder %s201, %s215
      %p217 = scmp.eq.s32.totalorder %s32, 0
      %p218 = por %p216, %p217
      %s220 = sadd.s32 %s219, 1
      %p223 = scmp.eq.s32.totalorder %s26, 1
      %p224 = scmp.ne.s32.totalorder %s219, %s221
      %p225 = scmp.eq.s32.totalorder %s26, 0
      %p226 = por %p224, %p225
      %p227 = scmp.ne.s32.totalorder %s219, %s221
      %p228 = scmp.eq.s32.totalorder %s31, 1
      %p229 = por %p227, %p228
      %p230 = scmp.ne.s32.totalorder %s221, %s222
      %p231 = scmp.eq.s32.totalorder %s31, 0
      %p232 = por %p230, %p231
      %p233 = scmp.ne.s32.totalorder %s221, %s222
      %p234 = scmp.eq.s32.totalorder %s32, 1
      %p235 = por %p233, %p234
      %p237 = scmp.ne.s32.totalorder %s222, %s236
      %p238 = scmp.eq.s32.totalorder %s32, 0
      %p239 = por %p237, %p238
      %s241 = sadd.s32 %s240, 1
      %p244 = scmp.eq.s32.totalorder %s26, 1
      %p245 = scmp.ne.s32.totalorder %s240, %s242
      %p246 = scmp.eq.s32.totalorder %s26, 0
      %p247 = por %p245, %p246
      %p248 = scmp.ne.s32.totalorder %s240, %s242
      %p249 = scmp.eq.s32.totalorder %s31, 1
      %p250 = por %p248, %p249
      %p251 = scmp.ne.s32.totalorder %s242, %s243
      %p252 = scmp.eq.s32.totalorder %s31, 0
      %p253 = por %p251, %p252
      %p254 = scmp.ne.s32.totalorder %s242, %s243
      %p255 = scmp.eq.s32.totalorder %s32, 1
      %p256 = por %p254, %p255
      %p258 = scmp.ne.s32.totalorder %s243, %s257
      %p259 = scmp.eq.s32.totalorder %s32, 0
      %p260 = por %p258, %p259
      %s262 = sadd.s32 %s261, 1
      %p265 = scmp.eq.s32.totalorder %s26, 1
      %p266 = scmp.ne.s32.totalorder %s261, %s263
      %p267 = scmp.eq.s32.totalorder %s26, 0
      %p268 = por %p266, %p267
      %p269 = scmp.ne.s32.totalorder %s261, %s263
      %p270 = scmp.eq.s32.totalorder %s31, 1
      %p271 = por %p269, %p270
      %p272 = scmp.ne.s32.totalorder %s263, %s264
      %p273 = scmp.eq.s32.totalorder %s31, 0
      %p274 = por %p272, %p273
      %p275 = scmp.ne.s32.totalorder %s263, %s264
      %p276 = scmp.eq.s32.totalorder %s32, 1
      %p277 = por %p275, %p276
      %p279 = scmp.ne.s32.totalorder %s264, %s278
      %p280 = scmp.eq.s32.totalorder %s32, 0
      %p281 = por %p279, %p280
      %s283 = sadd.s32 %s282, 1
      %p286 = scmp.eq.s32.totalorder %s26, 1
      %p287 = scmp.ne.s32.totalorder %s282, %s284
      %p288 = scmp.eq.s32.totalorder %s26, 0
      %p289 = por %p287, %p288
      %p290 = scmp.ne.s32.totalorder %s282, %s284
      %p291 = scmp.eq.s32.totalorder %s31, 1
      %p292 = por %p290, %p291
      %p293 = scmp.ne.s32.totalorder %s284, %s285
      %p294 = scmp.eq.s32.totalorder %s31, 0
      %p295 = por %p293, %p294
      %p296 = scmp.ne.s32.totalorder %s284, %s285
      %p297 = scmp.eq.s32.totalorder %s32, 1
      %p298 = por %p296, %p297
      %p300 = scmp.ne.s32.totalorder %s285, %s299
      %p301 = scmp.eq.s32.totalorder %s32, 0
      %p302 = por %p300, %p301
      %s304 = sadd.s32 %s303, 1
      %p307 = scmp.eq.s32.totalorder %s26, 1
      %p308 = scmp.ne.s32.totalorder %s303, %s305
      %p309 = scmp.eq.s32.totalorder %s26, 0
      %p310 = por %p308, %p309
      %p311 = scmp.ne.s32.totalorder %s303, %s305
      %p312 = scmp.eq.s32.totalorder %s31, 1
      %p313 = por %p311, %p312
      %p314 = scmp.ne.s32.totalorder %s305, %s306
      %p315 = scmp.eq.s32.totalorder %s31, 0
      %p316 = por %p314, %p315
      %p317 = scmp.ne.s32.totalorder %s305, %s306
      %p318 = scmp.eq.s32.totalorder %s32, 1
      %p319 = por %p317, %p318
      %p321 = scmp.ne.s32.totalorder %s306, %s320
      %p322 = scmp.eq.s32.totalorder %s32, 0
      %p323 = por %p321, %p322
      %s325 = sadd.s32 %s324, 1
      %p328 = scmp.eq.s32.totalorder %s26, 1
      %p329 = scmp.ne.s32.totalorder %s324, %s326
      %p330 = scmp.eq.s32.totalorder %s26, 0
      %p331 = por %p329, %p330
      %p332 = scmp.ne.s32.totalorder %s324, %s326
      %p333 = scmp.eq.s32.totalorder %s31, 1
      %p334 = por %p332, %p333
      %p335 = scmp.ne.s32.totalorder %s326, %s327
      %p336 = scmp.eq.s32.totalorder %s31, 0
      %p337 = por %p335, %p336
      %p338 = scmp.ne.s32.totalorder %s326, %s327
      %p339 = scmp.eq.s32.totalorder %s32, 1
      %p340 = por %p338, %p339
      %p342 = scmp.ne.s32.totalorder %s327, %s341
      %p343 = scmp.eq.s32.totalorder %s32, 0
      %p344 = por %p342, %p343
      %s346 = sadd.s32 %s345, 1
      %p349 = scmp.eq.s32.totalorder %s26, 1
      %p350 = scmp.ne.s32.totalorder %s345, %s347
      %p351 = scmp.eq.s32.totalorder %s26, 0
      %p352 = por %p350, %p351
      %p353 = scmp.ne.s32.totalorder %s345, %s347
      %p354 = scmp.eq.s32.totalorder %s31, 1
      %p355 = por %p353, %p354
      %p356 = scmp.ne.s32.totalorder %s347, %s348
      %p357 = scmp.eq.s32.totalorder %s31, 0
      %p358 = por %p356, %p357
      %p359 = scmp.ne.s32.totalorder %s347, %s348
      %p360 = scmp.eq.s32.totalorder %s32, 1
      %p361 = por %p359, %p360
      %p363 = scmp.ne.s32.totalorder %s348, %s362
      %p364 = scmp.eq.s32.totalorder %s32, 0
      %p365 = por %p363, %p364
      %s366 = ssub.s32 %s33, %s45
      %s367 = ssub.s32 %s34, %s41
      %s368 = sor.u32 %s366, %s367
      %p369 = scmp.eq.s32.totalorder %s368, 0
      %s371 = sadd.s32 %s370, 1
      %s372 = scalar_select %p369, %s370, %s371
      %p375 = pneg %p369
      %p376 = scmp.eq.s32.totalorder %s26, 1
      %p377 = por %p375, %p376
      %p378 = scmp.ne.s32.totalorder %s370, %s373
      %p379 = scmp.eq.s32.totalorder %s26, 0
      %p380 = por %p378, %p379
      %p381 = scmp.ne.s32.totalorder %s370, %s373
      %p382 = scmp.eq.s32.totalorder %s31, 1
      %p383 = por %p381, %p382
      %p384 = scmp.ne.s32.totalorder %s373, %s374
      %p385 = scmp.eq.s32.totalorder %s31, 0
      %p386 = por %p384, %p385
      %p387 = scmp.ne.s32.totalorder %s373, %s374
      %p388 = scmp.eq.s32.totalorder %s32, 1
      %p389 = por %p387, %p388
      %p391 = scmp.ne.s32.totalorder %s374, %s390
      %p392 = scmp.eq.s32.totalorder %s32, 0
      %p393 = por %p391, %p392
      %p394 = scmp.le.s32.totalorder 1, %s26
      %p395 = scmp.lt.s32.totalorder %s26, 3
      %p396 = pnand %p394, %p395
      %p397 = pneg %p396
      // Predicated region
      $region9: #{tpu_custom_call.1} parent=5 // pred_check
        _
      $region10: #{tpu_custom_call.1} parent=5 // pred_check_branch
        %399 = sbr.rel (%p396) target = $region12
      $region11: #{tpu_custom_call.1} parent=5 // pred_region
        %s400 = ssub.s32 %s26, 1
        // Predicated region
        $region13: #{tpu_custom_call.1} parent=11 // pred_check
          %p401 = pneg %p85
        $region14: #{tpu_custom_call.1} parent=11 // pred_check_branch
          %403 = sbr.rel (%p401) target = $region16
        $region15: #{tpu_custom_call.1} parent=11 // pred_region
          _
        $region16: #{tpu_custom_call.1} parent=11 // pred_fallthru
          _
        // Predicated region
        $region17: #{tpu_custom_call.1} parent=11 // pred_check
          %p404 = pneg %p106
        $region18: #{tpu_custom_call.1} parent=11 // pred_check_branch
          %406 = sbr.rel (%p404) target = $region20
        $region19: #{tpu_custom_call.1} parent=11 // pred_region
          _
        $region20: #{tpu_custom_call.1} parent=11 // pred_fallthru
          _
        // Predicated region
        $region21: #{tpu_custom_call.1} parent=11 // pred_check
          %p407 = pneg %p127
        $region22: #{tpu_custom_call.1} parent=11 // pred_check_branch
          %409 = sbr.rel (%p407) target = $region24
        $region23: #{tpu_custom_call.1} parent=11 // pred_region
          _
        $region24: #{tpu_custom_call.1} parent=11 // pred_fallthru
          _
        // Predicated region
        $region25: #{tpu_custom_call.1} parent=11 // pred_check
          %p410 = pneg %p148
        $region26: #{tpu_custom_call.1} parent=11 // pred_check_branch
          %412 = sbr.rel (%p410) target = $region28
        $region27: #{tpu_custom_call.1} parent=11 // pred_region
          _
        $region28: #{tpu_custom_call.1} parent=11 // pred_fallthru
          _
        // Predicated region
        $region29: #{tpu_custom_call.1} parent=11 // pred_check
          %p413 = pneg %p169
        $region30: #{tpu_custom_call.1} parent=11 // pred_check_branch
          %415 = sbr.rel (%p413) target = $region32
        $region31: #{tpu_custom_call.1} parent=11 // pred_region
          _
        $region32: #{tpu_custom_call.1} parent=11 // pred_fallthru
          _
        // Predicated region
        $region33: #{tpu_custom_call.1} parent=11 // pred_check
          %p416 = pneg %p190
        $region34: #{tpu_custom_call.1} parent=11 // pred_check_branch
          %418 = sbr.rel (%p416) target = $region36
        $region35: #{tpu_custom_call.1} parent=11 // pred_region
          _
        $region36: #{tpu_custom_call.1} parent=11 // pred_fallthru
          _
        // Predicated region
        $region37: #{tpu_custom_call.1} parent=11 // pred_check
          %p419 = pneg %p211
        $region38: #{tpu_custom_call.1} parent=11 // pred_check_branch
          %421 = sbr.rel (%p419) target = $region40
        $region39: #{tpu_custom_call.1} parent=11 // pred_region
          _
        $region40: #{tpu_custom_call.1} parent=11 // pred_fallthru
          _
        // Predicated region
        $region41: #{tpu_custom_call.1} parent=11 // pred_check
          %p422 = pneg %p232
        $region42: #{tpu_custom_call.1} parent=11 // pred_check_branch
          %424 = sbr.rel (%p422) target = $region44
        $region43: #{tpu_custom_call.1} parent=11 // pred_region
          _
        $region44: #{tpu_custom_call.1} parent=11 // pred_fallthru
          _
        // Predicated region
        $region45: #{tpu_custom_call.1} parent=11 // pred_check
          %p425 = pneg %p253
        $region46: #{tpu_custom_call.1} parent=11 // pred_check_branch
          %427 = sbr.rel (%p425) target = $region48
        $region47: #{tpu_custom_call.1} parent=11 // pred_region
          _
        $region48: #{tpu_custom_call.1} parent=11 // pred_fallthru
          _
        // Predicated region
        $region49: #{tpu_custom_call.1} parent=11 // pred_check
          %p428 = pneg %p274
        $region50: #{tpu_custom_call.1} parent=11 // pred_check_branch
          %430 = sbr.rel (%p428) target = $region52
        $region51: #{tpu_custom_call.1} parent=11 // pred_region
          _
        $region52: #{tpu_custom_call.1} parent=11 // pred_fallthru
          _
        // Predicated region
        $region53: #{tpu_custom_call.1} parent=11 // pred_check
          %p431 = pneg %p295
        $region54: #{tpu_custom_call.1} parent=11 // pred_check_branch
          %433 = sbr.rel (%p431) target = $region56
        $region55: #{tpu_custom_call.1} parent=11 // pred_region
          %s435 = ssub.s32 256, 256
          %436 = vsyncadd [#allocation4], %s435
          %s437 = sshll.u32 [#allocation3], 4
          %s438 = int_to_ptr.vmem [resolvable:$true] %s437
          %443 = dma.hbm_to_vmem [thread:$0]  %s11, 256, %s438, [#allocation4], 64, 64, 4
        $region56: #{tpu_custom_call.1} parent=11 // pred_fallthru
          _
        // Predicated region
        $region57: #{tpu_custom_call.1} parent=11 // pred_check
          %p444 = pneg %p316
        $region58: #{tpu_custom_call.1} parent=11 // pred_check_branch
          %446 = sbr.rel (%p444) target = $region60
        $region59: #{tpu_custom_call.1} parent=11 // pred_region
          %s448 = ssub.s32 16, 16
          %449 = vsyncadd [#allocation7], %s448
          %s451 = sshll.u32 [#allocation6], 4
          %s452 = int_to_ptr.vmem [resolvable:$true] %s451
          %454 = dma.hbm_to_vmem [thread:$0]  %s12, 16, %s452, [#allocation7]
        $region60: #{tpu_custom_call.1} parent=11 // pred_fallthru
          _
        // Predicated region
        $region61: #{tpu_custom_call.1} parent=11 // pred_check
          %p455 = pneg %p337
        $region62: #{tpu_custom_call.1} parent=11 // pred_check_branch
          %457 = sbr.rel (%p455) target = $region64
        $region63: #{tpu_custom_call.1} parent=11 // pred_region
          _
        $region64: #{tpu_custom_call.1} parent=11 // pred_fallthru
          _
        // Predicated region
        $region65: #{tpu_custom_call.1} parent=11 // pred_check
          %p458 = pneg %p358
        $region66: #{tpu_custom_call.1} parent=11 // pred_check_branch
          %460 = sbr.rel (%p458) target = $region68
        $region67: #{tpu_custom_call.1} parent=11 // pred_region
          _
        $region68: #{tpu_custom_call.1} parent=11 // pred_fallthru
          _
      $region12: #{tpu_custom_call.1} parent=5 // pred_fallthru
        _
      %p461 = scmp.lt.s32.totalorder %s26, 2
      // Predicated region
      $region69: #{tpu_custom_call.1} parent=5 // pred_check
        %p462 = pneg %p461
      $region70: #{tpu_custom_call.1} parent=5 // pred_check_branch
        %464 = sbr.rel (%p462) target = $region72
      $region71: #{tpu_custom_call.1} parent=5 // pred_region
        // Predicated region
        $region73: #{tpu_custom_call.1} parent=71 // pred_check
          %p465 = pneg %p58
        $region74: #{tpu_custom_call.1} parent=71 // pred_check_branch
          %467 = sbr.rel (%p465) target = $region76
        $region75: #{tpu_custom_call.1} parent=71 // pred_region
          %p468 = scmp.lt.s32.totalorder %s33, 1
          %s469 = scalar_select %p468, %s33, 1
          %s470 = smul.addr %s469, 2
          %s471 = smul.addr %s470, 8
          %s472 = scalar_lea.vmem %s0, %s471
        $region76: #{tpu_custom_call.1} parent=71 // pred_fallthru
          _
      $region72: #{tpu_custom_call.1} parent=5 // pred_fallthru
        _
      %p473 = scmp.le.s32.totalorder 1, %s26
      %p474 = scmp.lt.s32.totalorder %s26, 3
      %p475 = pnand %p473, %p474
      %p476 = pneg %p475
      // Predicated region
      $region77: #{tpu_custom_call.1} parent=5 // pred_check
        _
      $region78: #{tpu_custom_call.1} parent=5 // pred_check_branch
        %478 = sbr.rel (%p475) target = $region80
      $region79: #{tpu_custom_call.1} parent=5 // pred_region
        %s479 = ssub.s32 %s26, 1
        // Predicated region
        $region81: #{tpu_custom_call.1} parent=79 // pred_check
          %p480 = pneg %p295
        $region82: #{tpu_custom_call.1} parent=79 // pred_check_branch
          %482 = sbr.rel (%p480) target = $region84
        $region83: #{tpu_custom_call.1} parent=79 // pred_region
          %483 = dma.done [#allocation4], 256
        $region84: #{tpu_custom_call.1} parent=79 // pred_fallthru
          _
        // Predicated region
        $region85: #{tpu_custom_call.1} parent=79 // pred_check
          %p484 = pneg %p316
        $region86: #{tpu_custom_call.1} parent=79 // pred_check_branch
          %486 = sbr.rel (%p484) target = $region88
        $region87: #{tpu_custom_call.1} parent=79 // pred_region
          %487 = dma.done [#allocation7], 16
        $region88: #{tpu_custom_call.1} parent=79 // pred_fallthru
          _
        %p488 = scmp.lt.s32.totalorder %s35, 1
        %s489 = scalar_select %p488, %s35, 1
        %s490 = smul.addr %s489, 2
        %s491 = smul.addr %s490, 8
        %s492 = scalar_lea.vmem %s0, %s491
        %p493 = pneg %p64
        %p494 = pneg %p61
        %p495 = pneg %p85
        %p496 = pneg %p82
        %p497 = pneg %p106
        %p498 = pneg %p103
        %p499 = pneg %p127
        %p500 = pneg %p124
        %p501 = pneg %p148
        %p502 = pneg %p145
        %p503 = pneg %p169
        %p504 = pneg %p166
        %p505 = pneg %p190
        %p506 = pneg %p187
        %p507 = pneg %p211
        %p508 = pneg %p208
        %p509 = pneg %p232
        %p510 = pneg %p229
        %p511 = pneg %p253
        %p512 = pneg %p250
        %p513 = pneg %p274
        %p514 = pneg %p271
        %p515 = pneg %p295
        %p516 = pneg %p292
        %p517 = pneg %p316
        %p518 = pneg %p313
        %p519 = pneg %p337
        %p520 = pneg %p334
        %p521 = pneg %p358
        %p522 = pneg %p355
        %p523 = pneg %p386
        %p524 = pneg %p383
        %s525 = sand.u32 %s373, 1
        %s526 = scalar_lea.sflag [#allocation5], %s525
        %s527 = sand.u32 %s373, 1
        %s528 = smul.addr %s527, 16
        %s529 = scalar_lea.vmem [#allocation8], %s528
        %p530 = scmp.lt.s32.totalorder %s35, 1
        %s531 = scalar_select %p530, %s35, 1
        %s532 = smul.addr %s531, 2
        %s533 = smul.addr %s532, 8
        %s534 = scalar_lea.vmem %s0, %s533
        %s535 = smul.u32 2, %s36
        %s537 = smul.u32 %s36, 16
        %s538 = ssub.s32 %s537, 8
        %p539 = scmp.gt.s32.totalorder %s538, 0
        %s540 = scalar_select %p539, %s538, 0
        %p541 = scmp.lt.s32.totalorder %s540, 0
        %s542 = scalar_select %p541, %s540, 0
        %s543 = scalar_lea.vmem %s534, %s537
        %v544 = vld [vmem:[%s543] sm:$0xff]
        %v545 = vld [vmem:[%s543 + $0x8] sm:$0xff]
        %v546 = vld [vmem:[%s1] sm:$0x1]
        %v547 = vld [vmem:[%s2] sm:$0x1]
        %vm548 = vcmask 261120
        %v549 = vsel %vm548, %v544, 0.0
        %550 = vadd.xlane.f32.xlu0 %v549
        %v551 = vpop.xlane.xlu0 %550
        %v552 = vsel %vm548, %v545, 0.0
        %553 = vadd.xlane.f32.xlu0 %v552
        %v554 = vpop.xlane.xlu0 %553
        %v555 = vrcp.pop 32.0
        %v556 = vmul.f32 %v551, %v555
        %v557 = vmul.f32 %v554, %v555
        %v558 = vsub.f32 %v544, %v556
        %v559 = vsub.f32 %v545, %v557
        %v560 = vmul.f32 %v558, %v558
        %v561 = vmul.f32 %v559, %v559
        %v562 = vsel %vm548, %v560, 0.0
        %563 = vadd.xlane.f32.xlu0 %v562
        %v564 = vpop.xlane.xlu0 %563
        %v565 = vsel %vm548, %v561, 0.0
        %566 = vadd.xlane.f32.xlu0 %v565
        %v567 = vpop.xlane.xlu0 %566
        %v568 = vmul.f32 %v564, %v555
        %v569 = vmul.f32 %v567, %v555
        %v570 = vadd.f32 %v568, 1e-05
        %v571 = vadd.f32 %v569, 1e-05
        %v572 = vrsqrt.pop %v570
        %v573 = vrsqrt.pop %v571
        %v574 = vmul.f32 %v558, %v572
        %v575 = vmul.f32 %v559, %v573
        %v577 = vlaneseq
        %v578 = vshrl.u32 %v577, 7
        %v579 = vsub.s32 0, %v578
        %v580 = vrot.slane %v546, %v579
        %v582 = vmul.f32 %v574, %v580
        %v583 = vmul.f32 %v575, %v580
        %v585 = vlaneseq
        %v586 = vshrl.u32 %v585, 7
        %v587 = vsub.s32 0, %v586
        %v588 = vrot.slane %v547, %v587
        %v590 = vadd.f32 %v582, %v588
        %v591 = vadd.f32 %v583, %v588
        %v592 = vpack.c.bf16 %v591, %v590
        %v593 = vld [vmem:[%s3] sm:$0xf]
        %v594 = vld [vmem:[%s3 + $0x4] sm:$0xf]
        %v595 = vld [vmem:[%s3 + $0x8] sm:$0xf]
        %v596 = vld [vmem:[%s3 + $0xc] sm:$0xf]
        %v597 = vld [vmem:[%s4] sm:$0x1]
        %v599 = vlaneseq
        %v600 = vshrl.u32 %v599, 7
        %v601 = vsub.s32 0, %v600
        %v602 = vrot.slane %v597, %v601
        %v608 = vunpack.c.l.b16 %v593
        %v609 = vunpack.c.l.b16 %v594
        %v610 = vunpack.c.l.b16 %v595
        %v611 = vunpack.c.l.b16 %v596
        %v612 = vpack.c.b16 %v609, %v608
        %v613 = vpack.c.b16 %v611, %v610
        %v617 = vsel %vm548, %v592, 0
        %619 = vmatprep.subr.bf16.mxu0 0
        %620 = vmatpush1.bf16.msra.mxu0 0
        %621 = vmatprep.subr.bf16.mxu0 0
        %622 = vmatpush1.bf16.msra.mxu0 0
        %623 = vmatprep.subr.bf16.mxu0 0
        %624 = vmatpush1.bf16.msra.mxu0 0
        %625 = vmatprep.subr.bf16.mxu0 0
        %626 = vmatpush1.bf16.msra.mxu0 0
        %627 = vmatprep.subr.bf16.mxu0 0
        %628 = vmatpush1.bf16.msra.mxu0 0
        %629 = vmatprep.subr.bf16.mxu0 0
        %630 = vmatpush1.bf16.msra.mxu0 0
        %631 = vmatprep.subr.bf16.mxu0 0
        %632 = vmatpush1.bf16.msra.mxu0 %v613
        %633 = vmatprep.subr.bf16.mxu0 0
        %634 = vmatpush1.bf16.msra.mxu0 %v612
        %635 = vmatprep.subr.bf16.mxu0 0
        %636 = vmatpush2.bf16.msra.mxu0 0
        %637 = vmatprep.subr.bf16.mxu0 0
        %638 = vmatpush2.bf16.msra.mxu0 0
        %639 = vmatprep.subr.bf16.mxu0 0
        %640 = vmatpush2.bf16.msra.mxu0 0
        %641 = vmatprep.subr.bf16.mxu0 0
        %642 = vmatpush2.bf16.msra.mxu0 0
        %643 = vmatprep.subr.bf16.mxu0 0
        %644 = vmatpush2.bf16.msra.mxu0 0
        %645 = vmatprep.subr.bf16.mxu0 0
        %646 = vmatpush2.bf16.msra.mxu0 0
        %647 = vmatprep.subr.bf16.mxu0 0
        %648 = vmatpush2.bf16.msra.mxu0 0
        %649 = vmatprep.subr.bf16.mxu0 0
        %650 = vmatpush2.bf16.msra.mxu0 0
        %651 = vmatprep.mubr.bf16.mxu0 0
        %652 = vmatmul.mubr.bf16.gmra.mxu0 %v617
        %v653 = vpop.f32.mrf.mxu0
        %v654 = vadd.f32 %v602, %v653
        %v655 = vpop.f32.mrf.mxu0
        %v656 = vpop.f32.mrf.mxu0
        %v657 = vadd.f32 %v602, %v656
        %v658 = vpop.f32.mrf.mxu0
        %659 = vdwg.mxu0
        %v660 = vmul.f32 %v654, 0.35355338
        %v661 = vmul.f32 %v657, 0.35355338
        %v662 = vpack.c.bf16 %v661, %v660
        %s663 = scalar_lea.vmem %s534, %s542
        %v664 = vld [vmem:[%s663] sm:$0xff]
        %v665 = vld [vmem:[%s663 + $0x8] sm:$0xff]
        %v666 = vsel %vm548, %v664, 0.0
        %667 = vadd.xlane.f32.xlu0 %v666
        %v668 = vpop.xlane.xlu0 %667
        %v669 = vsel %vm548, %v665, 0.0
        %670 = vadd.xlane.f32.xlu0 %v669
        %v671 = vpop.xlane.xlu0 %670
        %v672 = vmul.f32 %v668, %v555
        %v673 = vmul.f32 %v671, %v555
        %v674 = vsub.f32 %v664, %v672
        %v675 = vsub.f32 %v665, %v673
        %v676 = vmul.f32 %v674, %v674
        %v677 = vmul.f32 %v675, %v675
        %v678 = vsel %vm548, %v676, 0.0
        %679 = vadd.xlane.f32.xlu0 %v678
        %v680 = vpop.xlane.xlu0 %679
        %v681 = vsel %vm548, %v677, 0.0
        %682 = vadd.xlane.f32.xlu0 %v681
        %v683 = vpop.xlane.xlu0 %682
        %v684 = vmul.f32 %v680, %v555
        %v685 = vmul.f32 %v683, %v555
        %v686 = vadd.f32 %v684, 1e-05
        %v687 = vadd.f32 %v685, 1e-05
        %v688 = vrsqrt.pop %v686
        %v689 = vrsqrt.pop %v687
        %v690 = vmul.f32 %v674, %v688
        %v691 = vmul.f32 %v675, %v689
        %v692 = vmul.f32 %v690, %v580
        %v693 = vmul.f32 %v691, %v580
        %v694 = vadd.f32 %v692, %v588
        %v695 = vadd.f32 %v693, %v588
        %v696 = vpack.c.bf16 %v695, %v694
        %v697 = vld [vmem:[%s5] sm:$0xf]
        %v698 = vld [vmem:[%s5 + $0x4] sm:$0xf]
        %v699 = vld [vmem:[%s5 + $0x8] sm:$0xf]
        %v700 = vld [vmem:[%s5 + $0xc] sm:$0xf]
        %v701 = vld [vmem:[%s6] sm:$0x1]
        %v703 = vlaneseq
        %v704 = vshrl.u32 %v703, 7
        %v705 = vsub.s32 0, %v704
        %v706 = vrot.slane %v701, %v705
        %v712 = vunpack.c.l.b16 %v697
        %v713 = vunpack.c.l.b16 %v698
        %v714 = vunpack.c.l.b16 %v699
        %v715 = vunpack.c.l.b16 %v700
        %v716 = vpack.c.b16 %v713, %v712
        %v717 = vpack.c.b16 %v715, %v714
        %v721 = vsel %vm548, %v696, 0
        %723 = vmatprep.subr.bf16.mxu0 0
        %724 = vmatpush1.bf16.msra.mxu0 0
        %725 = vmatprep.subr.bf16.mxu0 0
        %726 = vmatpush1.bf16.msra.mxu0 0
        %727 = vmatprep.subr.bf16.mxu0 0
        %728 = vmatpush1.bf16.msra.mxu0 0
        %729 = vmatprep.subr.bf16.mxu0 0
        %730 = vmatpush1.bf16.msra.mxu0 0
        %731 = vmatprep.subr.bf16.mxu0 0
        %732 = vmatpush1.bf16.msra.mxu0 0
        %733 = vmatprep.subr.bf16.mxu0 0
        %734 = vmatpush1.bf16.msra.mxu0 0
        %735 = vmatprep.subr.bf16.mxu0 0
        %736 = vmatpush1.bf16.msra.mxu0 %v717
        %737 = vmatprep.subr.bf16.mxu0 0
        %738 = vmatpush1.bf16.msra.mxu0 %v716
        %739 = vmatprep.subr.bf16.mxu0 0
        %740 = vmatpush2.bf16.msra.mxu0 0
        %741 = vmatprep.subr.bf16.mxu0 0
        %742 = vmatpush2.bf16.msra.mxu0 0
        %743 = vmatprep.subr.bf16.mxu0 0
        %744 = vmatpush2.bf16.msra.mxu0 0
        %745 = vmatprep.subr.bf16.mxu0 0
        %746 = vmatpush2.bf16.msra.mxu0 0
        %747 = vmatprep.subr.bf16.mxu0 0
        %748 = vmatpush2.bf16.msra.mxu0 0
        %749 = vmatprep.subr.bf16.mxu0 0
        %750 = vmatpush2.bf16.msra.mxu0 0
        %751 = vmatprep.subr.bf16.mxu0 0
        %752 = vmatpush2.bf16.msra.mxu0 0
        %753 = vmatprep.subr.bf16.mxu0 0
        %754 = vmatpush2.bf16.msra.mxu0 0
        %755 = vmatprep.mubr.bf16.mxu0 0
        %756 = vmatmul.mubr.bf16.gmra.mxu0 %v721
        %v757 = vpop.f32.mrf.mxu0
        %v758 = vadd.f32 %v706, %v757
        %v759 = vpop.f32.mrf.mxu0
        %v760 = vpop.f32.mrf.mxu0
        %v761 = vadd.f32 %v706, %v760
        %v762 = vpop.f32.mrf.mxu0
        %763 = vdwg.mxu0
        %v764 = vpack.c.bf16 %v761, %v758
        %v765 = vlaneseq
        %v766 = vshrl.u32 %v765, 7
        %v767 = vadd.s32 %v766, 8
        %v768 = vstv %s537
        %v769 = vadd.s32 %v766, %v768
        %v770 = vadd.s32 %v767, %v768
        %v771 = vlaneseq
        %v772 = vand.u32 %v771, 127
        %v773 = vstv %s542
        %v774 = vadd.s32 %v772, %v773
        %v775 = vsub.s32 %v769, 3
        %v776 = vsub.s32 %v770, 3
        %vm777 = vcmp.gt.s32.totalorder %v775, 0
        %v778 = vsel %vm777, %v775, 0
        %vm779 = vcmp.gt.s32.totalorder %v776, 0
        %v780 = vsel %vm779, %v776, 0
        %vm781 = vcmp.lt.s32.totalorder %v778, 9
        %v782 = vsel %vm781, %v778, 9
        %vm783 = vcmp.lt.s32.totalorder %v780, 9
        %v784 = vsel %vm783, %v780, 9
        %vm785 = vcmp.ge.s32.totalorder %v774, %v782
        %vm786 = vcmp.ge.s32.totalorder %v774, %v784
        %v787 = vadd.s32 %v782, 7
        %v788 = vadd.s32 %v784, 7
        %vm789 = vcmp.lt.s32.totalorder %v774, %v787
        %vm790 = vcmp.lt.s32.totalorder %v774, %v788
        %vm791 = vmand %vm785, %vm789
        %vm792 = vmand %vm786, %vm790
        %vm793 = vcmask 64512
        %v795 = vsel %vm793, %v662, 0
        %v798 = vsel %vm793, %v764, 0
        %800 = vmatprep.subr.bf16.mxu0 0
        %801 = vmatpush1.bf16.xpose.msra.mxu0 0
        %802 = vmatprep.subr.bf16.mxu0 0
        %803 = vmatpush1.bf16.xpose.msra.mxu0 0
        %804 = vmatprep.subr.bf16.mxu0 0
        %805 = vmatpush1.bf16.xpose.msra.mxu0 0
        %806 = vmatprep.subr.bf16.mxu0 0
        %807 = vmatpush1.bf16.xpose.msra.mxu0 0
        %808 = vmatprep.subr.bf16.mxu0 0
        %809 = vmatpush1.bf16.xpose.msra.mxu0 0
        %810 = vmatprep.subr.bf16.mxu0 0
        %811 = vmatpush1.bf16.xpose.msra.mxu0 0
        %812 = vmatprep.subr.bf16.mxu0 0
        %813 = vmatpush1.bf16.xpose.msra.mxu0 0
        %814 = vmatprep.subr.bf16.mxu0 0
        %815 = vmatpush1.bf16.xpose.msra.mxu0 %v798
        %816 = vmatprep.subr.bf16.mxu0 0
        %817 = vmatpush2.bf16.xpose.msra.mxu0 0
        %818 = vmatprep.subr.bf16.mxu0 0
        %819 = vmatpush2.bf16.xpose.msra.mxu0 0
        %820 = vmatprep.subr.bf16.mxu0 0
        %821 = vmatpush2.bf16.xpose.msra.mxu0 0
        %822 = vmatprep.subr.bf16.mxu0 0
        %823 = vmatpush2.bf16.xpose.msra.mxu0 0
        %824 = vmatprep.subr.bf16.mxu0 0
        %825 = vmatpush2.bf16.xpose.msra.mxu0 0
        %826 = vmatprep.subr.bf16.mxu0 0
        %827 = vmatpush2.bf16.xpose.msra.mxu0 0
        %828 = vmatprep.subr.bf16.mxu0 0
        %829 = vmatpush2.bf16.xpose.msra.mxu0 0
        %830 = vmatprep.subr.bf16.mxu0 0
        %831 = vmatpush2.bf16.xpose.msra.mxu0 0
        %832 = vmatprep.mubr.bf16.mxu0 0
        %833 = vmatmul.mubr.bf16.gmra.mxu0 %v795
        %v834 = vpop.f32.mrf.mxu0
        %v835 = vadd.f32 0.0, %v834
        %v836 = vpop.f32.mrf.mxu0
        %v837 = vpop.f32.mrf.mxu0
        %v838 = vadd.f32 0.0, %v837
        %v839 = vpop.f32.mrf.mxu0
        %840 = vdwg.mxu0
        %v841 = vsel %vm791, %v835, -1e+30
        %v842 = vsel %vm792, %v838, -1e+30
        %vm843 = vcmask 130048
        %v844 = vsel %vm843, %v841, -inf
        %845 = vmax.xlane.f32.xlu0 %v844
        %v846 = vpop.xlane.xlu0 %845
        %v847 = vsel %vm843, %v842, -inf
        %848 = vmax.xlane.f32.xlu0 %v847
        %v849 = vpop.xlane.xlu0 %848
        %v850 = vsub.f32 %v841, %v846
        %v851 = vsub.f32 %v842, %v849
        %v852 = vmul.f32 %v850, 1.442695
        %v853 = vpow.pop %v852
        %v854 = vmul.f32 %v851, 1.442695
        %v855 = vpow.pop %v854
        %v856 = vsel %vm843, %v853, 0.0
        %857 = vadd.xlane.f32.xlu0 %v856
        %v858 = vpop.xlane.xlu0 %857
        %v859 = vsel %vm843, %v855, 0.0
        %860 = vadd.xlane.f32.xlu0 %v859
        %v861 = vpop.xlane.xlu0 %860
        %v862 = vrcp.pop %v858
        %v863 = vrcp.pop %v861
        %v864 = vmul.f32 %v853, %v862
        %v865 = vmul.f32 %v855, %v863
        %v866 = vpack.c.bf16 %v865, %v864
        %868 = vrot.lane.b32.xlu0 %v764, 96
        %v869 = vpop.permute.xlu0 %868
        %v872 = vsel %vm843, %v866, 0
        %874 = vmatprep.subr.bf16.mxu0 0
        %875 = vmatpush1.bf16.msra.mxu0 0
        %876 = vmatprep.subr.bf16.mxu0 0
        %877 = vmatpush1.bf16.msra.mxu0 0
        %878 = vmatprep.subr.bf16.mxu0 0
        %879 = vmatpush1.bf16.msra.mxu0 0
        %880 = vmatprep.subr.bf16.mxu0 0
        %881 = vmatpush1.bf16.msra.mxu0 0
        %882 = vmatprep.subr.bf16.mxu0 0
        %883 = vmatpush1.bf16.msra.mxu0 0
        %884 = vmatprep.subr.bf16.mxu0 0
        %885 = vmatpush1.bf16.msra.mxu0 0
        %886 = vmatprep.subr.bf16.mxu0 0
        %887 = vmatpush1.bf16.msra.mxu0 0
        %888 = vmatprep.subr.bf16.mxu0 0
        %889 = vmatpush1.bf16.msra.mxu0 %v869
        %890 = vmatprep.subr.bf16.mxu0 0
        %891 = vmatpush2.bf16.msra.mxu0 0
        %892 = vmatprep.subr.bf16.mxu0 0
        %893 = vmatpush2.bf16.msra.mxu0 0
        %894 = vmatprep.subr.bf16.mxu0 0
        %895 = vmatpush2.bf16.msra.mxu0 0
        %896 = vmatprep.subr.bf16.mxu0 0
        %897 = vmatpush2.bf16.msra.mxu0 0
        %898 = vmatprep.subr.bf16.mxu0 0
        %899 = vmatpush2.bf16.msra.mxu0 0
        %900 = vmatprep.subr.bf16.mxu0 0
        %901 = vmatpush2.bf16.msra.mxu0 0
        %902 = vmatprep.subr.bf16.mxu0 0
        %903 = vmatpush2.bf16.msra.mxu0 0
        %904 = vmatprep.subr.bf16.mxu0 0
        %905 = vmatpush2.bf16.msra.mxu0 0
        %906 = vmatprep.mubr.bf16.mxu0 0
        %907 = vmatmul.mubr.bf16.gmra.mxu0 %v872
        %v908 = vpop.f32.mrf.mxu0
        %v909 = vadd.f32 0.0, %v908
        %v910 = vpop.f32.mrf.mxu0
        %v911 = vpop.f32.mrf.mxu0
        %v912 = vadd.f32 0.0, %v911
        %v913 = vpop.f32.mrf.mxu0
        %914 = vdwg.mxu0
        %915 = vst.msk [vmem:[#allocation2] sm:$0xff] %vm793, %v909
        %916 = vst.msk [vmem:[#allocation2 + $0x8] sm:$0xff] %vm793, %v912
        %918 = vrot.lane.b32.xlu0 %v662, 120
        %v919 = vpop.permute.xlu0 %918
        %920 = vrot.lane.b32.xlu0 %v764, 120
        %v921 = vpop.permute.xlu0 %920
        %v923 = vsel %vm793, %v919, 0
        %v926 = vsel %vm793, %v921, 0
        %928 = vmatprep.subr.bf16.mxu0 0
        %929 = vmatpush1.bf16.xpose.msra.mxu0 0
        %930 = vmatprep.subr.bf16.mxu0 0
        %931 = vmatpush1.bf16.xpose.msra.mxu0 0
        %932 = vmatprep.subr.bf16.mxu0 0
        %933 = vmatpush1.bf16.xpose.msra.mxu0 0
        %934 = vmatprep.subr.bf16.mxu0 0
        %935 = vmatpush1.bf16.xpose.msra.mxu0 0
        %936 = vmatprep.subr.bf16.mxu0 0
        %937 = vmatpush1.bf16.xpose.msra.mxu0 0
        %938 = vmatprep.subr.bf16.mxu0 0
        %939 = vmatpush1.bf16.xpose.msra.mxu0 0
        %940 = vmatprep.subr.bf16.mxu0 0
        %941 = vmatpush1.bf16.xpose.msra.mxu0 0
        %942 = vmatprep.subr.bf16.mxu0 0
        %943 = vmatpush1.bf16.xpose.msra.mxu0 %v926
        %944 = vmatprep.subr.bf16.mxu0 0
        %945 = vmatpush2.bf16.xpose.msra.mxu0 0
        %946 = vmatprep.subr.bf16.mxu0 0
        %947 = vmatpush2.bf16.xpose.msra.mxu0 0
        %948 = vmatprep.subr.bf16.mxu0 0
        %949 = vmatpush2.bf16.xpose.msra.mxu0 0
        %950 = vmatprep.subr.bf16.mxu0 0
        %951 = vmatpush2.bf16.xpose.msra.mxu0 0
        %952 = vmatprep.subr.bf16.mxu0 0
        %953 = vmatpush2.bf16.xpose.msra.mxu0 0
        %954 = vmatprep.subr.bf16.mxu0 0
        %955 = vmatpush2.bf16.xpose.msra.mxu0 0
        %956 = vmatprep.subr.bf16.mxu0 0
        %957 = vmatpush2.bf16.xpose.msra.mxu0 0
        %958 = vmatprep.subr.bf16.mxu0 0
        %959 = vmatpush2.bf16.xpose.msra.mxu0 0
        %960 = vmatprep.mubr.bf16.mxu0 0
        %961 = vmatmul.mubr.bf16.gmra.mxu0 %v923
        %v962 = vpop.f32.mrf.mxu0
        %v963 = vadd.f32 0.0, %v962
        %v964 = vpop.f32.mrf.mxu0
        %v965 = vpop.f32.mrf.mxu0
        %v966 = vadd.f32 0.0, %v965
        %v967 = vpop.f32.mrf.mxu0
        %968 = vdwg.mxu0
        %v969 = vsel %vm791, %v963, -1e+30
        %v970 = vsel %vm792, %v966, -1e+30
        %v971 = vsel %vm843, %v969, -inf
        %972 = vmax.xlane.f32.xlu0 %v971
        %v973 = vpop.xlane.xlu0 %972
        %v974 = vsel %vm843, %v970, -inf
        %975 = vmax.xlane.f32.xlu0 %v974
        %v976 = vpop.xlane.xlu0 %975
        %v977 = vsub.f32 %v969, %v973
        %v978 = vsub.f32 %v970, %v976
        %v979 = vmul.f32 %v977, 1.442695
        %v980 = vpow.pop %v979
        %v981 = vmul.f32 %v978, 1.442695
        %v982 = vpow.pop %v981
        %v983 = vsel %vm843, %v980, 0.0
        %984 = vadd.xlane.f32.xlu0 %v983
        %v985 = vpop.xlane.xlu0 %984
        %v986 = vsel %vm843, %v982, 0.0
        %987 = vadd.xlane.f32.xlu0 %v986
        %v988 = vpop.xlane.xlu0 %987
        %v989 = vrcp.pop %v985
        %v990 = vrcp.pop %v988
        %v991 = vmul.f32 %v980, %v989
        %v992 = vmul.f32 %v982, %v990
        %v993 = vpack.c.bf16 %v992, %v991
        %994 = vrot.lane.b32.xlu0 %v764, 88
        %v995 = vpop.permute.xlu0 %994
        %v998 = vsel %vm843, %v993, 0
        %1000 = vmatprep.subr.bf16.mxu0 0
        %1001 = vmatpush1.bf16.msra.mxu0 0
        %1002 = vmatprep.subr.bf16.mxu0 0
        %1003 = vmatpush1.bf16.msra.mxu0 0
        %1004 = vmatprep.subr.bf16.mxu0 0
        %1005 = vmatpush1.bf16.msra.mxu0 0
        %1006 = vmatprep.subr.bf16.mxu0 0
        %1007 = vmatpush1.bf16.msra.mxu0 0
        %1008 = vmatprep.subr.bf16.mxu0 0
        %1009 = vmatpush1.bf16.msra.mxu0 0
        %1010 = vmatprep.subr.bf16.mxu0 0
        %1011 = vmatpush1.bf16.msra.mxu0 0
        %1012 = vmatprep.subr.bf16.mxu0 0
        %1013 = vmatpush1.bf16.msra.mxu0 0
        %1014 = vmatprep.subr.bf16.mxu0 0
        %1015 = vmatpush1.bf16.msra.mxu0 %v995
        %1016 = vmatprep.subr.bf16.mxu0 0
        %1017 = vmatpush2.bf16.msra.mxu0 0
        %1018 = vmatprep.subr.bf16.mxu0 0
        %1019 = vmatpush2.bf16.msra.mxu0 0
        %1020 = vmatprep.subr.bf16.mxu0 0
        %1021 = vmatpush2.bf16.msra.mxu0 0
        %1022 = vmatprep.subr.bf16.mxu0 0
        %1023 = vmatpush2.bf16.msra.mxu0 0
        %1024 = vmatprep.subr.bf16.mxu0 0
        %1025 = vmatpush2.bf16.msra.mxu0 0
        %1026 = vmatprep.subr.bf16.mxu0 0
        %1027 = vmatpush2.bf16.msra.mxu0 0
        %1028 = vmatprep.subr.bf16.mxu0 0
        %1029 = vmatpush2.bf16.msra.mxu0 0
        %1030 = vmatprep.subr.bf16.mxu0 0
        %1031 = vmatpush2.bf16.msra.mxu0 0
        %1032 = vmatprep.mubr.bf16.mxu0 0
        %1033 = vmatmul.mubr.bf16.gmra.mxu0 %v998
        %v1034 = vpop.f32.mrf.mxu0
        %v1035 = vadd.f32 0.0, %v1034
        %v1036 = vpop.f32.mrf.mxu0
        %v1037 = vpop.f32.mrf.mxu0
        %v1038 = vadd.f32 0.0, %v1037
        %v1039 = vpop.f32.mrf.mxu0
        %1040 = vdwg.mxu0
        %1043 = vrot.lane.b32.xlu0 %v1035, 8
        %v1044 = vpop.permute.xlu0 %1043
        %1045 = vrot.lane.b32.xlu0 %v1038, 8
        %v1046 = vpop.permute.xlu0 %1045
        %vm1049 = vcmask 130112
        %1050 = vst.msk [vmem:[#allocation2] sm:$0xff] %vm1049, %v1044
        %1051 = vst.msk [vmem:[#allocation2 + $0x8] sm:$0xff] %vm1049, %v1046
        %1052 = vrot.lane.b32.xlu0 %v662, 112
        %v1053 = vpop.permute.xlu0 %1052
        %1054 = vrot.lane.b32.xlu0 %v764, 112
        %v1055 = vpop.permute.xlu0 %1054
        %v1057 = vsel %vm793, %v1053, 0
        %v1060 = vsel %vm793, %v1055, 0
        %1062 = vmatprep.subr.bf16.mxu0 0
        %1063 = vmatpush1.bf16.xpose.msra.mxu0 0
        %1064 = vmatprep.subr.bf16.mxu0 0
        %1065 = vmatpush1.bf16.xpose.msra.mxu0 0
        %1066 = vmatprep.subr.bf16.mxu0 0
        %1067 = vmatpush1.bf16.xpose.msra.mxu0 0
        %1068 = vmatprep.subr.bf16.mxu0 0
        %1069 = vmatpush1.bf16.xpose.msra.mxu0 0
        %1070 = vmatprep.subr.bf16.mxu0 0
        %1071 = vmatpush1.bf16.xpose.msra.mxu0 0
        %1072 = vmatprep.subr.bf16.mxu0 0
        %1073 = vmatpush1.bf16.xpose.msra.mxu0 0
        %1074 = vmatprep.subr.bf16.mxu0 0
        %1075 = vmatpush1.bf16.xpose.msra.mxu0 0
        %1076 = vmatprep.subr.bf16.mxu0 0
        %1077 = vmatpush1.bf16.xpose.msra.mxu0 %v1060
        %1078 = vmatprep.subr.bf16.mxu0 0
        %1079 = vmatpush2.bf16.xpose.msra.mxu0 0
        %1080 = vmatprep.subr.bf16.mxu0 0
        %1081 = vmatpush2.bf16.xpose.msra.mxu0 0
        %1082 = vmatprep.subr.bf16.mxu0 0
        %1083 = vmatpush2.bf16.xpose.msra.mxu0 0
        %1084 = vmatprep.subr.bf16.mxu0 0
        %1085 = vmatpush2.bf16.xpose.msra.mxu0 0
        %1086 = vmatprep.subr.bf16.mxu0 0
        %1087 = vmatpush2.bf16.xpose.msra.mxu0 0
        %1088 = vmatprep.subr.bf16.mxu0 0
        %1089 = vmatpush2.bf16.xpose.msra.mxu0 0
        %1090 = vmatprep.subr.bf16.mxu0 0
        %1091 = vmatpush2.bf16.xpose.msra.mxu0 0
        %1092 = vmatprep.subr.bf16.mxu0 0
        %1093 = vmatpush2.bf16.xpose.msra.mxu0 0
        %1094 = vmatprep.mubr.bf16.mxu0 0
        %1095 = vmatmul.mubr.bf16.gmra.mxu0 %v1057
        %v1096 = vpop.f32.mrf.mxu0
        %v1097 = vadd.f32 0.0, %v1096
        %v1098 = vpop.f32.mrf.mxu0
        %v1099 = vpop.f32.mrf.mxu0
        %v1100 = vadd.f32 0.0, %v1099
        %v1101 = vpop.f32.mrf.mxu0
        %1102 = vdwg.mxu0
        %v1103 = vsel %vm791, %v1097, -1e+30
        %v1104 = vsel %vm792, %v1100, -1e+30
        %v1105 = vsel %vm843, %v1103, -inf
        %1106 = vmax.xlane.f32.xlu0 %v1105
        %v1107 = vpop.xlane.xlu0 %1106
        %v1108 = vsel %vm843, %v1104, -inf
        %1109 = vmax.xlane.f32.xlu0 %v1108
        %v1110 = vpop.xlane.xlu0 %1109
        %v1111 = vsub.f32 %v1103, %v1107
        %v1112 = vsub.f32 %v1104, %v1110
        %v1113 = vmul.f32 %v1111, 1.442695
        %v1114 = vpow.pop %v1113
        %v1115 = vmul.f32 %v1112, 1.442695
        %v1116 = vpow.pop %v1115
        %v1117 = vsel %vm843, %v1114, 0.0
        %1118 = vadd.xlane.f32.xlu0 %v1117
        %v1119 = vpop.xlane.xlu0 %1118
        %v1120 = vsel %vm843, %v1116, 0.0
        %1121 = vadd.xlane.f32.xlu0 %v1120
        %v1122 = vpop.xlane.xlu0 %1121
        %v1123 = vrcp.pop %v1119
        %v1124 = vrcp.pop %v1122
        %v1125 = vmul.f32 %v1114, %v1123
        %v1126 = vmul.f32 %v1116, %v1124
        %v1127 = vpack.c.bf16 %v1126, %v1125
        %1128 = vrot.lane.b32.xlu0 %v764, 80
        %v1129 = vpop.permute.xlu0 %1128
        %v1132 = vsel %vm843, %v1127, 0
        %1134 = vmatprep.subr.bf16.mxu0 0
        %1135 = vmatpush1.bf16.msra.mxu0 0
        %1136 = vmatprep.subr.bf16.mxu0 0
        %1137 = vmatpush1.bf16.msra.mxu0 0
        %1138 = vmatprep.subr.bf16.mxu0 0
        %1139 = vmatpush1.bf16.msra.mxu0 0
        %1140 = vmatprep.subr.bf16.mxu0 0
        %1141 = vmatpush1.bf16.msra.mxu0 0
        %1142 = vmatprep.subr.bf16.mxu0 0
        %1143 = vmatpush1.bf16.msra.mxu0 0
        %1144 = vmatprep.subr.bf16.mxu0 0
        %1145 = vmatpush1.bf16.msra.mxu0 0
        %1146 = vmatprep.subr.bf16.mxu0 0
        %1147 = vmatpush1.bf16.msra.mxu0 0
        %1148 = vmatprep.subr.bf16.mxu0 0
        %1149 = vmatpush1.bf16.msra.mxu0 %v1129
        %1150 = vmatprep.subr.bf16.mxu0 0
        %1151 = vmatpush2.bf16.msra.mxu0 0
        %1152 = vmatprep.subr.bf16.mxu0 0
        %1153 = vmatpush2.bf16.msra.mxu0 0
        %1154 = vmatprep.subr.bf16.mxu0 0
        %1155 = vmatpush2.bf16.msra.mxu0 0
        %1156 = vmatprep.subr.bf16.mxu0 0
        %1157 = vmatpush2.bf16.msra.mxu0 0
        %1158 = vmatprep.subr.bf16.mxu0 0
        %1159 = vmatpush2.bf16.msra.mxu0 0
        %1160 = vmatprep.subr.bf16.mxu0 0
        %1161 = vmatpush2.bf16.msra.mxu0 0
        %1162 = vmatprep.subr.bf16.mxu0 0
        %1163 = vmatpush2.bf16.msra.mxu0 0
        %1164 = vmatprep.subr.bf16.mxu0 0
        %1165 = vmatpush2.bf16.msra.mxu0 0
        %1166 = vmatprep.mubr.bf16.mxu0 0
        %1167 = vmatmul.mubr.bf16.gmra.mxu0 %v1132
        %v1168 = vpop.f32.mrf.mxu0
        %v1169 = vadd.f32 0.0, %v1168
        %v1170 = vpop.f32.mrf.mxu0
        %v1171 = vpop.f32.mrf.mxu0
        %v1172 = vadd.f32 0.0, %v1171
        %v1173 = vpop.f32.mrf.mxu0
        %1174 = vdwg.mxu0
        %1177 = vrot.lane.b32.xlu0 %v1169, 16
        %v1178 = vpop.permute.xlu0 %1177
        %1179 = vrot.lane.b32.xlu0 %v1172, 16
        %v1180 = vpop.permute.xlu0 %1179
        %vm1183 = vcmask 195712
        %1184 = vst.msk [vmem:[#allocation2] sm:$0xff] %vm1183, %v1178
        %1185 = vst.msk [vmem:[#allocation2 + $0x8] sm:$0xff] %vm1183, %v1180
        %1186 = vrot.lane.b32.xlu0 %v662, 104
        %v1187 = vpop.permute.xlu0 %1186
        %1188 = vrot.lane.b32.xlu0 %v764, 104
        %v1189 = vpop.permute.xlu0 %1188
        %v1191 = vsel %vm793, %v1187, 0
        %v1194 = vsel %vm793, %v1189, 0
        %1196 = vmatprep.subr.bf16.mxu0 0
        %1197 = vmatpush1.bf16.xpose.msra.mxu0 0
        %1198 = vmatprep.subr.bf16.mxu0 0
        %1199 = vmatpush1.bf16.xpose.msra.mxu0 0
        %1200 = vmatprep.subr.bf16.mxu0 0
        %1201 = vmatpush1.bf16.xpose.msra.mxu0 0
        %1202 = vmatprep.subr.bf16.mxu0 0
        %1203 = vmatpush1.bf16.xpose.msra.mxu0 0
        %1204 = vmatprep.subr.bf16.mxu0 0
        %1205 = vmatpush1.bf16.xpose.msra.mxu0 0
        %1206 = vmatprep.subr.bf16.mxu0 0
        %1207 = vmatpush1.bf16.xpose.msra.mxu0 0
        %1208 = vmatprep.subr.bf16.mxu0 0
        %1209 = vmatpush1.bf16.xpose.msra.mxu0 0
        %1210 = vmatprep.subr.bf16.mxu0 0
        %1211 = vmatpush1.bf16.xpose.msra.mxu0 %v1194
        %1212 = vmatprep.subr.bf16.mxu0 0
        %1213 = vmatpush2.bf16.xpose.msra.mxu0 0
        %1214 = vmatprep.subr.bf16.mxu0 0
        %1215 = vmatpush2.bf16.xpose.msra.mxu0 0
        %1216 = vmatprep.subr.bf16.mxu0 0
        %1217 = vmatpush2.bf16.xpose.msra.mxu0 0
        %1218 = vmatprep.subr.bf16.mxu0 0
        %1219 = vmatpush2.bf16.xpose.msra.mxu0 0
        %1220 = vmatprep.subr.bf16.mxu0 0
        %1221 = vmatpush2.bf16.xpose.msra.mxu0 0
        %1222 = vmatprep.subr.bf16.mxu0 0
        %1223 = vmatpush2.bf16.xpose.msra.mxu0 0
        %1224 = vmatprep.subr.bf16.mxu0 0
        %1225 = vmatpush2.bf16.xpose.msra.mxu0 0
        %1226 = vmatprep.subr.bf16.mxu0 0
        %1227 = vmatpush2.bf16.xpose.msra.mxu0 0
        %1228 = vmatprep.mubr.bf16.mxu0 0
        %1229 = vmatmul.mubr.bf16.gmra.mxu0 %v1191
        %v1230 = vpop.f32.mrf.mxu0
        %v1231 = vadd.f32 0.0, %v1230
        %v1232 = vpop.f32.mrf.mxu0
        %v1233 = vpop.f32.mrf.mxu0
        %v1234 = vadd.f32 0.0, %v1233
        %v1235 = vpop.f32.mrf.mxu0
        %1236 = vdwg.mxu0
        %v1237 = vsel %vm791, %v1231, -1e+30
        %v1238 = vsel %vm792, %v1234, -1e+30
        %v1239 = vsel %vm843, %v1237, -inf
        %1240 = vmax.xlane.f32.xlu0 %v1239
        %v1241 = vpop.xlane.xlu0 %1240
        %v1242 = vsel %vm843, %v1238, -inf
        %1243 = vmax.xlane.f32.xlu0 %v1242
        %v1244 = vpop.xlane.xlu0 %1243
        %v1245 = vsub.f32 %v1237, %v1241
        %v1246 = vsub.f32 %v1238, %v1244
        %v1247 = vmul.f32 %v1245, 1.442695
        %v1248 = vpow.pop %v1247
        %v1249 = vmul.f32 %v1246, 1.442695
        %v1250 = vpow.pop %v1249
        %v1251 = vsel %vm843, %v1248, 0.0
        %1252 = vadd.xlane.f32.xlu0 %v1251
        %v1253 = vpop.xlane.xlu0 %1252
        %v1254 = vsel %vm843, %v1250, 0.0
        %1255 = vadd.xlane.f32.xlu0 %v1254
        %v1256 = vpop.xlane.xlu0 %1255
        %v1257 = vrcp.pop %v1253
        %v1258 = vrcp.pop %v1256
        %v1259 = vmul.f32 %v1248, %v1257
        %v1260 = vmul.f32 %v1250, %v1258
        %v1261 = vpack.c.bf16 %v1260, %v1259
        %1262 = vrot.lane.b32.xlu0 %v764, 72
        %v1263 = vpop.permute.xlu0 %1262
        %v1266 = vsel %vm843, %v1261, 0
        %1268 = vmatprep.subr.bf16.mxu0 0
        %1269 = vmatpush1.bf16.msra.mxu0 0
        %1270 = vmatprep.subr.bf16.mxu0 0
        %1271 = vmatpush1.bf16.msra.mxu0 0
        %1272 = vmatprep.subr.bf16.mxu0 0
        %1273 = vmatpush1.bf16.msra.mxu0 0
        %1274 = vmatprep.subr.bf16.mxu0 0
        %1275 = vmatpush1.bf16.msra.mxu0 0
        %1276 = vmatprep.subr.bf16.mxu0 0
        %1277 = vmatpush1.bf16.msra.mxu0 0
        %1278 = vmatprep.subr.bf16.mxu0 0
        %1279 = vmatpush1.bf16.msra.mxu0 0
        %1280 = vmatprep.subr.bf16.mxu0 0
        %1281 = vmatpush1.bf16.msra.mxu0 0
        %1282 = vmatprep.subr.bf16.mxu0 0
        %1283 = vmatpush1.bf16.msra.mxu0 %v1263
        %1284 = vmatprep.subr.bf16.mxu0 0
        %1285 = vmatpush2.bf16.msra.mxu0 0
        %1286 = vmatprep.subr.bf16.mxu0 0
        %1287 = vmatpush2.bf16.msra.mxu0 0
        %1288 = vmatprep.subr.bf16.mxu0 0
        %1289 = vmatpush2.bf16.msra.mxu0 0
        %1290 = vmatprep.subr.bf16.mxu0 0
        %1291 = vmatpush2.bf16.msra.mxu0 0
        %1292 = vmatprep.subr.bf16.mxu0 0
        %1293 = vmatpush2.bf16.msra.mxu0 0
        %1294 = vmatprep.subr.bf16.mxu0 0
        %1295 = vmatpush2.bf16.msra.mxu0 0
        %1296 = vmatprep.subr.bf16.mxu0 0
        %1297 = vmatpush2.bf16.msra.mxu0 0
        %1298 = vmatprep.subr.bf16.mxu0 0
        %1299 = vmatpush2.bf16.msra.mxu0 0
        %1300 = vmatprep.mubr.bf16.mxu0 0
        %1301 = vmatmul.mubr.bf16.gmra.mxu0 %v1266
        %v1302 = vpop.f32.mrf.mxu0
        %v1303 = vadd.f32 0.0, %v1302
        %v1304 = vpop.f32.mrf.mxu0
        %v1305 = vpop.f32.mrf.mxu0
        %v1306 = vadd.f32 0.0, %v1305
        %v1307 = vpop.f32.mrf.mxu0
        %1308 = vdwg.mxu0
        %1311 = vrot.lane.b32.xlu0 %v1303, 24
        %v1312 = vpop.permute.xlu0 %1311
        %1313 = vrot.lane.b32.xlu0 %v1306, 24
        %v1314 = vpop.permute.xlu0 %1313
        %vm1317 = vcmask 261312
        %1318 = vst.msk [vmem:[#allocation2] sm:$0xff] %vm1317, %v1312
        %1319 = vst.msk [vmem:[#allocation2 + $0x8] sm:$0xff] %vm1317, %v1314
        %v1320 = vld [vmem:[#allocation2] sm:$0xff]
        %v1321 = vld [vmem:[#allocation2 + $0x8] sm:$0xff]
        %v1322 = vpack.c.bf16 %v1321, %v1320
        %v1323 = vld [vmem:[%s7] sm:$0xf]
        %v1324 = vld [vmem:[%s7 + $0x4] sm:$0xf]
        %v1325 = vld [vmem:[%s7 + $0x8] sm:$0xf]
        %v1326 = vld [vmem:[%s7 + $0xc] sm:$0xf]
        %v1327 = vld [vmem:[%s8] sm:$0x1]
        %v1329 = vlaneseq
        %v1330 = vshrl.u32 %v1329, 7
        %v1331 = vsub.s32 0, %v1330
        %v1332 = vrot.slane %v1327, %v1331
        %v1338 = vunpack.c.l.b16 %v1323
        %v1339 = vunpack.c.l.b16 %v1324
        %v1340 = vunpack.c.l.b16 %v1325
        %v1341 = vunpack.c.l.b16 %v1326
        %v1342 = vpack.c.b16 %v1339, %v1338
        %v1343 = vpack.c.b16 %v1341, %v1340
        %v1347 = vsel %vm548, %v1322, 0
        %1349 = vmatprep.subr.bf16.mxu0 0
        %1350 = vmatpush1.bf16.msra.mxu0 0
        %1351 = vmatprep.subr.bf16.mxu0 0
        %1352 = vmatpush1.bf16.msra.mxu0 0
        %1353 = vmatprep.subr.bf16.mxu0 0
        %1354 = vmatpush1.bf16.msra.mxu0 0
        %1355 = vmatprep.subr.bf16.mxu0 0
        %1356 = vmatpush1.bf16.msra.mxu0 0
        %1357 = vmatprep.subr.bf16.mxu0 0
        %1358 = vmatpush1.bf16.msra.mxu0 0
        %1359 = vmatprep.subr.bf16.mxu0 0
        %1360 = vmatpush1.bf16.msra.mxu0 0
        %1361 = vmatprep.subr.bf16.mxu0 0
        %1362 = vmatpush1.bf16.msra.mxu0 %v1343
        %1363 = vmatprep.subr.bf16.mxu0 0
        %1364 = vmatpush1.bf16.msra.mxu0 %v1342
        %1365 = vmatprep.subr.bf16.mxu0 0
        %1366 = vmatpush2.bf16.msra.mxu0 0
        %1367 = vmatprep.subr.bf16.mxu0 0
        %1368 = vmatpush2.bf16.msra.mxu0 0
        %1369 = vmatprep.subr.bf16.mxu0 0
        %1370 = vmatpush2.bf16.msra.mxu0 0
        %1371 = vmatprep.subr.bf16.mxu0 0
        %1372 = vmatpush2.bf16.msra.mxu0 0
        %1373 = vmatprep.subr.bf16.mxu0 0
        %1374 = vmatpush2.bf16.msra.mxu0 0
        %1375 = vmatprep.subr.bf16.mxu0 0
        %1376 = vmatpush2.bf16.msra.mxu0 0
        %1377 = vmatprep.subr.bf16.mxu0 0
        %1378 = vmatpush2.bf16.msra.mxu0 0
        %1379 = vmatprep.subr.bf16.mxu0 0
        %1380 = vmatpush2.bf16.msra.mxu0 0
        %1381 = vmatprep.mubr.bf16.mxu0 0
        %1382 = vmatmul.mubr.bf16.gmra.mxu0 %v1347
        %v1383 = vpop.f32.mrf.mxu0
        %v1384 = vadd.f32 %v1332, %v1383
        %v1385 = vpop.f32.mrf.mxu0
        %v1386 = vpop.f32.mrf.mxu0
        %v1387 = vadd.f32 %v1332, %v1386
        %v1388 = vpop.f32.mrf.mxu0
        %1389 = vdwg.mxu0
        %v1390 = vadd.f32 %v544, %v1384
        %v1391 = vadd.f32 %v545, %v1387
        %v1392 = vld [vmem:[%s9] sm:$0x1]
        %v1393 = vld [vmem:[%s10] sm:$0x1]
        %v1394 = vsel %vm548, %v1390, 0.0
        %1395 = vadd.xlane.f32.xlu0 %v1394
        %v1396 = vpop.xlane.xlu0 %1395
        %v1397 = vsel %vm548, %v1391, 0.0
        %1398 = vadd.xlane.f32.xlu0 %v1397
        %v1399 = vpop.xlane.xlu0 %1398
        %v1400 = vmul.f32 %v1396, %v555
        %v1401 = vmul.f32 %v1399, %v555
        %v1402 = vsub.f32 %v1390, %v1400
        %v1403 = vsub.f32 %v1391, %v1401
        %v1404 = vmul.f32 %v1402, %v1402
        %v1405 = vmul.f32 %v1403, %v1403
        %v1406 = vsel %vm548, %v1404, 0.0
        %1407 = vadd.xlane.f32.xlu0 %v1406
        %v1408 = vpop.xlane.xlu0 %1407
        %v1409 = vsel %vm548, %v1405, 0.0
        %1410 = vadd.xlane.f32.xlu0 %v1409
        %v1411 = vpop.xlane.xlu0 %1410
        %v1412 = vmul.f32 %v1408, %v555
        %v1413 = vmul.f32 %v1411, %v555
        %v1414 = vadd.f32 %v1412, 1e-05
        %v1415 = vadd.f32 %v1413, 1e-05
        %v1416 = vrsqrt.pop %v1414
        %v1417 = vrsqrt.pop %v1415
        %v1418 = vmul.f32 %v1402, %v1416
        %v1419 = vmul.f32 %v1403, %v1417
        %v1421 = vlaneseq
        %v1422 = vshrl.u32 %v1421, 7
        %v1423 = vsub.s32 0, %v1422
        %v1424 = vrot.slane %v1392, %v1423
        %v1426 = vmul.f32 %v1418, %v1424
        %v1427 = vmul.f32 %v1419, %v1424
        %v1429 = vlaneseq
        %v1430 = vshrl.u32 %v1429, 7
        %v1431 = vsub.s32 0, %v1430
        %v1432 = vrot.slane %v1393, %v1431
        %v1434 = vadd.f32 %v1426, %v1432
        %v1435 = vadd.f32 %v1427, %v1432
        %v1436 = vpack.c.bf16 %v1435, %v1434
        %v1437 = vld [vmem:[#allocation3] sm:$0xf]
        %v1438 = vld [vmem:[#allocation3 + $0x4] sm:$0xf]
        %v1439 = vld [vmem:[#allocation3 + $0x8] sm:$0xf]
        %v1440 = vld [vmem:[#allocation3 + $0xc] sm:$0xf]
        %v1441 = vld [vmem:[#allocation6] sm:$0x1]
        %v1443 = vlaneseq
        %v1444 = vshrl.u32 %v1443, 7
        %v1445 = vsub.s32 0, %v1444
        %v1446 = vrot.slane %v1441, %v1445
        %v1452 = vunpack.c.l.b16 %v1437
        %v1453 = vunpack.c.l.b16 %v1438
        %v1454 = vunpack.c.l.b16 %v1439
        %v1455 = vunpack.c.l.b16 %v1440
        %v1456 = vpack.c.b16 %v1453, %v1452
        %v1457 = vpack.c.b16 %v1455, %v1454
        %v1461 = vsel %vm548, %v1436, 0
        %1463 = vmatprep.subr.bf16.mxu0 0
        %1464 = vmatpush1.bf16.msra.mxu0 0
        %1465 = vmatprep.subr.bf16.mxu0 0
        %1466 = vmatpush1.bf16.msra.mxu0 0
        %1467 = vmatprep.subr.bf16.mxu0 0
        %1468 = vmatpush1.bf16.msra.mxu0 0
        %1469 = vmatprep.subr.bf16.mxu0 0
        %1470 = vmatpush1.bf16.msra.mxu0 0
        %1471 = vmatprep.subr.bf16.mxu0 0
        %1472 = vmatpush1.bf16.msra.mxu0 0
        %1473 = vmatprep.subr.bf16.mxu0 0
        %1474 = vmatpush1.bf16.msra.mxu0 0
        %1475 = vmatprep.subr.bf16.mxu0 0
        %1476 = vmatpush1.bf16.msra.mxu0 %v1457
        %1477 = vmatprep.subr.bf16.mxu0 0
        %1478 = vmatpush1.bf16.msra.mxu0 %v1456
        %1479 = vmatprep.subr.bf16.mxu0 0
        %1480 = vmatpush2.bf16.msra.mxu0 0
        %1481 = vmatprep.subr.bf16.mxu0 0
        %1482 = vmatpush2.bf16.msra.mxu0 0
        %1483 = vmatprep.subr.bf16.mxu0 0
        %1484 = vmatpush2.bf16.msra.mxu0 0
        %1485 = vmatprep.subr.bf16.mxu0 0
        %1486 = vmatpush2.bf16.msra.mxu0 0
        %1487 = vmatprep.subr.bf16.mxu0 0
        %1488 = vmatpush2.bf16.msra.mxu0 0
        %1489 = vmatprep.subr.bf16.mxu0 0
        %1490 = vmatpush2.bf16.msra.mxu0 0
        %1491 = vmatprep.subr.bf16.mxu0 0
        %1492 = vmatpush2.bf16.msra.mxu0 0
        %1493 = vmatprep.subr.bf16.mxu0 0
        %1494 = vmatpush2.bf16.msra.mxu0 0
        %1495 = vmatprep.mubr.bf16.mxu0 0
        %1496 = vmatmul.mubr.bf16.gmra.mxu0 %v1461
        %v1497 = vpop.f32.mrf.mxu0
        %v1498 = vadd.f32 %v1446, %v1497
        %v1499 = vpop.f32.mrf.mxu0
        %v1500 = vpop.f32.mrf.mxu0
        %v1501 = vadd.f32 %v1446, %v1500
        %v1502 = vpop.f32.mrf.mxu0
        %1503 = vdwg.mxu0
        %v1504 = vmul.f32 %v1498, 0.5
        %v1505 = vmul.f32 %v1501, 0.5
        %v1506 = vmul.f32 %v1498, %v1498
        %v1507 = vmul.f32 %v1501, %v1501
        %v1508 = vmul.f32 %v1506, %v1498
        %v1509 = vmul.f32 %v1507, %v1501
        %v1510 = vmul.f32 %v1508, 0.044715
        %v1511 = vmul.f32 %v1509, 0.044715
        %v1512 = vadd.f32 %v1498, %v1510
        %v1513 = vadd.f32 %v1501, %v1511
        %v1514 = vmul.f32 %v1512, 0.7978846
        %v1515 = vmul.f32 %v1513, 0.7978846
        %v1516 = vtanh.pop %v1514
        %v1517 = vtanh.pop %v1515
        %v1518 = vadd.f32 %v1516, 1.0
        %v1519 = vadd.f32 %v1517, 1.0
        %v1520 = vmul.f32 %v1504, %v1518
        %v1521 = vmul.f32 %v1505, %v1519
        %v1522 = vpack.c.bf16 %v1521, %v1520
        %v1523 = vld [vmem:[%s13] sm:$0xf]
        %v1524 = vld [vmem:[%s13 + $0x4] sm:$0xf]
        %v1525 = vld [vmem:[%s13 + $0x8] sm:$0xf]
        %v1526 = vld [vmem:[%s13 + $0xc] sm:$0xf]
        %v1527 = vld [vmem:[%s13 + $0x10] sm:$0xf]
        %v1528 = vld [vmem:[%s13 + $0x14] sm:$0xf]
        %v1529 = vld [vmem:[%s13 + $0x18] sm:$0xf]
        %v1530 = vld [vmem:[%s13 + $0x1c] sm:$0xf]
        %v1531 = vld [vmem:[%s13 + $0x20] sm:$0xf]
        %v1532 = vld [vmem:[%s13 + $0x24] sm:$0xf]
        %v1533 = vld [vmem:[%s13 + $0x28] sm:$0xf]
        %v1534 = vld [vmem:[%s13 + $0x2c] sm:$0xf]
        %v1535 = vld [vmem:[%s13 + $0x30] sm:$0xf]
        %v1536 = vld [vmem:[%s13 + $0x34] sm:$0xf]
        %v1537 = vld [vmem:[%s13 + $0x38] sm:$0xf]
        %v1538 = vld [vmem:[%s13 + $0x3c] sm:$0xf]
        %v1539 = vld [vmem:[%s14] sm:$0x1]
        %v1541 = vlaneseq
        %v1542 = vshrl.u32 %v1541, 7
        %v1543 = vsub.s32 0, %v1542
        %v1544 = vrot.slane %v1539, %v1543
        %v1562 = vunpack.c.l.b16 %v1523
        %v1563 = vunpack.c.l.b16 %v1524
        %v1564 = vunpack.c.l.b16 %v1525
        %v1565 = vunpack.c.l.b16 %v1526
        %v1566 = vunpack.c.l.b16 %v1527
        %v1567 = vunpack.c.l.b16 %v1528
        %v1568 = vunpack.c.l.b16 %v1529
        %v1569 = vunpack.c.l.b16 %v1530
        %v1570 = vunpack.c.l.b16 %v1531
        %v1571 = vunpack.c.l.b16 %v1532
        %v1572 = vunpack.c.l.b16 %v1533
        %v1573 = vunpack.c.l.b16 %v1534
        %v1574 = vunpack.c.l.b16 %v1535
        %v1575 = vunpack.c.l.b16 %v1536
        %v1576 = vunpack.c.l.b16 %v1537
        %v1577 = vunpack.c.l.b16 %v1538
        %v1578 = vpack.c.b16 %v1563, %v1562
        %v1579 = vpack.c.b16 %v1565, %v1564
        %v1580 = vpack.c.b16 %v1567, %v1566
        %v1581 = vpack.c.b16 %v1569, %v1568
        %v1582 = vpack.c.b16 %v1571, %v1570
        %v1583 = vpack.c.b16 %v1573, %v1572
        %v1584 = vpack.c.b16 %v1575, %v1574
        %v1585 = vpack.c.b16 %v1577, %v1576
        %1594 = vmatprep.subr.bf16.mxu0 0
        %1595 = vmatpush1.bf16.msra.mxu0 %v1585
        %1596 = vmatprep.subr.bf16.mxu0 0
        %1597 = vmatpush1.bf16.msra.mxu0 %v1584
        %1598 = vmatprep.subr.bf16.mxu0 0
        %1599 = vmatpush1.bf16.msra.mxu0 %v1583
        %1600 = vmatprep.subr.bf16.mxu0 0
        %1601 = vmatpush1.bf16.msra.mxu0 %v1582
        %1602 = vmatprep.subr.bf16.mxu0 0
        %1603 = vmatpush1.bf16.msra.mxu0 %v1581
        %1604 = vmatprep.subr.bf16.mxu0 0
        %1605 = vmatpush1.bf16.msra.mxu0 %v1580
        %1606 = vmatprep.subr.bf16.mxu0 0
        %1607 = vmatpush1.bf16.msra.mxu0 %v1579
        %1608 = vmatprep.subr.bf16.mxu0 0
        %1609 = vmatpush1.bf16.msra.mxu0 %v1578
        %1610 = vmatprep.subr.bf16.mxu0 0
        %1611 = vmatpush2.bf16.msra.mxu0 0
        %1612 = vmatprep.subr.bf16.mxu0 0
        %1613 = vmatpush2.bf16.msra.mxu0 0
        %1614 = vmatprep.subr.bf16.mxu0 0
        %1615 = vmatpush2.bf16.msra.mxu0 0
        %1616 = vmatprep.subr.bf16.mxu0 0
        %1617 = vmatpush2.bf16.msra.mxu0 0
        %1618 = vmatprep.subr.bf16.mxu0 0
        %1619 = vmatpush2.bf16.msra.mxu0 0
        %1620 = vmatprep.subr.bf16.mxu0 0
        %1621 = vmatpush2.bf16.msra.mxu0 0
        %1622 = vmatprep.subr.bf16.mxu0 0
        %1623 = vmatpush2.bf16.msra.mxu0 0
        %1624 = vmatprep.subr.bf16.mxu0 0
        %1625 = vmatpush2.bf16.msra.mxu0 0
        %1626 = vmatprep.mubr.bf16.mxu0 0
        %1627 = vmatmul.mubr.bf16.gmra.mxu0 %v1522
        %v1628 = vpop.f32.mrf.mxu0
        %v1629 = vadd.f32 %v1544, %v1628
        %v1630 = vpop.f32.mrf.mxu0
        %v1631 = vpop.f32.mrf.mxu0
        %v1632 = vadd.f32 %v1544, %v1631
        %v1633 = vpop.f32.mrf.mxu0
        %1634 = vdwg.mxu0
        %v1635 = vadd.f32 %v1390, %v1629
        %v1636 = vadd.f32 %v1391, %v1632
        %1637 = vst.msk [vmem:[%s529] sm:$0xff] %vm548, %v1635
        %1638 = vst.msk [vmem:[%s529 + $0x8] sm:$0xff] %vm548, %v1636
        %s1639 = sand.u32 %s373, 1
        %s1640 = scalar_lea.sflag [#allocation5], %s1639
        %s1641 = sand.u32 %s373, 1
        %s1642 = smul.addr %s1641, 16
        %s1643 = scalar_lea.vmem [#allocation8], %s1642
        // Predicated region
        $region89: #{tpu_custom_call.1} parent=79 // pred_check
          %p1644 = pneg %p383
        $region90: #{tpu_custom_call.1} parent=79 // pred_check_branch
          %1646 = sbr.rel (%p1644) target = $region92
        $region91: #{tpu_custom_call.1} parent=79 // pred_region
          %s1647 = smul.u32 2, %s36
          %s1649 = ssub.s32 256, 256
          %1650 = vsyncadd %s1640, %s1649
          %s1651 = smul.addr %s35, 2
          %s1652 = sadd.s32 %s1647, %s1651
          %s1653 = smul.addr %s1652, 128
          %s1654 = scalar_lea.hbm %s15, %s1653
          %s1655 = sshll.u32 %s1643, 4
          %s1656 = int_to_ptr.vmem [resolvable:$true] %s1655
          %1661 = dma.vmem_to_hbm [thread:$0]  %s1656, 256, %s1654, %s1640, 128, 128, 8
        $region92: #{tpu_custom_call.1} parent=79 // pred_fallthru
          _
      $region80: #{tpu_custom_call.1} parent=5 // pred_fallthru
        _
      %p1662 = scmp.le.s32.totalorder 2, %s26
      // Predicated region
      $region93: #{tpu_custom_call.1} parent=5 // pred_check
        %p1663 = pneg %p1662
      $region94: #{tpu_custom_call.1} parent=5 // pred_check_branch
        %1665 = sbr.rel (%p1663) target = $region96
      $region95: #{tpu_custom_call.1} parent=5 // pred_region
        %s1666 = ssub.s32 %s26, 2
        // Predicated region
        $region97: #{tpu_custom_call.1} parent=95 // pred_check
          %p1667 = pneg %p389
        $region98: #{tpu_custom_call.1} parent=95 // pred_check_branch
          %1669 = sbr.rel (%p1667) target = $region100
        $region99: #{tpu_custom_call.1} parent=95 // pred_region
          %s1670 = sand.u32 %s374, 1
          %s1671 = scalar_lea.sflag [#allocation5], %s1670
          %s1672 = sand.u32 %s374, 1
          %s1673 = smul.addr %s1672, 16
          %s1674 = scalar_lea.vmem [#allocation8], %s1673
          %1675 = dma.done %s1671, 256
        $region100: #{tpu_custom_call.1} parent=95 // pred_fallthru
          _
      $region96: #{tpu_custom_call.1} parent=5 // pred_fallthru
        _
    $region6: #{tpu_custom_call.1} parent=1 // loop_footer
      %s30 = sadd.s32 1, %s26
    $region7: #{tpu_custom_call.1} parent=1 // loop_footer_branch
      %25 = sbr.rel target = $region3
    $region8: #{tpu_custom_call.1} parent=1 // loop_exit
      _
    %1676 = vsyncpa [#allocation4], 1
    %s1677 = scalar_lea.sflag [#allocation4], 1
    %1678 = vsyncpa %s1677, 1
    %1679 = vsyncpa [#allocation7], 1
    %1680 = vsyncpa [#allocation5], 1
    %s1681 = scalar_lea.sflag [#allocation5], 1
    %1682 = vsyncpa %s1681, 1

</llo_original>
